<compile_context>
chip_gen: v7x
topology: tpu7x:2x2x1
jax: 0.10.0
libtpu: 0.0.40
codegen_flags: <defaults>
</compile_context>

<pallas_src>
import functools

import jax
import jax.numpy as jnp
from jax.experimental import pallas as pl
from jax.experimental.pallas import tpu as pltpu

EPS = 1e-5
LANE = 128


def _round_up(x, m):
    return (x + m - 1) // m * m


def _detect_big_vmem():
    # v5e / v6e have 128 MiB VMEM per TensorCore, v7x has 64 MiB.
    try:
        return pltpu.get_tpu_info().vmem_capacity_bytes >= 100 * 1024 * 1024
    except Exception:
        return False


_BIG_VMEM = _detect_big_vmem()
_MM_TILE_CAP = 1024 if _BIG_VMEM else 512     # matmul row-tile cap
_EW_TILE_CAP = 4096 if _BIG_VMEM else 2048    # elementwise row-tile cap

_CP = pltpu.CompilerParams(
    dimension_semantics=("parallel",),
    vmem_limit_bytes=(96 if _BIG_VMEM else 48) * 1024 * 1024,
)


def _pick_row_tile(m, cap):
    """Largest divisor of m that is a multiple of 8, <= cap, and (when
    possible) leaves at least two grid steps so both v7x cores get work."""
    cands = [d for d in range(8, min(cap, m) + 1, 8) if m % d == 0]
    for d in reversed(cands):
        if m // d >= 2:
            return d
    return cands[-1] if cands else m


def _col_stats(v):
    """(rows, C) f32 -> (8, C): row0 = column sum, row1 = column sum of sq."""
    return jnp.concatenate(
        [jnp.sum(v, axis=0, keepdims=True),
         jnp.sum(v * v, axis=0, keepdims=True),
         jnp.zeros((6, v.shape[1]), jnp.float32)], axis=0)


# ---------------------------------------------------------------------------
# Kernels
# ---------------------------------------------------------------------------
def _mm_stats_kernel(p_ref, w_ref, y_ref, st_ref):
    """conv1: y = p @ w (bf16 operands, f32 accumulate); stats from the f32
    accumulator, y stored bf16 (halves HBM traffic of the intermediate)."""
    y = jnp.dot(p_ref[...], w_ref[...], preferred_element_type=jnp.float32)
    st_ref[...] = _col_stats(y)
    y_ref[...] = y.astype(y_ref.dtype)


def _conv2_fused_kernel(y1_ref, sc1_ref, sh1_ref, w_ref, y_ref, st_ref,
                        xp_ref, acc_ref):
    """Fused bn1+ReLU + 3x3 conv2 (stride 1) for one image + bn2 batch stats.

    y1_ref: (1, ho, wo, pp) bf16 pre-bn conv1 output
    w_ref : (9, pp, pp) bf16 conv2 weights (tap-major)
    xp_ref: VMEM scratch (ho+2, wo+2, pp) bf16 halo buffer
    acc_ref: VMEM scratch (ho*wo, pp) f32 accumulator
    """
    _, ho, wo, pp = y_ref.shape
    a = y1_ref[0].astype(jnp.float32) * sc1_ref[...] + sh1_ref[...]
    # Zero every step (borders must be zero on whichever core runs this step).
    xp_ref[...] = jnp.zeros_like(xp_ref)
    xp_ref[1:ho + 1, 1:wo + 1, :] = jnp.maximum(a, 0.0).astype(xp_ref.dtype)
    acc_ref[...] = jnp.zeros_like(acc_ref)
    for t in range(9):
        di, dj = divmod(t, 3)
        win = xp_ref[di:di + ho, dj:dj + wo, :].reshape(ho * wo, pp)
        acc_ref[...] += jnp.dot(win, w_ref[t],
                                preferred_element_type=jnp.float32)
    acc = acc_ref[...]
    st_ref[...] = _col_stats(acc)
    y_ref[...] = acc.reshape(1, ho, wo, pp).astype(y_ref.dtype)


def _conv2_proj_fused_kernel(y1_ref, sc1_ref, sh1_ref, w_ref, xs_ref, ws_ref,
                             y_ref, ys_ref, stm_ref, sts_ref,
                             xp_ref, acc_ref):
    """Same as above plus the 1x1 projection shortcut matmul on the same
    image; main / shortcut results are separate lane-dense outputs."""
    _, ho, wo, pp = y_ref.shape
    a = y1_ref[0].astype(jnp.float32) * sc1_ref[...] + sh1_ref[...]
    xp_ref[...] = jnp.zeros_like(xp_ref)
    xp_ref[1:ho + 1, 1:wo + 1, :] = jnp.maximum(a, 0.0).astype(xp_ref.dtype)
    acc_ref[...] = jnp.zeros_like(acc_ref)
    for t in range(9):
        di, dj = divmod(t, 3)
        win = xp_ref[di:di + ho, dj:dj + wo, :].reshape(ho * wo, pp)
        acc_ref[...] += jnp.dot(win, w_ref[t],
                                preferred_element_type=jnp.float32)
    acc = acc_ref[...]
    cp = xs_ref.shape[3]
    sc = jnp.dot(xs_ref[0].reshape(ho * wo, cp), ws_ref[...],
                 preferred_element_type=jnp.float32)
    stm_ref[...] = _col_stats(acc)
    sts_ref[...] = _col_stats(sc)
    y_ref[...] = acc.reshape(1, ho, wo, pp).astype(y_ref.dtype)
    ys_ref[...] = sc.reshape(1, ho, wo, pp).astype(ys_ref.dtype)


def _bn_add_id_kernel(y_ref, res_ref, sc_ref, sh_ref, o_ref):
    """out = relu(bn2(y) + identity residual); bf16 inputs upcast to f32."""
    y = y_ref[...].astype(jnp.float32)
    r = res_ref[...].astype(jnp.float32)
    o_ref[...] = jnp.maximum(y * sc_ref[...] + sh_ref[...] + r,
                             0.0).astype(o_ref.dtype)


def _bn_add_proj_kernel(y_ref, ys_ref, scm_ref, shm_ref, scs_ref, shs_ref,
                        o_ref):
    """out = relu(bn2(y_main) + bn_s(y_shortcut)); halves kept separate."""
    a = y_ref[...].astype(jnp.float32) * scm_ref[...] + shm_ref[...]
    b = ys_ref[...].astype(jnp.float32) * scs_ref[...] + shs_ref[...]
    o_ref[...] = jnp.maximum(a + b, 0.0).astype(o_ref.dtype)


# ---------------------------------------------------------------------------
# pallas_call wrappers
# ---------------------------------------------------------------------------
def _matmul_stats(p, w, tm):
    m, kp = p.shape
    pp = w.shape[1]
    mt = m // tm
    return pl.pallas_call(
        _mm_stats_kernel,
        out_shape=(jax.ShapeDtypeStruct((m, pp), jnp.bfloat16),
                   jax.ShapeDtypeStruct((mt * 8, pp), jnp.float32)),
        grid_spec=pltpu.PrefetchScalarGridSpec(
            num_scalar_prefetch=0, grid=(mt,),
            in_specs=[pl.BlockSpec((tm, kp), lambda i: (i, 0)),
                      pl.BlockSpec((kp, pp), lambda i: (0, 0))],
            out_specs=[pl.BlockSpec((tm, pp), lambda i: (i, 0)),
                       pl.BlockSpec((8, pp), lambda i: (i, 0))]),
        compiler_params=_CP,
        cost_estimate=pl.CostEstimate(
            flops=2 * m * kp * pp, transcendentals=0,
            bytes_accessed=p.size * 2 + w.size * 2 + m * pp * 2
                           + mt * 8 * pp * 4),
    )(p, w)


def _conv2_fused(y1_img, sc1, sh1, w2):
    n, ho, wo, pp = y1_img.shape
    return pl.pallas_call(
        _conv2_fused_kernel,
        out_shape=(jax.ShapeDtypeStruct((n, ho, wo, pp), jnp.bfloat16),
                   jax.ShapeDtypeStruct((n * 8, pp), jnp.float32)),
        grid_spec=pltpu.PrefetchScalarGridSpec(
            num_scalar_prefetch=0, grid=(n,),
            in_specs=[pl.BlockSpec((1, ho, wo, pp), lambda i: (i, 0, 0, 0)),
                      pl.BlockSpec((1, pp), lambda i: (0, 0)),
                      pl.BlockSpec((1, pp), lambda i: (0, 0)),
                      pl.BlockSpec((9, pp, pp), lambda i: (0, 0, 0))],
            out_specs=[pl.BlockSpec((1, ho, wo, pp), lambda i: (i, 0, 0, 0)),
                       pl.BlockSpec((8, pp), lambda i: (i, 0))],
            scratch_shapes=[pltpu.VMEM((ho + 2, wo + 2, pp), jnp.bfloat16),
                            pltpu.VMEM((ho * wo, pp), jnp.float32)]),
        compiler_params=_CP,
        cost_estimate=pl.CostEstimate(
            flops=2 * n * ho * wo * 9 * pp * pp, transcendentals=0,
            bytes_accessed=y1_img.size * 2 + w2.size * 2
                           + n * ho * wo * pp * 2 + n * 8 * pp * 4),
    )(y1_img, sc1, sh1, w2)


def _conv2_proj_fused(y1_img, sc1, sh1, w2, xs, ws):
    n, ho, wo, pp = y1_img.shape
    cp = xs.shape[3]
    return pl.pallas_call(
        _conv2_proj_fused_kernel,
        out_shape=(jax.ShapeDtypeStruct((n, ho, wo, pp), jnp.bfloat16),
                   jax.ShapeDtypeStruct((n, ho, wo, pp), jnp.bfloat16),
                   jax.ShapeDtypeStruct((n * 8, pp), jnp.float32),
                   jax.ShapeDtypeStruct((n * 8, pp), jnp.float32)),
        grid_spec=pltpu.PrefetchScalarGridSpec(
            num_scalar_prefetch=0, grid=(n,),
            in_specs=[pl.BlockSpec((1, ho, wo, pp), lambda i: (i, 0, 0, 0)),
                      pl.BlockSpec((1, pp), lambda i: (0, 0)),
                      pl.BlockSpec((1, pp), lambda i: (0, 0)),
                      pl.BlockSpec((9, pp, pp), lambda i: (0, 0, 0)),
                      pl.BlockSpec((1, ho, wo, cp), lambda i: (i, 0, 0, 0)),
                      pl.BlockSpec((cp, pp), lambda i: (0, 0))],
            out_specs=[pl.BlockSpec((1, ho, wo, pp), lambda i: (i, 0, 0, 0)),
                       pl.BlockSpec((1, ho, wo, pp), lambda i: (i, 0, 0, 0)),
                       pl.BlockSpec((8, pp), lambda i: (i, 0)),
                       pl.BlockSpec((8, pp), lambda i: (i, 0))],
            scratch_shapes=[pltpu.VMEM((ho + 2, wo + 2, pp), jnp.bfloat16),
                            pltpu.VMEM((ho * wo, pp), jnp.float32)]),
        compiler_params=_CP,
        cost_estimate=pl.CostEstimate(
            flops=2 * n * ho * wo * (9 * pp + cp) * pp, transcendentals=0,
            bytes_accessed=(y1_img.size + xs.size + w2.size + ws.size) * 2
                           + 2 * n * ho * wo * pp * 2 + 2 * n * 8 * pp * 4),
    )(y1_img, sc1, sh1, w2, xs, ws)


def _bn_add_id(y, res, scale, shift, tm):
    m, pp = y.shape
    mt = m // tm
    return pl.pallas_call(
        _bn_add_id_kernel,
        out_shape=jax.ShapeDtypeStruct((m, pp), jnp.float32),
        grid_spec=pltpu.PrefetchScalarGridSpec(
            num_scalar_prefetch=0, grid=(mt,),
            in_specs=[pl.BlockSpec((tm, pp), lambda i: (i, 0)),
                      pl.BlockSpec((tm, pp), lambda i: (i, 0)),
                      pl.BlockSpec((1, pp), lambda i: (0, 0)),
                      pl.BlockSpec((1, pp), lambda i: (0, 0))],
            out_specs=pl.BlockSpec((tm, pp), lambda i: (i, 0))),
        compiler_params=_CP,
    )(y, res, scale, shift)


def _bn_add_proj(y, ys, scm, shm, scs, shs, tm):
    m, pp = y.shape
    mt = m // tm
    return pl.pallas_call(
        _bn_add_proj_kernel,
        out_shape=jax.ShapeDtypeStruct((m, pp), jnp.float32),
        grid_spec=pltpu.PrefetchScalarGridSpec(
            num_scalar_prefetch=0, grid=(mt,),
            in_specs=[pl.BlockSpec((tm, pp), lambda i: (i, 0)),
                      pl.BlockSpec((tm, pp), lambda i: (i, 0)),
                      pl.BlockSpec((1, pp), lambda i: (0, 0)),
                      pl.BlockSpec((1, pp), lambda i: (0, 0)),
                      pl.BlockSpec((1, pp), lambda i: (0, 0)),
                      pl.BlockSpec((1, pp), lambda i: (0, 0))],
            out_specs=pl.BlockSpec((tm, pp), lambda i: (i, 0))),
        compiler_params=_CP,
    )(y, ys, scm, shm, scs, shs)


# ---------------------------------------------------------------------------
# Glue (wrapper)
# ---------------------------------------------------------------------------
def _im2col(x_nhwc, ksize, stride, pad):
    """(N,H,W,C) -> (N*Ho*Wo, ksize*ksize*C), tap-major / channel-minor."""
    n, h, w, c = x_nhwc.shape
    xp = jnp.pad(x_nhwc, ((0, 0), (pad, pad), (pad, pad), (0, 0)))
    ho = (h + 2 * pad - ksize) // stride + 1
    wo = (w + 2 * pad - ksize) // stride + 1
    cols = []
    for di in range(ksize):
        for dj in range(ksize):
            cols.append(xp[:, di:di + (ho - 1) * stride + 1:stride,
                           dj:dj + (wo - 1) * stride + 1:stride, :])
    patches = jnp.stack(cols, axis=3)  # (n, ho, wo, k*k, c)
    return patches.reshape(n * ho * wo, ksize * ksize * c), (n, ho, wo)


def _pad2(a, rows, cols, dtype):
    r, c = a.shape
    return jnp.pad(a, ((0, rows - r), (0, cols - c))).astype(dtype)


def _pad1(v, n):
    return jnp.pad(v.astype(jnp.float32), (0, n - v.shape[0]))


def _bn_coeffs(st, m_true, gamma, beta):
    """Reduce per-tile partial stats -> per-channel (1,W) scale / shift."""
    w = st.shape[1]
    st = st.reshape(-1, 8, w)
    total = jnp.sum(st[:, 0, :], axis=0)
    total_sq = jnp.sum(st[:, 1, :], axis=0)
    mean = total / m_true
    # TODO(synk): clamped single-pass E[y^2]-mean^2 in f32; switch to a
    # two-pass/Welford accumulation if activation magnitudes get large.
    var = jnp.maximum(total_sq / m_true - mean * mean, 0.0)
    scale = gamma * jax.lax.rsqrt(var + EPS)
    shift = beta - mean * scale
    return scale.reshape(1, w), shift.reshape(1, w)


@functools.partial(jax.jit, static_argnames=("stride",))
def basic_block_forward(x_nchw, params, stride):
    """Pallas implementation of BasicBlock.forward. Input NCHW, output NCHW."""
    x = jnp.transpose(x_nchw, (0, 2, 3, 1)).astype(jnp.float32)  # -> NHWC
    _, _, _, cin = x.shape
    planes = params["w1"].shape[-1]
    pp = _round_up(planes, LANE)

    # ---- pass A: conv1 (3x3, stride) as im2col matmul + bn1 batch stats ---
    p1, (n, ho, wo) = _im2col(x, 3, stride, 1)
    m = n * ho * wo
    k1 = p1.shape[1]
    k1p = _round_up(k1, LANE)
    tm1 = _pick_row_tile(m, _MM_TILE_CAP)
    p1p = _pad2(p1, m, k1p, jnp.bfloat16)
    w1m = _pad2(params["w1"].reshape(k1, planes), k1p, pp, jnp.bfloat16)
    y1, st1 = _matmul_stats(p1p, w1m, tm1)                  # y1 bf16 (m, pp)
    sc1, sh1 = _bn_coeffs(st1, m, _pad1(params["g1"], pp),
                          _pad1(params["b1"], pp))
    y1_img = y1.reshape(n, ho, wo, pp)                       # free reshape

    # conv2 weights zero-padded on Cin AND Cout to pp (channel dim stays
    # lane-dense end to end; padded lanes have zero gamma/beta -> stay zero).
    w2p = jnp.pad(params["w2"],
                  ((0, 0), (0, 0), (0, pp - planes), (0, pp - planes))
                  ).astype(jnp.bfloat16).reshape(9, pp, pp)

    project = (stride != 1) or (cin != planes)
    tm2 = _pick_row_tile(m, _EW_TILE_CAP)

    # ---- pass B: fused bn1+relu + conv2 (+ 1x1 shortcut) + bn batch stats -
    if project:
        cp = _round_up(cin, LANE)
        xs = x[:, ::stride, ::stride, :]
        xsp = jnp.pad(xs, ((0, 0), (0, 0), (0, 0),
                           (0, cp - cin))).astype(jnp.bfloat16)
        wsp = jnp.pad(params["ws"].reshape(cin, planes),
                      ((0, cp - cin), (0, pp - planes))).astype(jnp.bfloat16)
        y2, ysc, st2, sts = _conv2_proj_fused(y1_img, sc1, sh1, w2p, xsp, wsp)
        sc2, sh2 = _bn_coeffs(st2, m, _pad1(params["g2"], pp),
                              _pad1(params["b2"], pp))
        scs, shs = _bn_coeffs(sts, m, _pad1(params["gs"], pp),
                              _pad1(params["bs"], pp))
        # ---- pass C: bn2 + bn_shortcut + add + relu ----
        out = _bn_add_proj(y2.reshape(m, pp), ysc.reshape(m, pp),
                           sc2, sh2, scs, shs, tm2)
    else:
        y2, st2 = _conv2_fused(y1_img, sc1, sh1, w2p)
        sc2, sh2 = _bn_coeffs(st2, m, _pad1(params["g2"], pp),
                              _pad1(params["b2"], pp))
        res = jnp.pad(x.reshape(m, cin),
                      ((0, 0), (0, pp - cin))).astype(jnp.bfloat16)
        # ---- pass C: bn2 + identity add + relu ----
        out = _bn_add_id(y2.reshape(m, pp), res, sc2, sh2, tm2)

    out_img = out[:, :planes].reshape(n, ho, wo, planes)
    return jnp.transpose(out_img, (0, 3, 1, 2))  # back to NCHW


# ---------------------------------------------------------------------------
# Pure-JAX reference (validation only; mirrors the kernel's precision: bf16
# MXU operands, f32 accumulation and batch stats, bf16 intermediate storage).
# ---------------------------------------------------------------------------
def _ref_forward(x_nchw, params, stride):
    x = jnp.transpose(x_nchw, (0, 2, 3, 1)).astype(jnp.float32)

    def conv(z, w, s, pad):
        return jax.lax.conv_general_dilated(
            z.astype(jnp.bfloat16), w.astype(jnp.bfloat16), (s, s),
            [(pad, pad), (pad, pad)],
            dimension_numbers=("NHWC", "HWIO", "NHWC"),
            preferred_element_type=jnp.float32)

    def bn_q(y, g, b):
        # stats from the f32 accumulator; normalization applied to the
        # bf16-rounded tensor (mirrors bf16 y storage in the kernels).
        mean = jnp.mean(y, axis=(0, 1, 2), keepdims=True)
        var = jnp.mean((y - mean) ** 2, axis=(0, 1, 2), keepdims=True)
        yq = y.astype(jnp.bfloat16).astype(jnp.float32)
        return (yq - mean) * jax.lax.rsqrt(var + EPS) * g + b

    planes = params["w1"].shape[-1]
    out = jax.nn.relu(bn_q(conv(x, params["w1"], stride, 1),
                           params["g1"], params["b1"]))
    out = bn_q(conv(out, params["w2"], 1, 1), params["g2"], params["b2"])
    if stride != 1 or x.shape[-1] != planes:
        sc = bn_q(conv(x, params["ws"], stride, 0), params["gs"], params["bs"])
    else:
        sc = x.astype(jnp.bfloat16).astype(jnp.float32)  # bf16 residual staging
    return jnp.transpose(jax.nn.relu(out + sc), (0, 3, 1, 2))


# ---------------------------------------------------------------------------
if __name__ == "__main__":
    def make_params(keys, cin, planes, project):
        p = {
            "w1": jax.random.normal(keys[0], (3, 3, cin, planes), jnp.float32) * 0.1,
            "g1": 1.0 + 0.1 * jax.random.normal(keys[1], (planes,), jnp.float32),
            "b1": 0.1 * jax.random.normal(keys[2], (planes,), jnp.float32),
            "w2": jax.random.normal(keys[3], (3, 3, planes, planes), jnp.float32) * 0.1,
            "g2": 1.0 + 0.1 * jax.random.normal(keys[4], (planes,), jnp.float32),
            "b2": 0.1 * jax.random.normal(keys[5], (planes,), jnp.float32),
        }
        if project:
            p["ws"] = jax.random.normal(keys[6], (1, 1, cin, planes), jnp.float32) * 0.1
            p["gs"] = 1.0 + 0.1 * jax.random.normal(keys[7], (planes,), jnp.float32)
            p["bs"] = 0.1 * jax.random.normal(keys[8], (planes,), jnp.float32)
        return p

    # Case 1: projection shortcut (stride 2, Cin != planes).
    ks = jax.random.split(jax.random.PRNGKey(0), 10)
    N, Cin, H, W, planes, stride = 2, 4, 16, 16, 8, 2
    params = make_params(ks, Cin, planes, True)
    x = jax.random.normal(ks[9], (N, Cin, H, W), jnp.float32)
    out = jax.block_until_ready(basic_block_forward(x, params, stride))
    assert out.shape == (N, planes, H // stride, W // stride), out.shape
    ref = _ref_forward(x, params, stride)
    err = float(jnp.max(jnp.abs(out - ref)))
    assert jnp.allclose(out, ref, atol=3e-3, rtol=3e-3), f"proj max abs err {err}"

    # Case 2: identity shortcut (stride 1, Cin == planes).
    ks2 = jax.random.split(jax.random.PRNGKey(1), 10)
    params_id = make_params(ks2, 8, 8, False)
    x_id = jax.random.normal(ks2[9], (2, 8, 16, 16), jnp.float32)
    out_id = jax.block_until_ready(basic_block_forward(x_id, params_id, 1))
    assert out_id.shape == (2, 8, 16, 16), out_id.shape
    ref_id = _ref_forward(x_id, params_id, 1)
    err_id = float(jnp.max(jnp.abs(out_id - ref_id)))
    assert jnp.allclose(out_id, ref_id, atol=3e-3, rtol=3e-3), f"id max abs err {err_id}"

    print("KERNEL_OK")
</pallas_src>

<mosaic_0001>
module attributes {stable_mosaic.version = 11 : i64} {
  func.func @_mm_stats_kernel(%arg0: i32, %arg1: memref<64x128xbf16, #tpu.memory_space<vmem>>, %arg2: memref<128x128xbf16, #tpu.memory_space<vmem>>, %arg3: memref<64x128xbf16, #tpu.memory_space<vmem>>, %arg4: memref<8x128xf32, #tpu.memory_space<vmem>>) attributes {dimension_semantics = [#tpu.dimension_semantics<parallel>], iteration_bounds = array<i64: 2>, scalar_prefetch = 0 : i64, scratch_operands = 0 : i64, tpu.core_type = #tpu.core_type<tc>, window_params = [{transform_indices = @transform_0, window_bounds = array<i64: 64, 128>}, {pipeline_mode = #tpu.pipeline_mode<synchronous>, transform_indices = @transform_1, window_bounds = array<i64: 128, 128>}, {transform_indices = @transform_2, window_bounds = array<i64: 64, 128>}, {transform_indices = @transform_3, window_bounds = array<i64: 8, 128>}]} {
    %c0 = arith.constant 0 : index
    %c0_0 = arith.constant 0 : index
    %0 = vector.load %arg1[%c0, %c0_0] : memref<64x128xbf16, #tpu.memory_space<vmem>>, vector<64x128xbf16>
    %c0_1 = arith.constant 0 : index
    %c0_2 = arith.constant 0 : index
    %1 = vector.load %arg2[%c0_1, %c0_2] : memref<128x128xbf16, #tpu.memory_space<vmem>>, vector<128x128xbf16>
    %cst = arith.constant dense<0.000000e+00> : vector<64x128xf32>
    %2 = tpu.matmul %0, %1, %cst {dimension_numbers = #tpu.dot_dimension_numbers<[1], [0], [0], [1], [0, 0, 1, 1], [], []>} : vector<64x128xbf16>, vector<128x128xbf16>, vector<64x128xf32> -> vector<64x128xf32>
    %cst_3 = arith.constant dense<0.000000e+00> : vector<128xf32>
    %3 = vector.multi_reduction <add>, %2, %cst_3 [0] : vector<64x128xf32> to vector<128xf32>
    %4 = vector.shape_cast %3 : vector<128xf32> to vector<1x128xf32>
    %5 = arith.mulf %2, %2 : vector<64x128xf32>
    %cst_4 = arith.constant dense<0.000000e+00> : vector<128xf32>
    %6 = vector.multi_reduction <add>, %5, %cst_4 [0] : vector<64x128xf32> to vector<128xf32>
    %7 = vector.shape_cast %6 : vector<128xf32> to vector<1x128xf32>
    %cst_5 = arith.constant 0.000000e+00 : f32
    %8 = vector.broadcast %cst_5 : f32 to vector<6x128xf32>
    %9 = tpu.concatenate %4, %7, %8 in 0 : vector<1x128xf32>, vector<1x128xf32>, vector<6x128xf32> -> vector<8x128xf32>
    %c0_6 = arith.constant 0 : index
    %c0_7 = arith.constant 0 : index
    %10 = vector.load %arg4[%c0_6, %c0_7] : memref<8x128xf32, #tpu.memory_space<vmem>>, vector<8x128xf32>
    tpu.vector_store %arg4[%c0_6, %c0_7], %9 {strides = array<i32>} : memref<8x128xf32, #tpu.memory_space<vmem>>, vector<8x128xf32>,
    %11 = arith.truncf %2 : vector<64x128xf32> to vector<64x128xbf16>
    %c0_8 = arith.constant 0 : index
    %c0_9 = arith.constant 0 : index
    %12 = vector.load %arg3[%c0_8, %c0_9] : memref<64x128xbf16, #tpu.memory_space<vmem>>, vector<64x128xbf16>
    tpu.vector_store %arg3[%c0_8, %c0_9], %11 {strides = array<i32>} : memref<64x128xbf16, #tpu.memory_space<vmem>>, vector<64x128xbf16>,
    return
  }
  func.func @transform_0(%arg0: i32) -> (i32, i32) {
    %c0_i32 = arith.constant 0 : i32
    %c0_i32_0 = arith.constant 0 : i32
    return %arg0, %c0_i32 : i32, i32
  }
  func.func @transform_1(%arg0: i32) -> (i32, i32) {
    %c0_i32 = arith.constant 0 : i32
    %c0_i32_0 = arith.constant 0 : i32
    %c0_i32_1 = arith.constant 0 : i32
    return %c0_i32, %c0_i32_0 : i32, i32
  }
  func.func @transform_2(%arg0: i32) -> (i32, i32) {
    %c0_i32 = arith.constant 0 : i32
    %c0_i32_0 = arith.constant 0 : i32
    return %arg0, %c0_i32 : i32, i32
  }
  func.func @transform_3(%arg0: i32) -> (i32, i32) {
    %c0_i32 = arith.constant 0 : i32
    %c0_i32_0 = arith.constant 0 : i32
    return %arg0, %c0_i32 : i32, i32
  }
}

module attributes {stable_mosaic.version = 11 : i64} {
  func.func @_conv2_proj_fused_kernel(%arg0: i32, %arg1: memref<1x8x8x128xbf16, #tpu.memory_space<vmem>>, %arg2: memref<1x128xf32, #tpu.memory_space<vmem>>, %arg3: memref<1x128xf32, #tpu.memory_space<vmem>>, %arg4: memref<9x128x128xbf16, #tpu.memory_space<vmem>>, %arg5: memref<1x8x8x128xbf16, #tpu.memory_space<vmem>>, %arg6: memref<128x128xbf16, #tpu.memory_space<vmem>>, %arg7: memref<1x8x8x128xbf16, #tpu.memory_space<vmem>>, %arg8: memref<1x8x8x128xbf16, #tpu.memory_space<vmem>>, %arg9: memref<8x128xf32, #tpu.memory_space<vmem>>, %arg10: memref<8x128xf32, #tpu.memory_space<vmem>>, %arg11: memref<10x10x128xbf16, #tpu.memory_space<vmem>>, %arg12: memref<64x128xf32, #tpu.memory_space<vmem>>) attributes {dimension_semantics = [#tpu.dimension_semantics<parallel>], iteration_bounds = array<i64: 2>, scalar_prefetch = 0 : i64, scratch_operands = 2 : i64, tpu.core_type = #tpu.core_type<tc>, window_params = [{transform_indices = @transform_0, window_bounds = array<i64: 1, 8, 8, 128>}, {pipeline_mode = #tpu.pipeline_mode<synchronous>, transform_indices = @transform_1, window_bounds = array<i64: 1, 128>}, {pipeline_mode = #tpu.pipeline_mode<synchronous>, transform_indices = @transform_2, window_bounds = array<i64: 1, 128>}, {pipeline_mode = #tpu.pipeline_mode<synchronous>, transform_indices = @transform_3, window_bounds = array<i64: 9, 128, 128>}, {transform_indices = @transform_4, window_bounds = array<i64: 1, 8, 8, 128>}, {pipeline_mode = #tpu.pipeline_mode<synchronous>, transform_indices = @transform_5, window_bounds = array<i64: 128, 128>}, {transform_indices = @transform_6, window_bounds = array<i64: 1, 8, 8, 128>}, {transform_indices = @transform_7, window_bounds = array<i64: 1, 8, 8, 128>}, {transform_indices = @transform_8, window_bounds = array<i64: 8, 128>}, {transform_indices = @transform_9, window_bounds = array<i64: 8, 128>}]} {
    %c0 = arith.constant 0 : index
    %c0_0 = arith.constant 0 : index
    %c0_1 = arith.constant 0 : index
    %c0_2 = arith.constant 0 : index
    %0 = vector.load %arg1[%c0, %c0_0, %c0_1, %c0_2] : memref<1x8x8x128xbf16, #tpu.memory_space<vmem>>, vector<1x8x8x128xbf16>
    %1 = vector.shape_cast %0 : vector<1x8x8x128xbf16> to vector<8x8x128xbf16>
    %2 = arith.extf %1 : vector<8x8x128xbf16> to vector<8x8x128xf32>
    %c0_3 = arith.constant 0 : index
    %c0_4 = arith.constant 0 : index
    %3 = vector.load %arg2[%c0_3, %c0_4] : memref<1x128xf32, #tpu.memory_space<vmem>>, vector<1x128xf32>
    %4 = vector.shape_cast %3 : vector<1x128xf32> to vector<1x1x128xf32>
    %5 = vector.broadcast %4 : vector<1x1x128xf32> to vector<8x8x128xf32>
    %6 = arith.mulf %2, %5 : vector<8x8x128xf32>
    %c0_5 = arith.constant 0 : index
    %c0_6 = arith.constant 0 : index
    %7 = vector.load %arg3[%c0_5, %c0_6] : memref<1x128xf32, #tpu.memory_space<vmem>>, vector<1x128xf32>
    %8 = vector.shape_cast %7 : vector<1x128xf32> to vector<1x1x128xf32>
    %9 = vector.broadcast %8 : vector<1x1x128xf32> to vector<8x8x128xf32>
    %10 = arith.addf %6, %9 : vector<8x8x128xf32>
    %cst = arith.constant 0.000000e+00 : bf16
    %11 = vector.broadcast %cst : bf16 to vector<10x10x128xbf16>
    %c0_7 = arith.constant 0 : index
    %c0_8 = arith.constant 0 : index
    %c0_9 = arith.constant 0 : index
    %12 = vector.load %arg11[%c0_7, %c0_8, %c0_9] : memref<10x10x128xbf16, #tpu.memory_space<vmem>>, vector<10x10x128xbf16>
    tpu.vector_store %arg11[%c0_7, %c0_8, %c0_9], %11 {strides = array<i32>} : memref<10x10x128xbf16, #tpu.memory_space<vmem>>, vector<10x10x128xbf16>,
    %cst_10 = arith.constant 0.000000e+00 : f32
    %13 = vector.broadcast %cst_10 : f32 to vector<8x8x128xf32>
    %14 = arith.maximumf %10, %13 : vector<8x8x128xf32>
    %15 = arith.truncf %14 : vector<8x8x128xf32> to vector<8x8x128xbf16>
    %c1 = arith.constant 1 : index
    %c1_11 = arith.constant 1 : index
    %c0_12 = arith.constant 0 : index
    %16 = vector.load %arg11[%c1, %c1_11, %c0_12] : memref<10x10x128xbf16, #tpu.memory_space<vmem>>, vector<8x8x128xbf16>
    tpu.vector_store %arg11[%c1, %c1_11, %c0_12], %15 {strides = array<i32>} : memref<10x10x128xbf16, #tpu.memory_space<vmem>>, vector<8x8x128xbf16>,
    %cst_13 = arith.constant 0.000000e+00 : f32
    %17 = vector.broadcast %cst_13 : f32 to vector<64x128xf32>
    %c0_14 = arith.constant 0 : index
    %c0_15 = arith.constant 0 : index
    %18 = vector.load %arg12[%c0_14, %c0_15] : memref<64x128xf32, #tpu.memory_space<vmem>>, vector<64x128xf32>
    tpu.vector_store %arg12[%c0_14, %c0_15], %17 {strides = array<i32>} : memref<64x128xf32, #tpu.memory_space<vmem>>, vector<64x128xf32>,
    %c0_16 = arith.constant 0 : index
    %c0_17 = arith.constant 0 : index
    %c0_18 = arith.constant 0 : index
    %19 = vector.load %arg11[%c0_16, %c0_17, %c0_18] : memref<10x10x128xbf16, #tpu.memory_space<vmem>>, vector<8x8x128xbf16>
    %20 = vector.shape_cast %19 : vector<8x8x128xbf16> to vector<64x128xbf16>
    %c0_19 = arith.constant 0 : index
    %c0_20 = arith.constant 0 : index
    %21 = vector.load %arg12[%c0_19, %c0_20] : memref<64x128xf32, #tpu.memory_space<vmem>>, vector<64x128xf32>
    %c0_21 = arith.constant 0 : index
    %c0_22 = arith.constant 0 : index
    %c0_23 = arith.constant 0 : index
    %22 = vector.load %arg4[%c0_21, %c0_22, %c0_23] : memref<9x128x128xbf16, #tpu.memory_space<vmem>>, vector<1x128x128xbf16>
    %23 = vector.shape_cast %22 : vector<1x128x128xbf16> to vector<128x128xbf16>
    %cst_24 = arith.constant dense<0.000000e+00> : vector<64x128xf32>
    %24 = tpu.matmul %20, %23, %cst_24 {dimension_numbers = #tpu.dot_dimension_numbers<[1], [0], [0], [1], [0, 0, 1, 1], [], []>} : vector<64x128xbf16>, vector<128x128xbf16>, vector<64x128xf32> -> vector<64x128xf32>
    %25 = arith.addf %21, %24 : vector<64x128xf32>
    %c0_25 = arith.constant 0 : index
    %c0_26 = arith.constant 0 : index
    %26 = vector.load %arg12[%c0_25, %c0_26] : memref<64x128xf32, #tpu.memory_space<vmem>>, vector<64x128xf32>
    tpu.vector_store %arg12[%c0_25, %c0_26], %25 {strides = array<i32>} : memref<64x128xf32, #tpu.memory_space<vmem>>, vector<64x128xf32>,
    %c0_27 = arith.constant 0 : index
    %c1_28 = arith.constant 1 : index
    %c0_29 = arith.constant 0 : index
    %27 = vector.load %arg11[%c0_27, %c1_28, %c0_29] : memref<10x10x128xbf16, #tpu.memory_space<vmem>>, vector<8x8x128xbf16>
    %28 = vector.shape_cast %27 : vector<8x8x128xbf16> to vector<64x128xbf16>
    %c0_30 = arith.constant 0 : index
    %c0_31 = arith.constant 0 : index
    %29 = vector.load %arg12[%c0_30, %c0_31] : memref<64x128xf32, #tpu.memory_space<vmem>>, vector<64x128xf32>
    %c1_32 = arith.constant 1 : index
    %c0_33 = arith.constant 0 : index
    %c0_34 = arith.constant 0 : index
    %30 = vector.load %arg4[%c1_32, %c0_33, %c0_34] : memref<9x128x128xbf16, #tpu.memory_space<vmem>>, vector<1x128x128xbf16>
    %31 = vector.shape_cast %30 : vector<1x128x128xbf16> to vector<128x128xbf16>
    %cst_35 = arith.constant dense<0.000000e+00> : vector<64x128xf32>
    %32 = tpu.matmul %28, %31, %cst_35 {dimension_numbers = #tpu.dot_dimension_numbers<[1], [0], [0], [1], [0, 0, 1, 1], [], []>} : vector<64x128xbf16>, vector<128x128xbf16>, vector<64x128xf32> -> vector<64x128xf32>
    %33 = arith.addf %29, %32 : vector<64x128xf32>
    %c0_36 = arith.constant 0 : index
    %c0_37 = arith.constant 0 : index
    %34 = vector.load %arg12[%c0_36, %c0_37] : memref<64x128xf32, #tpu.memory_space<vmem>>, vector<64x128xf32>
    tpu.vector_store %arg12[%c0_36, %c0_37], %33 {strides = array<i32>} : memref<64x128xf32, #tpu.memory_space<vmem>>, vector<64x128xf32>,
    %c0_38 = arith.constant 0 : index
    %c2 = arith.constant 2 : index
    %c0_39 = arith.constant 0 : index
    %35 = vector.load %arg11[%c0_38, %c2, %c0_39] : memref<10x10x128xbf16, #tpu.memory_space<vmem>>, vector<8x8x128xbf16>
    %36 = vector.shape_cast %35 : vector<8x8x128xbf16> to vector<64x128xbf16>
    %c0_40 = arith.constant 0 : index
    %c0_41 = arith.constant 0 : index
    %37 = vector.load %arg12[%c0_40, %c0_41] : memref<64x128xf32, #tpu.memory_space<vmem>>, vector<64x128xf32>
    %c2_42 = arith.constant 2 : index
    %c0_43 = arith.constant 0 : index
    %c0_44 = arith.constant 0 : index
    %38 = vector.load %arg4[%c2_42, %c0_43, %c0_44] : memref<9x128x128xbf16, #tpu.memory_space<vmem>>, vector<1x128x128xbf16>
    %39 = vector.shape_cast %38 : vector<1x128x128xbf16> to vector<128x128xbf16>
    %cst_45 = arith.constant dense<0.000000e+00> : vector<64x128xf32>
    %40 = tpu.matmul %36, %39, %cst_45 {dimension_numbers = #tpu.dot_dimension_numbers<[1], [0], [0], [1], [0, 0, 1, 1], [], []>} : vector<64x128xbf16>, vector<128x128xbf16>, vector<64x128xf32> -> vector<64x128xf32>
    %41 = arith.addf %37, %40 : vector<64x128xf32>
    %c0_46 = arith.constant 0 : index
    %c0_47 = arith.constant 0 : index
    %42 = vector.load %arg12[%c0_46, %c0_47] : memref<64x128xf32, #tpu.memory_space<vmem>>, vector<64x128xf32>
    tpu.vector_store %arg12[%c0_46, %c0_47], %41 {strides = array<i32>} : memref<64x128xf32, #tpu.memory_space<vmem>>, vector<64x128xf32>,
    %c1_48 = arith.constant 1 : index
    %c0_49 = arith.constant 0 : index
    %c0_50 = arith.constant 0 : index
    %43 = vector.load %arg11[%c1_48, %c0_49, %c0_50] : memref<10x10x128xbf16, #tpu.memory_space<vmem>>, vector<8x8x128xbf16>
    %44 = vector.shape_cast %43 : vector<8x8x128xbf16> to vector<64x128xbf16>
    %c0_51 = arith.constant 0 : index
    %c0_52 = arith.constant 0 : index
    %45 = vector.load %arg12[%c0_51, %c0_52] : memref<64x128xf32, #tpu.memory_space<vmem>>, vector<64x128xf32>
    %c3 = arith.constant 3 : index
    %c0_53 = arith.constant 0 : index
    %c0_54 = arith.constant 0 : index
    %46 = vector.load %arg4[%c3, %c0_53, %c0_54] : memref<9x128x128xbf16, #tpu.memory_space<vmem>>, vector<1x128x128xbf16>
    %47 = vector.shape_cast %46 : vector<1x128x128xbf16> to vector<128x128xbf16>
    %cst_55 = arith.constant dense<0.000000e+00> : vector<64x128xf32>
    %48 = tpu.matmul %44, %47, %cst_55 {dimension_numbers = #tpu.dot_dimension_numbers<[1], [0], [0], [1], [0, 0, 1, 1], [], []>} : vector<64x128xbf16>, vector<128x128xbf16>, vector<64x128xf32> -> vector<64x128xf32>
    %49 = arith.addf %45, %48 : vector<64x128xf32>
    %c0_56 = arith.constant 0 : index
    %c0_57 = arith.constant 0 : index
    %50 = vector.load %arg12[%c0_56, %c0_57] : memref<64x128xf32, #tpu.memory_space<vmem>>, vector<64x128xf32>
    tpu.vector_store %arg12[%c0_56, %c0_57], %49 {strides = array<i32>} : memref<64x128xf32, #tpu.memory_space<vmem>>, vector<64x128xf32>,
    %c1_58 = arith.constant 1 : index
    %c1_59 = arith.constant 1 : index
    %c0_60 = arith.constant 0 : index
    %51 = vector.load %arg11[%c1_58, %c1_59, %c0_60] : memref<10x10x128xbf16, #tpu.memory_space<vmem>>, vector<8x8x128xbf16>
    %52 = vector.shape_cast %51 : vector<8x8x128xbf16> to vector<64x128xbf16>
    %c0_61 = arith.constant 0 : index
    %c0_62 = arith.constant 0 : index
    %53 = vector.load %arg12[%c0_61, %c0_62] : memref<64x128xf32, #tpu.memory_space<vmem>>, vector<64x128xf32>
    %c4 = arith.constant 4 : index
    %c0_63 = arith.constant 0 : index
    %c0_64 = arith.constant 0 : index
    %54 = vector.load %arg4[%c4, %c0_63, %c0_64] : memref<9x128x128xbf16, #tpu.memory_space<vmem>>, vector<1x128x128xbf16>
    %55 = vector.shape_cast %54 : vector<1x128x128xbf16> to vector<128x128xbf16>
    %cst_65 = arith.constant dense<0.000000e+00> : vector<64x128xf32>
    %56 = tpu.matmul %52, %55, %cst_65 {dimension_numbers = #tpu.dot_dimension_numbers<[1], [0], [0], [1], [0, 0, 1, 1], [], []>} : vector<64x128xbf16>, vector<128x128xbf16>, vector<64x128xf32> -> vector<64x128xf32>
    %57 = arith.addf %53, %56 : vector<64x128xf32>
    %c0_66 = arith.constant 0 : index
    %c0_67 = arith.constant 0 : index
    %58 = vector.load %arg12[%c0_66, %c0_67] : memref<64x128xf32, #tpu.memory_space<vmem>>, vector<64x128xf32>
    tpu.vector_store %arg12[%c0_66, %c0_67], %57 {strides = array<i32>} : memref<64x128xf32, #tpu.memory_space<vmem>>, vector<64x128xf32>,
    %c1_68 = arith.constant 1 : index
    %c2_69 = arith.constant 2 : index
    %c0_70 = arith.constant 0 : index
    %59 = vector.load %arg11[%c1_68, %c2_69, %c0_70] : memref<10x10x128xbf16, #tpu.memory_space<vmem>>, vector<8x8x128xbf16>
    %60 = vector.shape_cast %59 : vector<8x8x128xbf16> to vector<64x128xbf16>
    %c0_71 = arith.constant 0 : index
    %c0_72 = arith.constant 0 : index
    %61 = vector.load %arg12[%c0_71, %c0_72] : memref<64x128xf32, #tpu.memory_space<vmem>>, vector<64x128xf32>
    %c5 = arith.constant 5 : index
    %c0_73 = arith.constant 0 : index
    %c0_74 = arith.constant 0 : index
    %62 = vector.load %arg4[%c5, %c0_73, %c0_74] : memref<9x128x128xbf16, #tpu.memory_space<vmem>>, vector<1x128x128xbf16>
    %63 = vector.shape_cast %62 : vector<1x128x128xbf16> to vector<128x128xbf16>
    %cst_75 = arith.constant dense<0.000000e+00> : vector<64x128xf32>
    %64 = tpu.matmul %60, %63, %cst_75 {dimension_numbers = #tpu.dot_dimension_numbers<[1], [0], [0], [1], [0, 0, 1, 1], [], []>} : vector<64x128xbf16>, vector<128x128xbf16>, vector<64x128xf32> -> vector<64x128xf32>
    %65 = arith.addf %61, %64 : vector<64x128xf32>
    %c0_76 = arith.constant 0 : index
    %c0_77 = arith.constant 0 : index
    %66 = vector.load %arg12[%c0_76, %c0_77] : memref<64x128xf32, #tpu.memory_space<vmem>>, vector<64x128xf32>
    tpu.vector_store %arg12[%c0_76, %c0_77], %65 {strides = array<i32>} : memref<64x128xf32, #tpu.memory_space<vmem>>, vector<64x128xf32>,
    %c2_78 = arith.constant 2 : index
    %c0_79 = arith.constant 0 : index
    %c0_80 = arith.constant 0 : index
    %67 = vector.load %arg11[%c2_78, %c0_79, %c0_80] : memref<10x10x128xbf16, #tpu.memory_space<vmem>>, vector<8x8x128xbf16>
    %68 = vector.shape_cast %67 : vector<8x8x128xbf16> to vector<64x128xbf16>
    %c0_81 = arith.constant 0 : index
    %c0_82 = arith.constant 0 : index
    %69 = vector.load %arg12[%c0_81, %c0_82] : memref<64x128xf32, #tpu.memory_space<vmem>>, vector<64x128xf32>
    %c6 = arith.constant 6 : index
    %c0_83 = arith.constant 0 : index
    %c0_84 = arith.constant 0 : index
    %70 = vector.load %arg4[%c6, %c0_83, %c0_84] : memref<9x128x128xbf16, #tpu.memory_space<vmem>>, vector<1x128x128xbf16>
    %71 = vector.shape_cast %70 : vector<1x128x128xbf16> to vector<128x128xbf16>
    %cst_85 = arith.constant dense<0.000000e+00> : vector<64x128xf32>
    %72 = tpu.matmul %68, %71, %cst_85 {dimension_numbers = #tpu.dot_dimension_numbers<[1], [0], [0], [1], [0, 0, 1, 1], [], []>} : vector<64x128xbf16>, vector<128x128xbf16>, vector<64x128xf32> -> vector<64x128xf32>
    %73 = arith.addf %69, %72 : vector<64x128xf32>
    %c0_86 = arith.constant 0 : index
    %c0_87 = arith.constant 0 : index
    %74 = vector.load %arg12[%c0_86, %c0_87] : memref<64x128xf32, #tpu.memory_space<vmem>>, vector<64x128xf32>
    tpu.vector_store %arg12[%c0_86, %c0_87], %73 {strides = array<i32>} : memref<64x128xf32, #tpu.memory_space<vmem>>, vector<64x128xf32>,
    %c2_88 = arith.constant 2 : index
    %c1_89 = arith.constant 1 : index
    %c0_90 = arith.constant 0 : index
    %75 = vector.load %arg11[%c2_88, %c1_89, %c0_90] : memref<10x10x128xbf16, #tpu.memory_space<vmem>>, vector<8x8x128xbf16>
    %76 = vector.shape_cast %75 : vector<8x8x128xbf16> to vector<64x128xbf16>
    %c0_91 = arith.constant 0 : index
    %c0_92 = arith.constant 0 : index
    %77 = vector.load %arg12[%c0_91, %c0_92] : memref<64x128xf32, #tpu.memory_space<vmem>>, vector<64x128xf32>
    %c7 = arith.constant 7 : index
    %c0_93 = arith.constant 0 : index
    %c0_94 = arith.constant 0 : index
    %78 = vector.load %arg4[%c7, %c0_93, %c0_94] : memref<9x128x128xbf16, #tpu.memory_space<vmem>>, vector<1x128x128xbf16>
    %79 = vector.shape_cast %78 : vector<1x128x128xbf16> to vector<128x128xbf16>
    %cst_95 = arith.constant dense<0.000000e+00> : vector<64x128xf32>
    %80 = tpu.matmul %76, %79, %cst_95 {dimension_numbers = #tpu.dot_dimension_numbers<[1], [0], [0], [1], [0, 0, 1, 1], [], []>} : vector<64x128xbf16>, vector<128x128xbf16>, vector<64x128xf32> -> vector<64x128xf32>
    %81 = arith.addf %77, %80 : vector<64x128xf32>
    %c0_96 = arith.constant 0 : index
    %c0_97 = arith.constant 0 : index
    %82 = vector.load %arg12[%c0_96, %c0_97] : memref<64x128xf32, #tpu.memory_space<vmem>>, vector<64x128xf32>
    tpu.vector_store %arg12[%c0_96, %c0_97], %81 {strides = array<i32>} : memref<64x128xf32, #tpu.memory_space<vmem>>, vector<64x128xf32>,
    %c2_98 = arith.constant 2 : index
    %c2_99 = arith.constant 2 : index
    %c0_100 = arith.constant 0 : index
    %83 = vector.load %arg11[%c2_98, %c2_99, %c0_100] : memref<10x10x128xbf16, #tpu.memory_space<vmem>>, vector<8x8x128xbf16>
    %84 = vector.shape_cast %83 : vector<8x8x128xbf16> to vector<64x128xbf16>
    %c0_101 = arith.constant 0 : index
    %c0_102 = arith.constant 0 : index
    %85 = vector.load %arg12[%c0_101, %c0_102] : memref<64x128xf32, #tpu.memory_space<vmem>>, vector<64x128xf32>
    %c8 = arith.constant 8 : index
    %c0_103 = arith.constant 0 : index
    %c0_104 = arith.constant 0 : index
    %86 = vector.load %arg4[%c8, %c0_103, %c0_104] : memref<9x128x128xbf16, #tpu.memory_space<vmem>>, vector<1x128x128xbf16>
    %87 = vector.shape_cast %86 : vector<1x128x128xbf16> to vector<128x128xbf16>
    %cst_105 = arith.constant dense<0.000000e+00> : vector<64x128xf32>
    %88 = tpu.matmul %84, %87, %cst_105 {dimension_numbers = #tpu.dot_dimension_numbers<[1], [0], [0], [1], [0, 0, 1, 1], [], []>} : vector<64x128xbf16>, vector<128x128xbf16>, vector<64x128xf32> -> vector<64x128xf32>
    %89 = arith.addf %85, %88 : vector<64x128xf32>
    %c0_106 = arith.constant 0 : index
    %c0_107 = arith.constant 0 : index
    %90 = vector.load %arg12[%c0_106, %c0_107] : memref<64x128xf32, #tpu.memory_space<vmem>>, vector<64x128xf32>
    tpu.vector_store %arg12[%c0_106, %c0_107], %89 {strides = array<i32>} : memref<64x128xf32, #tpu.memory_space<vmem>>, vector<64x128xf32>,
    %c0_108 = arith.constant 0 : index
    %c0_109 = arith.constant 0 : index
    %91 = vector.load %arg12[%c0_108, %c0_109] : memref<64x128xf32, #tpu.memory_space<vmem>>, vector<64x128xf32>
    %c0_110 = arith.constant 0 : index
    %c0_111 = arith.constant 0 : index
    %c0_112 = arith.constant 0 : index
    %c0_113 = arith.constant 0 : index
    %92 = vector.load %arg5[%c0_110, %c0_111, %c0_112, %c0_113] : memref<1x8x8x128xbf16, #tpu.memory_space<vmem>>, vector<1x8x8x128xbf16>
    %93 = vector.shape_cast %92 : vector<1x8x8x128xbf16> to vector<8x8x128xbf16>
    %94 = vector.shape_cast %93 : vector<8x8x128xbf16> to vector<64x128xbf16>
    %c0_114 = arith.constant 0 : index
    %c0_115 = arith.constant 0 : index
    %95 = vector.load %arg6[%c0_114, %c0_115] : memref<128x128xbf16, #tpu.memory_space<vmem>>, vector<128x128xbf16>
    %cst_116 = arith.constant dense<0.000000e+00> : vector<64x128xf32>
    %96 = tpu.matmul %94, %95, %cst_116 {dimension_numbers = #tpu.dot_dimension_numbers<[1], [0], [0], [1], [0, 0, 1, 1], [], []>} : vector<64x128xbf16>, vector<128x128xbf16>, vector<64x128xf32> -> vector<64x128xf32>
    %cst_117 = arith.constant dense<0.000000e+00> : vector<128xf32>
    %97 = vector.multi_reduction <add>, %91, %cst_117 [0] : vector<64x128xf32> to vector<128xf32>
    %98 = vector.shape_cast %97 : vector<128xf32> to vector<1x128xf32>
    %99 = arith.mulf %91, %91 : vector<64x128xf32>
    %cst_118 = arith.constant dense<0.000000e+00> : vector<128xf32>
    %100 = vector.multi_reduction <add>, %99, %cst_118 [0] : vector<64x128xf32> to vector<128xf32>
    %101 = vector.shape_cast %100 : vector<128xf32> to vector<1x128xf32>
    %cst_119 = arith.constant 0.000000e+00 : f32
    %102 = vector.broadcast %cst_119 : f32 to vector<6x128xf32>
    %103 = tpu.concatenate %98, %101, %102 in 0 : vector<1x128xf32>, vector<1x128xf32>, vector<6x128xf32> -> vector<8x128xf32>
    %c0_120 = arith.constant 0 : index
    %c0_121 = arith.constant 0 : index
    %104 = vector.load %arg9[%c0_120, %c0_121] : memref<8x128xf32, #tpu.memory_space<vmem>>, vector<8x128xf32>
    tpu.vector_store %arg9[%c0_120, %c0_121], %103 {strides = array<i32>} : memref<8x128xf32, #tpu.memory_space<vmem>>, vector<8x128xf32>,
    %cst_122 = arith.constant dense<0.000000e+00> : vector<128xf32>
    %105 = vector.multi_reduction <add>, %96, %cst_122 [0] : vector<64x128xf32> to vector<128xf32>
    %106 = vector.shape_cast %105 : vector<128xf32> to vector<1x128xf32>
    %107 = arith.mulf %96, %96 : vector<64x128xf32>
    %cst_123 = arith.constant dense<0.000000e+00> : vector<128xf32>
    %108 = vector.multi_reduction <add>, %107, %cst_123 [0] : vector<64x128xf32> to vector<128xf32>
    %109 = vector.shape_cast %108 : vector<128xf32> to vector<1x128xf32>
    %cst_124 = arith.constant 0.000000e+00 : f32
    %110 = vector.broadcast %cst_124 : f32 to vector<6x128xf32>
    %111 = tpu.concatenate %106, %109, %110 in 0 : vector<1x128xf32>, vector<1x128xf32>, vector<6x128xf32> -> vector<8x128xf32>
    %c0_125 = arith.constant 0 : index
    %c0_126 = arith.constant 0 : index
    %112 = vector.load %arg10[%c0_125, %c0_126] : memref<8x128xf32, #tpu.memory_space<vmem>>, vector<8x128xf32>
    tpu.vector_store %arg10[%c0_125, %c0_126], %111 {strides = array<i32>} : memref<8x128xf32, #tpu.memory_space<vmem>>, vector<8x128xf32>,
    %113 = vector.shape_cast %91 : vector<64x128xf32> to vector<1x8x8x128xf32>
    %114 = arith.truncf %113 : vector<1x8x8x128xf32> to vector<1x8x8x128xbf16>
    %c0_127 = arith.constant 0 : index
    %c0_128 = arith.constant 0 : index
    %c0_129 = arith.constant 0 : index
    %c0_130 = arith.constant 0 : index
    %115 = vector.load %arg7[%c0_127, %c0_128, %c0_129, %c0_130] : memref<1x8x8x128xbf16, #tpu.memory_space<vmem>>, vector<1x8x8x128xbf16>
    tpu.vector_store %arg7[%c0_127, %c0_128, %c0_129, %c0_130], %114 {strides = array<i32>} : memref<1x8x8x128xbf16, #tpu.memory_space<vmem>>, vector<1x8x8x128xbf16>,
    %116 = vector.shape_cast %96 : vector<64x128xf32> to vector<1x8x8x128xf32>
    %117 = arith.truncf %116 : vector<1x8x8x128xf32> to vector<1x8x8x128xbf16>
    %c0_131 = arith.constant 0 : index
    %c0_132 = arith.constant 0 : index
    %c0_133 = arith.constant 0 : index
    %c0_134 = arith.constant 0 : index
    %118 = vector.load %arg8[%c0_131, %c0_132, %c0_133, %c0_134] : memref<1x8x8x128xbf16, #tpu.memory_space<vmem>>, vector<1x8x8x128xbf16>
    tpu.vector_store %arg8[%c0_131, %c0_132, %c0_133, %c0_134], %117 {strides = array<i32>} : memref<1x8x8x128xbf16, #tpu.memory_space<vmem>>, vector<1x8x8x128xbf16>,
    return
  }
  func.func @transform_0(%arg0: i32) -> (i32, i32, i32, i32) {
    %c0_i32 = arith.constant 0 : i32
    %c0_i32_0 = arith.constant 0 : i32
    %c0_i32_1 = arith.constant 0 : i32
    %c0_i32_2 = arith.constant 0 : i32
    return %arg0, %c0_i32, %c0_i32_0, %c0_i32_1 : i32, i32, i32, i32
  }
  func.func @transform_1(%arg0: i32) -> (i32, i32) {
    %c0_i32 = arith.constant 0 : i32
    %c0_i32_0 = arith.constant 0 : i32
    %c0_i32_1 = arith.constant 0 : i32
    return %c0_i32, %c0_i32_0 : i32, i32
  }
  func.func @transform_2(%arg0: i32) -> (i32, i32) {
    %c0_i32 = arith.constant 0 : i32
    %c0_i32_0 = arith.constant 0 : i32
    %c0_i32_1 = arith.constant 0 : i32
    return %c0_i32, %c0_i32_0 : i32, i32
  }
  func.func @transform_3(%arg0: i32) -> (i32, i32, i32) {
    %c0_i32 = arith.constant 0 : i32
    %c0_i32_0 = arith.constant 0 : i32
    %c0_i32_1 = arith.constant 0 : i32
    %c0_i32_2 = arith.constant 0 : i32
    return %c0_i32, %c0_i32_0, %c0_i32_1 : i32, i32, i32
  }
  func.func @transform_4(%arg0: i32) -> (i32, i32, i32, i32) {
    %c0_i32 = arith.constant 0 : i32
    %c0_i32_0 = arith.constant 0 : i32
    %c0_i32_1 = arith.constant 0 : i32
    %c0_i32_2 = arith.constant 0 : i32
    return %arg0, %c0_i32, %c0_i32_0, %c0_i32_1 : i32, i32, i32, i32
  }
  func.func @transform_5(%arg0: i32) -> (i32, i32) {
    %c0_i32 = arith.constant 0 : i32
    %c0_i32_0 = arith.constant 0 : i32
    %c0_i32_1 = arith.constant 0 : i32
    return %c0_i32, %c0_i32_0 : i32, i32
  }
  func.func @transform_6(%arg0: i32) -> (i32, i32, i32, i32) {
    %c0_i32 = arith.constant 0 : i32
    %c0_i32_0 = arith.constant 0 : i32
    %c0_i32_1 = arith.constant 0 : i32
    %c0_i32_2 = arith.constant 0 : i32
    return %arg0, %c0_i32, %c0_i32_0, %c0_i32_1 : i32, i32, i32, i32
  }
  func.func @transform_7(%arg0: i32) -> (i32, i32, i32, i32) {
    %c0_i32 = arith.constant 0 : i32
    %c0_i32_0 = arith.constant 0 : i32
    %c0_i32_1 = arith.constant 0 : i32
    %c0_i32_2 = arith.constant 0 : i32
    return %arg0, %c0_i32, %c0_i32_0, %c0_i32_1 : i32, i32, i32, i32
  }
  func.func @transform_8(%arg0: i32) -> (i32, i32) {
    %c0_i32 = arith.constant 0 : i32
    %c0_i32_0 = arith.constant 0 : i32
    return %arg0, %c0_i32 : i32, i32
  }
  func.func @transform_9(%arg0: i32) -> (i32, i32) {
    %c0_i32 = arith.constant 0 : i32
    %c0_i32_0 = arith.constant 0 : i32
    return %arg0, %c0_i32 : i32, i32
  }
}

module attributes {stable_mosaic.version = 11 : i64} {
  func.func @_bn_add_proj_kernel(%arg0: i32, %arg1: memref<64x128xbf16, #tpu.memory_space<vmem>>, %arg2: memref<64x128xbf16, #tpu.memory_space<vmem>>, %arg3: memref<1x128xf32, #tpu.memory_space<vmem>>, %arg4: memref<1x128xf32, #tpu.memory_space<vmem>>, %arg5: memref<1x128xf32, #tpu.memory_space<vmem>>, %arg6: memref<1x128xf32, #tpu.memory_space<vmem>>, %arg7: memref<64x128xf32, #tpu.memory_space<vmem>>) attributes {dimension_semantics = [#tpu.dimension_semantics<parallel>], iteration_bounds = array<i64: 2>, scalar_prefetch = 0 : i64, scratch_operands = 0 : i64, tpu.core_type = #tpu.core_type<tc>, window_params = [{transform_indices = @transform_0, window_bounds = array<i64: 64, 128>}, {transform_indices = @transform_1, window_bounds = array<i64: 64, 128>}, {pipeline_mode = #tpu.pipeline_mode<synchronous>, transform_indices = @transform_2, window_bounds = array<i64: 1, 128>}, {pipeline_mode = #tpu.pipeline_mode<synchronous>, transform_indices = @transform_3, window_bounds = array<i64: 1, 128>}, {pipeline_mode = #tpu.pipeline_mode<synchronous>, transform_indices = @transform_4, window_bounds = array<i64: 1, 128>}, {pipeline_mode = #tpu.pipeline_mode<synchronous>, transform_indices = @transform_5, window_bounds = array<i64: 1, 128>}, {transform_indices = @transform_6, window_bounds = array<i64: 64, 128>}]} {
    %c0 = arith.constant 0 : index
    %c0_0 = arith.constant 0 : index
    %0 = vector.load %arg1[%c0, %c0_0] : memref<64x128xbf16, #tpu.memory_space<vmem>>, vector<64x128xbf16>
    %1 = arith.extf %0 : vector<64x128xbf16> to vector<64x128xf32>
    %c0_1 = arith.constant 0 : index
    %c0_2 = arith.constant 0 : index
    %2 = vector.load %arg3[%c0_1, %c0_2] : memref<1x128xf32, #tpu.memory_space<vmem>>, vector<1x128xf32>
    %3 = vector.broadcast %2 : vector<1x128xf32> to vector<64x128xf32>
    %4 = arith.mulf %1, %3 : vector<64x128xf32>
    %c0_3 = arith.constant 0 : index
    %c0_4 = arith.constant 0 : index
    %5 = vector.load %arg4[%c0_3, %c0_4] : memref<1x128xf32, #tpu.memory_space<vmem>>, vector<1x128xf32>
    %6 = vector.broadcast %5 : vector<1x128xf32> to vector<64x128xf32>
    %7 = arith.addf %4, %6 : vector<64x128xf32>
    %c0_5 = arith.constant 0 : index
    %c0_6 = arith.constant 0 : index
    %8 = vector.load %arg2[%c0_5, %c0_6] : memref<64x128xbf16, #tpu.memory_space<vmem>>, vector<64x128xbf16>
    %9 = arith.extf %8 : vector<64x128xbf16> to vector<64x128xf32>
    %c0_7 = arith.constant 0 : index
    %c0_8 = arith.constant 0 : index
    %10 = vector.load %arg5[%c0_7, %c0_8] : memref<1x128xf32, #tpu.memory_space<vmem>>, vector<1x128xf32>
    %11 = vector.broadcast %10 : vector<1x128xf32> to vector<64x128xf32>
    %12 = arith.mulf %9, %11 : vector<64x128xf32>
    %c0_9 = arith.constant 0 : index
    %c0_10 = arith.constant 0 : index
    %13 = vector.load %arg6[%c0_9, %c0_10] : memref<1x128xf32, #tpu.memory_space<vmem>>, vector<1x128xf32>
    %14 = vector.broadcast %13 : vector<1x128xf32> to vector<64x128xf32>
    %15 = arith.addf %12, %14 : vector<64x128xf32>
    %16 = arith.addf %7, %15 : vector<64x128xf32>
    %cst = arith.constant 0.000000e+00 : f32
    %17 = vector.broadcast %cst : f32 to vector<64x128xf32>
    %18 = arith.maximumf %16, %17 : vector<64x128xf32>
    %c0_11 = arith.constant 0 : index
    %c0_12 = arith.constant 0 : index
    %19 = vector.load %arg7[%c0_11, %c0_12] : memref<64x128xf32, #tpu.memory_space<vmem>>, vector<64x128xf32>
    tpu.vector_store %arg7[%c0_11, %c0_12], %18 {strides = array<i32>} : memref<64x128xf32, #tpu.memory_space<vmem>>, vector<64x128xf32>,
    return
  }
  func.func @transform_0(%arg0: i32) -> (i32, i32) {
    %c0_i32 = arith.constant 0 : i32
    %c0_i32_0 = arith.constant 0 : i32
    return %arg0, %c0_i32 : i32, i32
  }
  func.func @transform_1(%arg0: i32) -> (i32, i32) {
    %c0_i32 = arith.constant 0 : i32
    %c0_i32_0 = arith.constant 0 : i32
    return %arg0, %c0_i32 : i32, i32
  }
  func.func @transform_2(%arg0: i32) -> (i32, i32) {
    %c0_i32 = arith.constant 0 : i32
    %c0_i32_0 = arith.constant 0 : i32
    %c0_i32_1 = arith.constant 0 : i32
    return %c0_i32, %c0_i32_0 : i32, i32
  }
  func.func @transform_3(%arg0: i32) -> (i32, i32) {
    %c0_i32 = arith.constant 0 : i32
    %c0_i32_0 = arith.constant 0 : i32
    %c0_i32_1 = arith.constant 0 : i32
    return %c0_i32, %c0_i32_0 : i32, i32
  }
  func.func @transform_4(%arg0: i32) -> (i32, i32) {
    %c0_i32 = arith.constant 0 : i32
    %c0_i32_0 = arith.constant 0 : i32
    %c0_i32_1 = arith.constant 0 : i32
    return %c0_i32, %c0_i32_0 : i32, i32
  }
  func.func @transform_5(%arg0: i32) -> (i32, i32) {
    %c0_i32 = arith.constant 0 : i32
    %c0_i32_0 = arith.constant 0 : i32
    %c0_i32_1 = arith.constant 0 : i32
    return %c0_i32, %c0_i32_0 : i32, i32
  }
  func.func @transform_6(%arg0: i32) -> (i32, i32) {
    %c0_i32 = arith.constant 0 : i32
    %c0_i32_0 = arith.constant 0 : i32
    return %arg0, %c0_i32 : i32, i32
  }
}

</mosaic_0001>

<llo_original>
// kernel: basic_block_forward.3
$region0: #{basic_block_forward.3}
  #allocation0 [shape = 'u32[]', space=smem, size = 0x4, offset = 0x4, fixed_abs, tag = 'smem constant byte address 0x4 - core index']
  #allocation1 [shape = 'u32[144,128]{1,0:T(1,128)}', space=vmem, size = 0x12000, scoped, tag = 'internal scratch']
  %s0 = inlined_call_operand.vmem [shape: bf16[128,128], index: 0, kind: input, shape index: {}]
  %s1 = inlined_call_operand.vmem [shape: bf16[128,128], index: 1, kind: input, shape index: {}]
  %s2 = inlined_call_operand.vmem [shape: bf16[128,128], index: 2, kind: output, shape index: {0}]
  %s3 = inlined_call_operand.vmem [shape: f32[16,128], index: 3, kind: output, shape index: {1}]
  %4 = xla_tuple %s2, %s3
  %s5 = sld [smem:[#allocation0]]
  $region49: #{basic_block_forward.3} parent=0
    _
  %s7 = ssub.s32 1, %s5
  %s8 = scalar_select 0, %s7, %s5
  loop: start=0, step=1, limit=4
  $region2: #{basic_block_forward.3} parent=0 // loop_pre_header
    _
  $region3: #{basic_block_forward.3} parent=0 // loop_header
    %s10 = sphi 0, %s14
    %p11 = scmp.ge.s32.totalorder %s10, 4
    %s20 = sphi 0, %s22
    %s23 = sphi 0, %s20
    %s24 = sphi 0, %s23
    %s40 = sphi 0, %s24
    %s44 = sphi 0, %s44
    %s46 = sphi 0, %s44
    %s47 = sphi 0, %s46
    %s61 = sphi 0, %s47
    %s67 = sphi 0, %s69
    %s70 = sphi 0, %s67
    %s71 = sphi 0, %s70
    %s87 = sphi 0, %s71
    %s93 = sphi 0, %s95
    %s96 = sphi 0, %s93
    %s97 = sphi 0, %s96
    %s113 = sphi 0, %s97
  $region4: #{basic_block_forward.3} parent=0 // loop_header_branch
    %13 = sbr.rel (%p11) target = $region8
  $region5: #{basic_block_forward.3} parent=0 // loop_body
    %s15 = ssub.s32 %s10, 1
    %s16 = ssub.s32 %s10, 2
    %s17 = sadd.s32 %s10, 1
    %s18 = ssub.s32 %s10, %s17
    %p19 = scmp.eq.s32.totalorder %s18, 0
    %s21 = sadd.s32 %s20, 1
    %s22 = scalar_select %p19, %s20, %s21
    %p25 = pneg %p19
    %p26 = scmp.eq.s32.totalorder %s10, 1
    %p27 = por %p25, %p26
    %p28 = scmp.ne.s32.totalorder %s20, %s23
    %p29 = scmp.eq.s32.totalorder %s10, 0
    %p30 = por %p28, %p29
    %p31 = scmp.ne.s32.totalorder %s20, %s23
    %p32 = scmp.eq.s32.totalorder %s15, 1
    %p33 = por %p31, %p32
    %p34 = scmp.ne.s32.totalorder %s23, %s24
    %p35 = scmp.eq.s32.totalorder %s15, 0
    %p36 = por %p34, %p35
    %p37 = scmp.ne.s32.totalorder %s23, %s24
    %p38 = scmp.eq.s32.totalorder %s16, 1
    %p39 = por %p37, %p38
    %p41 = scmp.ne.s32.totalorder %s24, %s40
    %p42 = scmp.eq.s32.totalorder %s16, 0
    %p43 = por %p41, %p42
    %s45 = sadd.s32 %s44, 1
    %p48 = scmp.eq.s32.totalorder %s10, 1
    %p49 = scmp.ne.s32.totalorder %s44, %s46
    %p50 = scmp.eq.s32.totalorder %s10, 0
    %p51 = por %p49, %p50
    %p52 = scmp.ne.s32.totalorder %s44, %s46
    %p53 = scmp.eq.s32.totalorder %s15, 1
    %p54 = por %p52, %p53
    %p55 = scmp.ne.s32.totalorder %s46, %s47
    %p56 = scmp.eq.s32.totalorder %s15, 0
    %p57 = por %p55, %p56
    %p58 = scmp.ne.s32.totalorder %s46, %s47
    %p59 = scmp.eq.s32.totalorder %s16, 1
    %p60 = por %p58, %p59
    %p62 = scmp.ne.s32.totalorder %s47, %s61
    %p63 = scmp.eq.s32.totalorder %s16, 0
    %p64 = por %p62, %p63
    %s65 = ssub.s32 %s10, %s17
    %p66 = scmp.eq.s32.totalorder %s65, 0
    %s68 = sadd.s32 %s67, 1
    %s69 = scalar_select %p66, %s67, %s68
    %p72 = pneg %p66
    %p73 = scmp.eq.s32.totalorder %s10, 1
    %p74 = por %p72, %p73
    %p75 = scmp.ne.s32.totalorder %s67, %s70
    %p76 = scmp.eq.s32.totalorder %s10, 0
    %p77 = por %p75, %p76
    %p78 = scmp.ne.s32.totalorder %s67, %s70
    %p79 = scmp.eq.s32.totalorder %s15, 1
    %p80 = por %p78, %p79
    %p81 = scmp.ne.s32.totalorder %s70, %s71
    %p82 = scmp.eq.s32.totalorder %s15, 0
    %p83 = por %p81, %p82
    %p84 = scmp.ne.s32.totalorder %s70, %s71
    %p85 = scmp.eq.s32.totalorder %s16, 1
    %p86 = por %p84, %p85
    %p88 = scmp.ne.s32.totalorder %s71, %s87
    %p89 = scmp.eq.s32.totalorder %s16, 0
    %p90 = por %p88, %p89
    %s91 = ssub.s32 %s10, %s17
    %p92 = scmp.eq.s32.totalorder %s91, 0
    %s94 = sadd.s32 %s93, 1
    %s95 = scalar_select %p92, %s93, %s94
    %p98 = pneg %p92
    %p99 = scmp.eq.s32.totalorder %s10, 1
    %p100 = por %p98, %p99
    %p101 = scmp.ne.s32.totalorder %s93, %s96
    %p102 = scmp.eq.s32.totalorder %s10, 0
    %p103 = por %p101, %p102
    %p104 = scmp.ne.s32.totalorder %s93, %s96
    %p105 = scmp.eq.s32.totalorder %s15, 1
    %p106 = por %p104, %p105
    %p107 = scmp.ne.s32.totalorder %s96, %s97
    %p108 = scmp.eq.s32.totalorder %s15, 0
    %p109 = por %p107, %p108
    %p110 = scmp.ne.s32.totalorder %s96, %s97
    %p111 = scmp.eq.s32.totalorder %s16, 1
    %p112 = por %p110, %p111
    %p114 = scmp.ne.s32.totalorder %s97, %s113
    %p115 = scmp.eq.s32.totalorder %s16, 0
    %p116 = por %p114, %p115
    %p117 = scmp.le.s32.totalorder 1, %s10
    %p118 = scmp.lt.s32.totalorder %s10, 3
    %p119 = pnand %p117, %p118
    %p120 = pneg %p119
    // Predicated region
    $region9: #{basic_block_forward.3} parent=5 // pred_check
      _
    $region10: #{basic_block_forward.3} parent=5 // pred_check_branch
      %122 = sbr.rel (%p119) target = $region12
    $region11: #{basic_block_forward.3} parent=5 // pred_region
      %s123 = ssub.s32 %s10, 1
      // Predicated region
      $region13: #{basic_block_forward.3} parent=11 // pred_check
        %p124 = pneg %p57
      $region14: #{basic_block_forward.3} parent=11 // pred_check_branch
        %126 = sbr.rel (%p124) target = $region16
      $region15: #{basic_block_forward.3} parent=11 // pred_region
        _
      $region16: #{basic_block_forward.3} parent=11 // pred_fallthru
        _
    $region12: #{basic_block_forward.3} parent=5 // pred_fallthru
      _
    %p127 = scmp.lt.s32.totalorder %s10, 2
    // Predicated region
    $region17: #{basic_block_forward.3} parent=5 // pred_check
      %p128 = pneg %p127
    $region18: #{basic_block_forward.3} parent=5 // pred_check_branch
      %130 = sbr.rel (%p128) target = $region20
    $region19: #{basic_block_forward.3} parent=5 // pred_region
      // Predicated region
      $region21: #{basic_block_forward.3} parent=19 // pred_check
        %p131 = pneg %p30
      $region22: #{basic_block_forward.3} parent=19 // pred_check_branch
        %133 = sbr.rel (%p131) target = $region24
      $region23: #{basic_block_forward.3} parent=19 // pred_region
        %s134 = smul.u32 8, %s10
        %p135 = scmp.lt.s32.totalorder %s134, 15
        %s136 = scalar_select %p135, %s134, 15
        %s137 = smul.addr %s136, 4
        %s138 = scalar_lea.vmem %s0, %s137
        %s139 = smul.u32 8, %s10
      $region24: #{basic_block_forward.3} parent=19 // pred_fallthru
        _
    $region20: #{basic_block_forward.3} parent=5 // pred_fallthru
      _
    %p140 = scmp.le.s32.totalorder 1, %s10
    %p141 = scmp.lt.s32.totalorder %s10, 3
    %p142 = pnand %p140, %p141
    %p143 = pneg %p142
    // Predicated region
    $region25: #{basic_block_forward.3} parent=5 // pred_check
      _
    $region26: #{basic_block_forward.3} parent=5 // pred_check_branch
      %145 = sbr.rel (%p142) target = $region28
    $region27: #{basic_block_forward.3} parent=5 // pred_region
      %s146 = ssub.s32 %s10, 1
      %s147 = smul.u32 8, %s15
      %p148 = scmp.lt.s32.totalorder %s147, 15
      %s149 = scalar_select %p148, %s147, 15
      %s150 = smul.addr %s149, 4
      %s151 = scalar_lea.vmem %s0, %s150
      %p152 = pneg %p36
      %p153 = pneg %p33
      %p154 = pneg %p57
      %p155 = pneg %p54
      %p156 = pneg %p83
      %p157 = pneg %p80
      %s158 = smul.u32 8, %s15
      %p159 = scmp.lt.s32.totalorder %s158, 15
      %s160 = scalar_select %p159, %s158, 15
      %s161 = smul.addr %s160, 4
      %s162 = scalar_lea.vmem %s2, %s161
      %p163 = pneg %p109
      %p164 = pneg %p106
      %p165 = scmp.lt.s32.totalorder %s15, 1
      %s166 = scalar_select %p165, %s15, 1
      %s167 = smul.addr %s166, 8
      %s168 = scalar_lea.vmem %s3, %s167
      %s169 = smul.u32 8, %s15
      %p170 = scmp.lt.s32.totalorder %s169, 15
      %s171 = scalar_select %p170, %s169, 15
      %s172 = smul.addr %s171, 4
      %s173 = scalar_lea.vmem %s0, %s172
      %s174 = smul.u32 8, %s15
      %s175 = smul.u32 8, %s15
      %p176 = scmp.lt.s32.totalorder %s175, 15
      %s177 = scalar_select %p176, %s175, 15
      %s178 = smul.addr %s177, 4
      %s179 = scalar_lea.vmem %s2, %s178
      %s180 = smul.u32 8, %s15
      %p181 = scmp.lt.s32.totalorder %s15, 1
      %s182 = scalar_select %p181, %s15, 1
      %s183 = smul.addr %s182, 8
      %s184 = scalar_lea.vmem %s3, %s183
      %v186 = vld [vmem:[%s173] sm:$0xf]
      %v187 = vld [vmem:[%s173 + $0x4] sm:$0xf]
      %v188 = vld [vmem:[%s173 + $0x8] sm:$0xf]
      %v189 = vld [vmem:[%s173 + $0xc] sm:$0xf]
      %v190 = vld [vmem:[%s173 + $0x10] sm:$0xf]
      %v191 = vld [vmem:[%s173 + $0x14] sm:$0xf]
      %v192 = vld [vmem:[%s173 + $0x18] sm:$0xf]
      %v193 = vld [vmem:[%s173 + $0x1c] sm:$0xf]
      %v194 = vld [vmem:[%s1] sm:$0xf]
      %v195 = vld [vmem:[%s1 + $0x4] sm:$0xf]
      %v196 = vld [vmem:[%s1 + $0x8] sm:$0xf]
      %v197 = vld [vmem:[%s1 + $0xc] sm:$0xf]
      %v198 = vld [vmem:[%s1 + $0x10] sm:$0xf]
      %v199 = vld [vmem:[%s1 + $0x14] sm:$0xf]
      %v200 = vld [vmem:[%s1 + $0x18] sm:$0xf]
      %v201 = vld [vmem:[%s1 + $0x1c] sm:$0xf]
      %v202 = vld [vmem:[%s1 + $0x20] sm:$0xf]
      %v203 = vld [vmem:[%s1 + $0x24] sm:$0xf]
      %v204 = vld [vmem:[%s1 + $0x28] sm:$0xf]
      %v205 = vld [vmem:[%s1 + $0x2c] sm:$0xf]
      %v206 = vld [vmem:[%s1 + $0x30] sm:$0xf]
      %v207 = vld [vmem:[%s1 + $0x34] sm:$0xf]
      %v208 = vld [vmem:[%s1 + $0x38] sm:$0xf]
      %v209 = vld [vmem:[%s1 + $0x3c] sm:$0xf]
      %v218 = vunpack.c.l.b16 %v186
      %v219 = vunpack.c.l.b16 %v187
      %v220 = vunpack.c.l.b16 %v188
      %v221 = vunpack.c.l.b16 %v189
      %v222 = vunpack.c.l.b16 %v190
      %v223 = vunpack.c.l.b16 %v191
      %v224 = vunpack.c.l.b16 %v192
      %v225 = vunpack.c.l.b16 %v193
      %v226 = vpack.c.b16 %v219, %v218
      %v227 = vpack.c.b16 %v221, %v220
      %v228 = vpack.c.b16 %v223, %v222
      %v229 = vpack.c.b16 %v225, %v224
      %v250 = vunpack.c.l.b16 %v194
      %v251 = vunpack.c.l.b16 %v195
      %v252 = vunpack.c.l.b16 %v196
      %v253 = vunpack.c.l.b16 %v197
      %v254 = vunpack.c.l.b16 %v198
      %v255 = vunpack.c.l.b16 %v199
      %v256 = vunpack.c.l.b16 %v200
      %v257 = vunpack.c.l.b16 %v201
      %v258 = vunpack.c.l.b16 %v202
      %v259 = vunpack.c.l.b16 %v203
      %v260 = vunpack.c.l.b16 %v204
      %v261 = vunpack.c.l.b16 %v205
      %v262 = vunpack.c.l.b16 %v206
      %v263 = vunpack.c.l.b16 %v207
      %v264 = vunpack.c.l.b16 %v208
      %v265 = vunpack.c.l.b16 %v209
      %v266 = vpack.c.b16 %v251, %v250
      %v267 = vpack.c.b16 %v253, %v252
      %v268 = vpack.c.b16 %v255, %v254
      %v269 = vpack.c.b16 %v257, %v256
      %v270 = vpack.c.b16 %v259, %v258
      %v271 = vpack.c.b16 %v261, %v260
      %v272 = vpack.c.b16 %v263, %v262
      %v273 = vpack.c.b16 %v265, %v264
      %282 = vmatprep.subr.bf16.mxu0 0
      %283 = vmatpush1.bf16.msra.mxu0 %v266
      %284 = vmatprep.subr.bf16.mxu0 0
      %285 = vmatpush1.bf16.msra.mxu0 %v267
      %286 = vmatprep.subr.bf16.mxu0 0
      %287 = vmatpush1.bf16.msra.mxu0 %v268
      %288 = vmatprep.subr.bf16.mxu0 0
      %289 = vmatpush1.bf16.msra.mxu0 %v269
      %290 = vmatprep.subr.bf16.mxu0 0
      %291 = vmatpush1.bf16.msra.mxu0 %v270
      %292 = vmatprep.subr.bf16.mxu0 0
      %293 = vmatpush1.bf16.msra.mxu0 %v271
      %294 = vmatprep.subr.bf16.mxu0 0
      %295 = vmatpush1.bf16.msra.mxu0 %v272
      %296 = vmatprep.subr.bf16.mxu0 0
      %297 = vmatpush1.bf16.msra.mxu0 %v273
      %298 = vmatprep.subr.bf16.mxu0 0
      %299 = vmatpush1.bf16.msra.mxu0 0
      %300 = vmatprep.subr.bf16.mxu0 0
      %301 = vmatpush1.bf16.msra.mxu0 0
      %302 = vmatprep.subr.bf16.mxu0 0
      %303 = vmatpush1.bf16.msra.mxu0 0
      %304 = vmatprep.subr.bf16.mxu0 0
      %305 = vmatpush1.bf16.msra.mxu0 0
      %306 = vmatprep.subr.bf16.mxu0 0
      %307 = vmatpush1.bf16.msra.mxu0 0
      %308 = vmatprep.subr.bf16.mxu0 0
      %309 = vmatpush1.bf16.msra.mxu0 0
      %310 = vmatprep.subr.bf16.mxu0 0
      %311 = vmatpush1.bf16.msra.mxu0 0
      %312 = vmatprep.subr.bf16.mxu0 0
      %313 = vmatpush1.bf16.msra.mxu0 0
      %314 = vmatprep.mubr.bf16.mxu0 0
      %315 = vmatmul.mubr.bf16.gmra.mrb[0].mxu0 %v226
      %v316 = vpop.f32.mrb[0].mxu0
      %v317 = vadd.f32 0.0, %v316
      %v318 = vpop.f32.mrb[0].mxu0
      %v319 = vpop.f32.mrb[0].mxu0
      %v320 = vadd.f32 0.0, %v319
      %v321 = vpop.f32.mrb[0].mxu0
      %322 = vmatprep.mubr.bf16.mxu0 0
      %323 = vmatmul.mubr.bf16.gmra.mrb[0].mxu0 %v227
      %v324 = vpop.f32.mrb[0].mxu0
      %v325 = vadd.f32 0.0, %v324
      %v326 = vpop.f32.mrb[0].mxu0
      %v327 = vpop.f32.mrb[0].mxu0
      %v328 = vadd.f32 0.0, %v327
      %v329 = vpop.f32.mrb[0].mxu0
      %330 = vmatprep.mubr.bf16.mxu0 0
      %331 = vmatmul.mubr.bf16.gmra.mrb[0].mxu0 %v228
      %v332 = vpop.f32.mrb[0].mxu0
      %v333 = vadd.f32 0.0, %v332
      %v334 = vpop.f32.mrb[0].mxu0
      %v335 = vpop.f32.mrb[0].mxu0
      %v336 = vadd.f32 0.0, %v335
      %v337 = vpop.f32.mrb[0].mxu0
      %338 = vmatprep.mubr.bf16.mxu0 0
      %339 = vmatmul.mubr.bf16.gmra.mrb[0].mxu0 %v229
      %v340 = vpop.f32.mrb[0].mxu0
      %v341 = vadd.f32 0.0, %v340
      %v342 = vpop.f32.mrb[0].mxu0
      %v343 = vpop.f32.mrb[0].mxu0
      %v344 = vadd.f32 0.0, %v343
      %v345 = vpop.f32.mrb[0].mxu0
      %346 = vdwg.mxu0
      %v347 = vadd.f32 %v317, %v320
      %v348 = vadd.f32 %v347, %v325
      %v349 = vadd.f32 %v348, %v328
      %v350 = vadd.f32 %v349, %v333
      %v351 = vadd.f32 %v350, %v336
      %v352 = vadd.f32 %v351, %v341
      %v353 = vadd.f32 %v352, %v344
      %v354 = vrot.slane %v353, 4
      %v355 = vadd.f32 %v353, %v354
      %v356 = vrot.slane %v355, 2
      %v357 = vadd.f32 %v355, %v356
      %v358 = vrot.slane %v357, 1
      %v359 = vadd.f32 %v357, %v358
      %v360 = vmul.f32 %v317, %v317
      %v361 = vmul.f32 %v320, %v320
      %v362 = vmul.f32 %v325, %v325
      %v363 = vmul.f32 %v328, %v328
      %v364 = vmul.f32 %v333, %v333
      %v365 = vmul.f32 %v336, %v336
      %v366 = vmul.f32 %v341, %v341
      %v367 = vmul.f32 %v344, %v344
      %v368 = vadd.f32 %v360, %v361
      %v369 = vadd.f32 %v368, %v362
      %v370 = vadd.f32 %v369, %v363
      %v371 = vadd.f32 %v370, %v364
      %v372 = vadd.f32 %v371, %v365
      %v373 = vadd.f32 %v372, %v366
      %v374 = vadd.f32 %v373, %v367
      %v375 = vrot.slane %v374, 4
      %v376 = vadd.f32 %v374, %v375
      %v377 = vrot.slane %v376, 2
      %v378 = vadd.f32 %v376, %v377
      %v379 = vrot.slane %v378, 1
      %v380 = vadd.f32 %v378, %v379
      %vm381 = vcmask 1040384
      %v382 = vsel %vm381, %v359, %v380
      %vm383 = vcmask 1041408
      %v384 = vsel %vm383, %v382, 0.0
      %385 = vst [vmem:[%s184] sm:$0xff] %v384
      %v386 = vpack.c.bf16 %v320, %v317
      %v387 = vpack.c.bf16 %v328, %v325
      %v388 = vpack.c.bf16 %v336, %v333
      %v389 = vpack.c.bf16 %v344, %v341
      %v394 = vunpack.c.l.b16 %v386
      %v395 = vunpack.c.h.b16 %v386
      %v396 = vunpack.c.l.b16 %v387
      %v397 = vunpack.c.h.b16 %v387
      %v398 = vunpack.c.l.b16 %v388
      %v399 = vunpack.c.h.b16 %v388
      %v400 = vunpack.c.l.b16 %v389
      %v401 = vunpack.c.h.b16 %v389
      %v402 = vpack.c.b16 %v394, %v394
      %v403 = vpack.c.b16 %v395, %v395
      %v404 = vpack.c.b16 %v396, %v396
      %v405 = vpack.c.b16 %v397, %v397
      %v406 = vpack.c.b16 %v398, %v398
      %v407 = vpack.c.b16 %v399, %v399
      %v408 = vpack.c.b16 %v400, %v400
      %v409 = vpack.c.b16 %v401, %v401
      %418 = vst [vmem:[%s179] sm:$0xf] %v402
      %419 = vst [vmem:[%s179 + $0x4] sm:$0xf] %v403
      %420 = vst [vmem:[%s179 + $0x8] sm:$0xf] %v404
      %421 = vst [vmem:[%s179 + $0xc] sm:$0xf] %v405
      %422 = vst [vmem:[%s179 + $0x10] sm:$0xf] %v406
      %423 = vst [vmem:[%s179 + $0x14] sm:$0xf] %v407
      %424 = vst [vmem:[%s179 + $0x18] sm:$0xf] %v408
      %425 = vst [vmem:[%s179 + $0x1c] sm:$0xf] %v409
      %s426 = smul.u32 8, %s15
      %p427 = scmp.lt.s32.totalorder %s426, 15
      %s428 = scalar_select %p427, %s426, 15
      %s429 = smul.addr %s428, 4
      %s430 = scalar_lea.vmem %s2, %s429
      %p431 = scmp.lt.s32.totalorder %s15, 1
      %s432 = scalar_select %p431, %s15, 1
      %s433 = smul.addr %s432, 8
      %s434 = scalar_lea.vmem %s3, %s433
      // Predicated region
      $region29: #{basic_block_forward.3} parent=27 // pred_check
        %p435 = pneg %p80
      $region30: #{basic_block_forward.3} parent=27 // pred_check_branch
        %437 = sbr.rel (%p435) target = $region32
      $region31: #{basic_block_forward.3} parent=27 // pred_region
        %s438 = smul.u32 8, %s15
      $region32: #{basic_block_forward.3} parent=27 // pred_fallthru
        _
      // Predicated region
      $region33: #{basic_block_forward.3} parent=27 // pred_check
        %p439 = pneg %p106
      $region34: #{basic_block_forward.3} parent=27 // pred_check_branch
        %441 = sbr.rel (%p439) target = $region36
      $region35: #{basic_block_forward.3} parent=27 // pred_region
        _
      $region36: #{basic_block_forward.3} parent=27 // pred_fallthru
        _
    $region28: #{basic_block_forward.3} parent=5 // pred_fallthru
      _
    %p442 = scmp.le.s32.totalorder 2, %s10
    // Predicated region
    $region37: #{basic_block_forward.3} parent=5 // pred_check
      %p443 = pneg %p442
    $region38: #{basic_block_forward.3} parent=5 // pred_check_branch
      %445 = sbr.rel (%p443) target = $region40
    $region39: #{basic_block_forward.3} parent=5 // pred_region
      %s446 = ssub.s32 %s10, 2
      // Predicated region
      $region41: #{basic_block_forward.3} parent=39 // pred_check
        %p447 = pneg %p86
      $region42: #{basic_block_forward.3} parent=39 // pred_check_branch
        %449 = sbr.rel (%p447) target = $region44
      $region43: #{basic_block_forward.3} parent=39 // pred_region
        %s450 = smul.u32 8, %s16
        %p451 = scmp.lt.s32.totalorder %s450, 15
        %s452 = scalar_select %p451, %s450, 15
        %s453 = smul.addr %s452, 4
        %s454 = scalar_lea.vmem %s2, %s453
      $region44: #{basic_block_forward.3} parent=39 // pred_fallthru
        _
      // Predicated region
      $region45: #{basic_block_forward.3} parent=39 // pred_check
        %p455 = pneg %p112
      $region46: #{basic_block_forward.3} parent=39 // pred_check_branch
        %457 = sbr.rel (%p455) target = $region48
      $region47: #{basic_block_forward.3} parent=39 // pred_region
        %p458 = scmp.lt.s32.totalorder %s16, 1
        %s459 = scalar_select %p458, %s16, 1
        %s460 = smul.addr %s459, 8
        %s461 = scalar_lea.vmem %s3, %s460
      $region48: #{basic_block_forward.3} parent=39 // pred_fallthru
        _
    $region40: #{basic_block_forward.3} parent=5 // pred_fallthru
      _
  $region6: #{basic_block_forward.3} parent=0 // loop_footer
    %s14 = sadd.s32 1, %s10
  $region7: #{basic_block_forward.3} parent=0 // loop_footer_branch
    %9 = sbr.rel target = $region3
  $region8: #{basic_block_forward.3} parent=0 // loop_exit
    _

// kernel: basic_block_forward.5
$region0: #{basic_block_forward.5}
  #allocation0 [shape = 'u32[]', space=smem, size = 0x4, offset = 0x4, fixed_abs, tag = 'smem constant byte address 0x4 - core index']
  #allocation1 [shape = 'u32[144,128]{1,0:T(1,128)}', space=vmem, size = 0x12000, scoped, tag = 'internal scratch']
  %s0 = inlined_call_operand.vmem [shape: bf16[128,128], index: 0, kind: input, shape index: {}]
  %s1 = inlined_call_operand.vmem [shape: bf16[128,128], index: 1, kind: input, shape index: {}]
  %s2 = inlined_call_operand.vmem [shape: f32[1,128], index: 2, kind: input, shape index: {}]
  %s3 = inlined_call_operand.vmem [shape: f32[1,128], index: 3, kind: input, shape index: {}]
  %s4 = inlined_call_operand.vmem [shape: f32[1,128], index: 4, kind: input, shape index: {}]
  %s5 = inlined_call_operand.vmem [shape: f32[1,128], index: 5, kind: input, shape index: {}]
  %s6 = inlined_call_operand.vmem [shape: f32[128,128], index: 6, kind: output, shape index: {}]
  %s7 = sld [smem:[#allocation0]]
  $region57: #{basic_block_forward.5} parent=0
    _
  %s9 = ssub.s32 1, %s7
  %s10 = scalar_select 0, %s9, %s7
  loop: start=0, step=1, limit=4
  $region2: #{basic_block_forward.5} parent=0 // loop_pre_header
    _
  $region3: #{basic_block_forward.5} parent=0 // loop_header
    %s12 = sphi 0, %s16
    %p13 = scmp.ge.s32.totalorder %s12, 4
    %s22 = sphi 0, %s24
    %s25 = sphi 0, %s22
    %s26 = sphi 0, %s25
    %s42 = sphi 0, %s26
    %s48 = sphi 0, %s50
    %s51 = sphi 0, %s48
    %s52 = sphi 0, %s51
    %s68 = sphi 0, %s52
    %s72 = sphi 0, %s72
    %s74 = sphi 0, %s72
    %s75 = sphi 0, %s74
    %s89 = sphi 0, %s75
    %s93 = sphi 0, %s93
    %s95 = sphi 0, %s93
    %s96 = sphi 0, %s95
    %s110 = sphi 0, %s96
    %s114 = sphi 0, %s114
    %s116 = sphi 0, %s114
    %s117 = sphi 0, %s116
    %s131 = sphi 0, %s117
    %s135 = sphi 0, %s135
    %s137 = sphi 0, %s135
    %s138 = sphi 0, %s137
    %s152 = sphi 0, %s138
    %s158 = sphi 0, %s160
    %s161 = sphi 0, %s158
    %s162 = sphi 0, %s161
    %s178 = sphi 0, %s162
  $region4: #{basic_block_forward.5} parent=0 // loop_header_branch
    %15 = sbr.rel (%p13) target = $region8
  $region5: #{basic_block_forward.5} parent=0 // loop_body
    %s17 = ssub.s32 %s12, 1
    %s18 = ssub.s32 %s12, 2
    %s19 = sadd.s32 %s12, 1
    %s20 = ssub.s32 %s12, %s19
    %p21 = scmp.eq.s32.totalorder %s20, 0
    %s23 = sadd.s32 %s22, 1
    %s24 = scalar_select %p21, %s22, %s23
    %p27 = pneg %p21
    %p28 = scmp.eq.s32.totalorder %s12, 1
    %p29 = por %p27, %p28
    %p30 = scmp.ne.s32.totalorder %s22, %s25
    %p31 = scmp.eq.s32.totalorder %s12, 0
    %p32 = por %p30, %p31
    %p33 = scmp.ne.s32.totalorder %s22, %s25
    %p34 = scmp.eq.s32.totalorder %s17, 1
    %p35 = por %p33, %p34
    %p36 = scmp.ne.s32.totalorder %s25, %s26
    %p37 = scmp.eq.s32.totalorder %s17, 0
    %p38 = por %p36, %p37
    %p39 = scmp.ne.s32.totalorder %s25, %s26
    %p40 = scmp.eq.s32.totalorder %s18, 1
    %p41 = por %p39, %p40
    %p43 = scmp.ne.s32.totalorder %s26, %s42
    %p44 = scmp.eq.s32.totalorder %s18, 0
    %p45 = por %p43, %p44
    %s46 = ssub.s32 %s12, %s19
    %p47 = scmp.eq.s32.totalorder %s46, 0
    %s49 = sadd.s32 %s48, 1
    %s50 = scalar_select %p47, %s48, %s49
    %p53 = pneg %p47
    %p54 = scmp.eq.s32.totalorder %s12, 1
    %p55 = por %p53, %p54
    %p56 = scmp.ne.s32.totalorder %s48, %s51
    %p57 = scmp.eq.s32.totalorder %s12, 0
    %p58 = por %p56, %p57
    %p59 = scmp.ne.s32.totalorder %s48, %s51
    %p60 = scmp.eq.s32.totalorder %s17, 1
    %p61 = por %p59, %p60
    %p62 = scmp.ne.s32.totalorder %s51, %s52
    %p63 = scmp.eq.s32.totalorder %s17, 0
    %p64 = por %p62, %p63
    %p65 = scmp.ne.s32.totalorder %s51, %s52
    %p66 = scmp.eq.s32.totalorder %s18, 1
    %p67 = por %p65, %p66
    %p69 = scmp.ne.s32.totalorder %s52, %s68
    %p70 = scmp.eq.s32.totalorder %s18, 0
    %p71 = por %p69, %p70
    %s73 = sadd.s32 %s72, 1
    %p76 = scmp.eq.s32.totalorder %s12, 1
    %p77 = scmp.ne.s32.totalorder %s72, %s74
    %p78 = scmp.eq.s32.totalorder %s12, 0
    %p79 = por %p77, %p78
    %p80 = scmp.ne.s32.totalorder %s72, %s74
    %p81 = scmp.eq.s32.totalorder %s17, 1
    %p82 = por %p80, %p81
    %p83 = scmp.ne.s32.totalorder %s74, %s75
    %p84 = scmp.eq.s32.totalorder %s17, 0
    %p85 = por %p83, %p84
    %p86 = scmp.ne.s32.totalorder %s74, %s75
    %p87 = scmp.eq.s32.totalorder %s18, 1
    %p88 = por %p86, %p87
    %p90 = scmp.ne.s32.totalorder %s75, %s89
    %p91 = scmp.eq.s32.totalorder %s18, 0
    %p92 = por %p90, %p91
    %s94 = sadd.s32 %s93, 1
    %p97 = scmp.eq.s32.totalorder %s12, 1
    %p98 = scmp.ne.s32.totalorder %s93, %s95
    %p99 = scmp.eq.s32.totalorder %s12, 0
    %p100 = por %p98, %p99
    %p101 = scmp.ne.s32.totalorder %s93, %s95
    %p102 = scmp.eq.s32.totalorder %s17, 1
    %p103 = por %p101, %p102
    %p104 = scmp.ne.s32.totalorder %s95, %s96
    %p105 = scmp.eq.s32.totalorder %s17, 0
    %p106 = por %p104, %p105
    %p107 = scmp.ne.s32.totalorder %s95, %s96
    %p108 = scmp.eq.s32.totalorder %s18, 1
    %p109 = por %p107, %p108
    %p111 = scmp.ne.s32.totalorder %s96, %s110
    %p112 = scmp.eq.s32.totalorder %s18, 0
    %p113 = por %p111, %p112
    %s115 = sadd.s32 %s114, 1
    %p118 = scmp.eq.s32.totalorder %s12, 1
    %p119 = scmp.ne.s32.totalorder %s114, %s116
    %p120 = scmp.eq.s32.totalorder %s12, 0
    %p121 = por %p119, %p120
    %p122 = scmp.ne.s32.totalorder %s114, %s116
    %p123 = scmp.eq.s32.totalorder %s17, 1
    %p124 = por %p122, %p123
    %p125 = scmp.ne.s32.totalorder %s116, %s117
    %p126 = scmp.eq.s32.totalorder %s17, 0
    %p127 = por %p125, %p126
    %p128 = scmp.ne.s32.totalorder %s116, %s117
    %p129 = scmp.eq.s32.totalorder %s18, 1
    %p130 = por %p128, %p129
    %p132 = scmp.ne.s32.totalorder %s117, %s131
    %p133 = scmp.eq.s32.totalorder %s18, 0
    %p134 = por %p132, %p133
    %s136 = sadd.s32 %s135, 1
    %p139 = scmp.eq.s32.totalorder %s12, 1
    %p140 = scmp.ne.s32.totalorder %s135, %s137
    %p141 = scmp.eq.s32.totalorder %s12, 0
    %p142 = por %p140, %p141
    %p143 = scmp.ne.s32.totalorder %s135, %s137
    %p144 = scmp.eq.s32.totalorder %s17, 1
    %p145 = por %p143, %p144
    %p146 = scmp.ne.s32.totalorder %s137, %s138
    %p147 = scmp.eq.s32.totalorder %s17, 0
    %p148 = por %p146, %p147
    %p149 = scmp.ne.s32.totalorder %s137, %s138
    %p150 = scmp.eq.s32.totalorder %s18, 1
    %p151 = por %p149, %p150
    %p153 = scmp.ne.s32.totalorder %s138, %s152
    %p154 = scmp.eq.s32.totalorder %s18, 0
    %p155 = por %p153, %p154
    %s156 = ssub.s32 %s12, %s19
    %p157 = scmp.eq.s32.totalorder %s156, 0
    %s159 = sadd.s32 %s158, 1
    %s160 = scalar_select %p157, %s158, %s159
    %p163 = pneg %p157
    %p164 = scmp.eq.s32.totalorder %s12, 1
    %p165 = por %p163, %p164
    %p166 = scmp.ne.s32.totalorder %s158, %s161
    %p167 = scmp.eq.s32.totalorder %s12, 0
    %p168 = por %p166, %p167
    %p169 = scmp.ne.s32.totalorder %s158, %s161
    %p170 = scmp.eq.s32.totalorder %s17, 1
    %p171 = por %p169, %p170
    %p172 = scmp.ne.s32.totalorder %s161, %s162
    %p173 = scmp.eq.s32.totalorder %s17, 0
    %p174 = por %p172, %p173
    %p175 = scmp.ne.s32.totalorder %s161, %s162
    %p176 = scmp.eq.s32.totalorder %s18, 1
    %p177 = por %p175, %p176
    %p179 = scmp.ne.s32.totalorder %s162, %s178
    %p180 = scmp.eq.s32.totalorder %s18, 0
    %p181 = por %p179, %p180
    %p182 = scmp.le.s32.totalorder 1, %s12
    %p183 = scmp.lt.s32.totalorder %s12, 3
    %p184 = pnand %p182, %p183
    %p185 = pneg %p184
    // Predicated region
    $region9: #{basic_block_forward.5} parent=5 // pred_check
      _
    $region10: #{basic_block_forward.5} parent=5 // pred_check_branch
      %187 = sbr.rel (%p184) target = $region12
    $region11: #{basic_block_forward.5} parent=5 // pred_region
      %s188 = ssub.s32 %s12, 1
      // Predicated region
      $region13: #{basic_block_forward.5} parent=11 // pred_check
        %p189 = pneg %p85
      $region14: #{basic_block_forward.5} parent=11 // pred_check_branch
        %191 = sbr.rel (%p189) target = $region16
      $region15: #{basic_block_forward.5} parent=11 // pred_region
        _
      $region16: #{basic_block_forward.5} parent=11 // pred_fallthru
        _
      // Predicated region
      $region17: #{basic_block_forward.5} parent=11 // pred_check
        %p192 = pneg %p106
      $region18: #{basic_block_forward.5} parent=11 // pred_check_branch
        %194 = sbr.rel (%p192) target = $region20
      $region19: #{basic_block_forward.5} parent=11 // pred_region
        _
      $region20: #{basic_block_forward.5} parent=11 // pred_fallthru
        _
      // Predicated region
      $region21: #{basic_block_forward.5} parent=11 // pred_check
        %p195 = pneg %p127
      $region22: #{basic_block_forward.5} parent=11 // pred_check_branch
        %197 = sbr.rel (%p195) target = $region24
      $region23: #{basic_block_forward.5} parent=11 // pred_region
        _
      $region24: #{basic_block_forward.5} parent=11 // pred_fallthru
        _
      // Predicated region
      $region25: #{basic_block_forward.5} parent=11 // pred_check
        %p198 = pneg %p148
      $region26: #{basic_block_forward.5} parent=11 // pred_check_branch
        %200 = sbr.rel (%p198) target = $region28
      $region27: #{basic_block_forward.5} parent=11 // pred_region
        _
      $region28: #{basic_block_forward.5} parent=11 // pred_fallthru
        _
    $region12: #{basic_block_forward.5} parent=5 // pred_fallthru
      _
    %p201 = scmp.lt.s32.totalorder %s12, 2
    // Predicated region
    $region29: #{basic_block_forward.5} parent=5 // pred_check
      %p202 = pneg %p201
    $region30: #{basic_block_forward.5} parent=5 // pred_check_branch
      %204 = sbr.rel (%p202) target = $region32
    $region31: #{basic_block_forward.5} parent=5 // pred_region
      // Predicated region
      $region33: #{basic_block_forward.5} parent=31 // pred_check
        %p205 = pneg %p32
      $region34: #{basic_block_forward.5} parent=31 // pred_check_branch
        %207 = sbr.rel (%p205) target = $region36
      $region35: #{basic_block_forward.5} parent=31 // pred_region
        %s208 = smul.u32 8, %s12
        %p209 = scmp.lt.s32.totalorder %s208, 15
        %s210 = scalar_select %p209, %s208, 15
        %s211 = smul.addr %s210, 4
        %s212 = scalar_lea.vmem %s0, %s211
        %s213 = smul.u32 8, %s12
      $region36: #{basic_block_forward.5} parent=31 // pred_fallthru
        _
      // Predicated region
      $region37: #{basic_block_forward.5} parent=31 // pred_check
        %p214 = pneg %p58
      $region38: #{basic_block_forward.5} parent=31 // pred_check_branch
        %216 = sbr.rel (%p214) target = $region40
      $region39: #{basic_block_forward.5} parent=31 // pred_region
        %s217 = smul.u32 8, %s12
        %p218 = scmp.lt.s32.totalorder %s217, 15
        %s219 = scalar_select %p218, %s217, 15
        %s220 = smul.addr %s219, 4
        %s221 = scalar_lea.vmem %s1, %s220
        %s222 = smul.u32 8, %s12
      $region40: #{basic_block_forward.5} parent=31 // pred_fallthru
        _
    $region32: #{basic_block_forward.5} parent=5 // pred_fallthru
      _
    %p223 = scmp.le.s32.totalorder 1, %s12
    %p224 = scmp.lt.s32.totalorder %s12, 3
    %p225 = pnand %p223, %p224
    %p226 = pneg %p225
    // Predicated region
    $region41: #{basic_block_forward.5} parent=5 // pred_check
      _
    $region42: #{basic_block_forward.5} parent=5 // pred_check_branch
      %228 = sbr.rel (%p225) target = $region44
    $region43: #{basic_block_forward.5} parent=5 // pred_region
      %s229 = ssub.s32 %s12, 1
      %s230 = smul.u32 8, %s17
      %p231 = scmp.lt.s32.totalorder %s230, 15
      %s232 = scalar_select %p231, %s230, 15
      %s233 = smul.addr %s232, 4
      %s234 = scalar_lea.vmem %s0, %s233
      %p235 = pneg %p38
      %p236 = pneg %p35
      %s237 = smul.u32 8, %s17
      %p238 = scmp.lt.s32.totalorder %s237, 15
      %s239 = scalar_select %p238, %s237, 15
      %s240 = smul.addr %s239, 4
      %s241 = scalar_lea.vmem %s1, %s240
      %p242 = pneg %p64
      %p243 = pneg %p61
      %p244 = pneg %p85
      %p245 = pneg %p82
      %p246 = pneg %p106
      %p247 = pneg %p103
      %p248 = pneg %p127
      %p249 = pneg %p124
      %p250 = pneg %p148
      %p251 = pneg %p145
      %p252 = pneg %p174
      %p253 = pneg %p171
      %s254 = smul.u32 8, %s17
      %p255 = scmp.lt.s32.totalorder %s254, 15
      %s256 = scalar_select %p255, %s254, 15
      %s257 = smul.addr %s256, 8
      %s258 = scalar_lea.vmem %s6, %s257
      %s259 = smul.u32 8, %s17
      %p260 = scmp.lt.s32.totalorder %s259, 15
      %s261 = scalar_select %p260, %s259, 15
      %s262 = smul.addr %s261, 4
      %s263 = scalar_lea.vmem %s0, %s262
      %s264 = smul.u32 8, %s17
      %s265 = smul.u32 8, %s17
      %p266 = scmp.lt.s32.totalorder %s265, 15
      %s267 = scalar_select %p266, %s265, 15
      %s268 = smul.addr %s267, 4
      %s269 = scalar_lea.vmem %s1, %s268
      %s270 = smul.u32 8, %s17
      %s271 = smul.u32 8, %s17
      %p272 = scmp.lt.s32.totalorder %s271, 15
      %s273 = scalar_select %p272, %s271, 15
      %s274 = smul.addr %s273, 8
      %s275 = scalar_lea.vmem %s6, %s274
      %s276 = smul.u32 8, %s17
      %v277 = vld [vmem:[%s263] sm:$0xf]
      %v278 = vld [vmem:[%s263 + $0x4] sm:$0xf]
      %v279 = vld [vmem:[%s263 + $0x8] sm:$0xf]
      %v280 = vld [vmem:[%s263 + $0xc] sm:$0xf]
      %v281 = vld [vmem:[%s263 + $0x10] sm:$0xf]
      %v282 = vld [vmem:[%s263 + $0x14] sm:$0xf]
      %v283 = vld [vmem:[%s263 + $0x18] sm:$0xf]
      %v284 = vld [vmem:[%s263 + $0x1c] sm:$0xf]
      %v285 = vunpack.c.l.bf16 %v277
      %v286 = vunpack.c.l.bf16 %v278
      %v287 = vunpack.c.l.bf16 %v279
      %v288 = vunpack.c.l.bf16 %v280
      %v289 = vunpack.c.l.bf16 %v281
      %v290 = vunpack.c.l.bf16 %v282
      %v291 = vunpack.c.l.bf16 %v283
      %v292 = vunpack.c.l.bf16 %v284
      %v293 = vld [vmem:[%s2] sm:$0x1]
      %v295 = vlaneseq
      %v296 = vshrl.u32 %v295, 7
      %v297 = vsub.s32 0, %v296
      %v298 = vrot.slane %v293, %v297
      %v300 = vmul.f32 %v285, %v298
      %v301 = vmul.f32 %v286, %v298
      %v302 = vmul.f32 %v287, %v298
      %v303 = vmul.f32 %v288, %v298
      %v304 = vmul.f32 %v289, %v298
      %v305 = vmul.f32 %v290, %v298
      %v306 = vmul.f32 %v291, %v298
      %v307 = vmul.f32 %v292, %v298
      %v308 = vld [vmem:[%s3] sm:$0x1]
      %v310 = vlaneseq
      %v311 = vshrl.u32 %v310, 7
      %v312 = vsub.s32 0, %v311
      %v313 = vrot.slane %v308, %v312
      %v315 = vadd.f32 %v300, %v313
      %v316 = vadd.f32 %v301, %v313
      %v317 = vadd.f32 %v302, %v313
      %v318 = vadd.f32 %v303, %v313
      %v319 = vadd.f32 %v304, %v313
      %v320 = vadd.f32 %v305, %v313
      %v321 = vadd.f32 %v306, %v313
      %v322 = vadd.f32 %v307, %v313
      %v323 = vld [vmem:[%s269] sm:$0xf]
      %v324 = vld [vmem:[%s269 + $0x4] sm:$0xf]
      %v325 = vld [vmem:[%s269 + $0x8] sm:$0xf]
      %v326 = vld [vmem:[%s269 + $0xc] sm:$0xf]
      %v327 = vld [vmem:[%s269 + $0x10] sm:$0xf]
      %v328 = vld [vmem:[%s269 + $0x14] sm:$0xf]
      %v329 = vld [vmem:[%s269 + $0x18] sm:$0xf]
      %v330 = vld [vmem:[%s269 + $0x1c] sm:$0xf]
      %v331 = vunpack.c.l.bf16 %v323
      %v332 = vunpack.c.l.bf16 %v324
      %v333 = vunpack.c.l.bf16 %v325
      %v334 = vunpack.c.l.bf16 %v326
      %v335 = vunpack.c.l.bf16 %v327
      %v336 = vunpack.c.l.bf16 %v328
      %v337 = vunpack.c.l.bf16 %v329
      %v338 = vunpack.c.l.bf16 %v330
      %v339 = vld [vmem:[%s4] sm:$0x1]
      %v341 = vlaneseq
      %v342 = vshrl.u32 %v341, 7
      %v343 = vsub.s32 0, %v342
      %v344 = vrot.slane %v339, %v343
      %v346 = vmul.f32 %v331, %v344
      %v347 = vmul.f32 %v332, %v344
      %v348 = vmul.f32 %v333, %v344
      %v349 = vmul.f32 %v334, %v344
      %v350 = vmul.f32 %v335, %v344
      %v351 = vmul.f32 %v336, %v344
      %v352 = vmul.f32 %v337, %v344
      %v353 = vmul.f32 %v338, %v344
      %v354 = vld [vmem:[%s5] sm:$0x1]
      %v356 = vlaneseq
      %v357 = vshrl.u32 %v356, 7
      %v358 = vsub.s32 0, %v357
      %v359 = vrot.slane %v354, %v358
      %v361 = vadd.f32 %v346, %v359
      %v362 = vadd.f32 %v347, %v359
      %v363 = vadd.f32 %v348, %v359
      %v364 = vadd.f32 %v349, %v359
      %v365 = vadd.f32 %v350, %v359
      %v366 = vadd.f32 %v351, %v359
      %v367 = vadd.f32 %v352, %v359
      %v368 = vadd.f32 %v353, %v359
      %v369 = vadd.f32 %v315, %v361
      %v370 = vadd.f32 %v316, %v362
      %v371 = vadd.f32 %v317, %v363
      %v372 = vadd.f32 %v318, %v364
      %v373 = vadd.f32 %v319, %v365
      %v374 = vadd.f32 %v320, %v366
      %v375 = vadd.f32 %v321, %v367
      %v376 = vadd.f32 %v322, %v368
      %v377 = vmax.f32 %v369, 0.0
      %v378 = vmax.f32 %v370, 0.0
      %v379 = vmax.f32 %v371, 0.0
      %v380 = vmax.f32 %v372, 0.0
      %v381 = vmax.f32 %v373, 0.0
      %v382 = vmax.f32 %v374, 0.0
      %v383 = vmax.f32 %v375, 0.0
      %v384 = vmax.f32 %v376, 0.0
      %385 = vst [vmem:[%s275] sm:$0xff] %v377
      %386 = vst [vmem:[%s275 + $0x8] sm:$0xff] %v378
      %387 = vst [vmem:[%s275 + $0x10] sm:$0xff] %v379
      %388 = vst [vmem:[%s275 + $0x18] sm:$0xff] %v380
      %389 = vst [vmem:[%s275 + $0x20] sm:$0xff] %v381
      %390 = vst [vmem:[%s275 + $0x28] sm:$0xff] %v382
      %391 = vst [vmem:[%s275 + $0x30] sm:$0xff] %v383
      %392 = vst [vmem:[%s275 + $0x38] sm:$0xff] %v384
      %s393 = smul.u32 8, %s17
      %p394 = scmp.lt.s32.totalorder %s393, 15
      %s395 = scalar_select %p394, %s393, 15
      %s396 = smul.addr %s395, 8
      %s397 = scalar_lea.vmem %s6, %s396
      // Predicated region
      $region45: #{basic_block_forward.5} parent=43 // pred_check
        %p398 = pneg %p171
      $region46: #{basic_block_forward.5} parent=43 // pred_check_branch
        %400 = sbr.rel (%p398) target = $region48
      $region47: #{basic_block_forward.5} parent=43 // pred_region
        %s401 = smul.u32 8, %s17
      $region48: #{basic_block_forward.5} parent=43 // pred_fallthru
        _
    $region44: #{basic_block_forward.5} parent=5 // pred_fallthru
      _
    %p402 = scmp.le.s32.totalorder 2, %s12
    // Predicated region
    $region49: #{basic_block_forward.5} parent=5 // pred_check
      %p403 = pneg %p402
    $region50: #{basic_block_forward.5} parent=5 // pred_check_branch
      %405 = sbr.rel (%p403) target = $region52
    $region51: #{basic_block_forward.5} parent=5 // pred_region
      %s406 = ssub.s32 %s12, 2
      // Predicated region
      $region53: #{basic_block_forward.5} parent=51 // pred_check
        %p407 = pneg %p177
      $region54: #{basic_block_forward.5} parent=51 // pred_check_branch
        %409 = sbr.rel (%p407) target = $region56
      $region55: #{basic_block_forward.5} parent=51 // pred_region
        %s410 = smul.u32 8, %s18
        %p411 = scmp.lt.s32.totalorder %s410, 15
        %s412 = scalar_select %p411, %s410, 15
        %s413 = smul.addr %s412, 8
        %s414 = scalar_lea.vmem %s6, %s413
      $region56: #{basic_block_forward.5} parent=51 // pred_fallthru
        _
    $region52: #{basic_block_forward.5} parent=5 // pred_fallthru
      _
  $region6: #{basic_block_forward.5} parent=0 // loop_footer
    %s16 = sadd.s32 1, %s12
  $region7: #{basic_block_forward.5} parent=0 // loop_footer_branch
    %11 = sbr.rel target = $region3
  $region8: #{basic_block_forward.5} parent=0 // loop_exit
    _

// kernel: basic_block_forward.4
$region0: #{basic_block_forward.4}
  #allocation0 [shape = 'u32[]', space=smem, size = 0x4, offset = 0x4, fixed_abs, tag = 'smem constant byte address 0x4 - core index']
  #allocation1 [shape = 'u32[144,128]{1,0:T(1,128)}', space=vmem, size = 0x12000, scoped, tag = 'internal scratch']
  #allocation2 [shape = 'bf16[10,10,128]{2,1,0:T(8,128)(2,1)}', space=vmem, size = 0xa000, scoped, tag = 'scratch operand']
  #allocation3 [shape = 'f32[64,128]{1,0:T(8,128)}', space=vmem, size = 0x8000, scoped, tag = 'scratch operand']
  %s0 = inlined_call_operand.vmem [shape: bf16[2,8,8,128], index: 0, kind: input, shape index: {}]
  %s1 = inlined_call_operand.vmem [shape: f32[1,128], index: 1, kind: input, shape index: {}]
  %s2 = inlined_call_operand.vmem [shape: f32[1,128], index: 2, kind: input, shape index: {}]
  %s3 = inlined_call_operand.vmem [shape: bf16[9,128,128], index: 3, kind: input, shape index: {}]
  %s4 = inlined_call_operand.vmem [shape: bf16[2,8,8,128], index: 4, kind: input, shape index: {}]
  %s5 = inlined_call_operand.vmem [shape: bf16[128,128], index: 5, kind: input, shape index: {}]
  %s6 = inlined_call_operand.vmem [shape: bf16[2,8,8,128], index: 6, kind: output, shape index: {0}]
  %s7 = inlined_call_operand.vmem [shape: bf16[2,8,8,128], index: 7, kind: output, shape index: {1}]
  %s8 = inlined_call_operand.vmem [shape: f32[16,128], index: 8, kind: output, shape index: {2}]
  %s9 = inlined_call_operand.vmem [shape: f32[16,128], index: 9, kind: output, shape index: {3}]
  %10 = xla_tuple %s6, %s7, %s8, %s9
  %s11 = sld [smem:[#allocation0]]
  $region81: #{basic_block_forward.4} parent=0
    _
  %s13 = ssub.s32 1, %s11
  %s14 = scalar_select 0, %s13, %s11
  loop: start=0, step=1, limit=4
  $region2: #{basic_block_forward.4} parent=0 // loop_pre_header
    _
  $region3: #{basic_block_forward.4} parent=0 // loop_header
    %s16 = sphi 0, %s20
    %p17 = scmp.ge.s32.totalorder %s16, 4
    %s26 = sphi 0, %s28
    %s29 = sphi 0, %s26
    %s30 = sphi 0, %s29
    %s46 = sphi 0, %s30
    %s50 = sphi 0, %s50
    %s52 = sphi 0, %s50
    %s53 = sphi 0, %s52
    %s67 = sphi 0, %s53
    %s71 = sphi 0, %s71
    %s73 = sphi 0, %s71
    %s74 = sphi 0, %s73
    %s88 = sphi 0, %s74
    %s92 = sphi 0, %s92
    %s94 = sphi 0, %s92
    %s95 = sphi 0, %s94
    %s109 = sphi 0, %s95
    %s115 = sphi 0, %s117
    %s118 = sphi 0, %s115
    %s119 = sphi 0, %s118
    %s135 = sphi 0, %s119
    %s139 = sphi 0, %s139
    %s141 = sphi 0, %s139
    %s142 = sphi 0, %s141
    %s156 = sphi 0, %s142
    %s162 = sphi 0, %s164
    %s165 = sphi 0, %s162
    %s166 = sphi 0, %s165
    %s182 = sphi 0, %s166
    %s188 = sphi 0, %s190
    %s191 = sphi 0, %s188
    %s192 = sphi 0, %s191
    %s208 = sphi 0, %s192
    %s214 = sphi 0, %s216
    %s217 = sphi 0, %s214
    %s218 = sphi 0, %s217
    %s234 = sphi 0, %s218
    %s240 = sphi 0, %s242
    %s243 = sphi 0, %s240
    %s244 = sphi 0, %s243
    %s260 = sphi 0, %s244
  $region4: #{basic_block_forward.4} parent=0 // loop_header_branch
    %19 = sbr.rel (%p17) target = $region8
  $region5: #{basic_block_forward.4} parent=0 // loop_body
    %s21 = ssub.s32 %s16, 1
    %s22 = ssub.s32 %s16, 2
    %s23 = sadd.s32 %s16, 1
    %s24 = ssub.s32 %s16, %s23
    %p25 = scmp.eq.s32.totalorder %s24, 0
    %s27 = sadd.s32 %s26, 1
    %s28 = scalar_select %p25, %s26, %s27
    %p31 = pneg %p25
    %p32 = scmp.eq.s32.totalorder %s16, 1
    %p33 = por %p31, %p32
    %p34 = scmp.ne.s32.totalorder %s26, %s29
    %p35 = scmp.eq.s32.totalorder %s16, 0
    %p36 = por %p34, %p35
    %p37 = scmp.ne.s32.totalorder %s26, %s29
    %p38 = scmp.eq.s32.totalorder %s21, 1
    %p39 = por %p37, %p38
    %p40 = scmp.ne.s32.totalorder %s29, %s30
    %p41 = scmp.eq.s32.totalorder %s21, 0
    %p42 = por %p40, %p41
    %p43 = scmp.ne.s32.totalorder %s29, %s30
    %p44 = scmp.eq.s32.totalorder %s22, 1
    %p45 = por %p43, %p44
    %p47 = scmp.ne.s32.totalorder %s30, %s46
    %p48 = scmp.eq.s32.totalorder %s22, 0
    %p49 = por %p47, %p48
    %s51 = sadd.s32 %s50, 1
    %p54 = scmp.eq.s32.totalorder %s16, 1
    %p55 = scmp.ne.s32.totalorder %s50, %s52
    %p56 = scmp.eq.s32.totalorder %s16, 0
    %p57 = por %p55, %p56
    %p58 = scmp.ne.s32.totalorder %s50, %s52
    %p59 = scmp.eq.s32.totalorder %s21, 1
    %p60 = por %p58, %p59
    %p61 = scmp.ne.s32.totalorder %s52, %s53
    %p62 = scmp.eq.s32.totalorder %s21, 0
    %p63 = por %p61, %p62
    %p64 = scmp.ne.s32.totalorder %s52, %s53
    %p65 = scmp.eq.s32.totalorder %s22, 1
    %p66 = por %p64, %p65
    %p68 = scmp.ne.s32.totalorder %s53, %s67
    %p69 = scmp.eq.s32.totalorder %s22, 0
    %p70 = por %p68, %p69
    %s72 = sadd.s32 %s71, 1
    %p75 = scmp.eq.s32.totalorder %s16, 1
    %p76 = scmp.ne.s32.totalorder %s71, %s73
    %p77 = scmp.eq.s32.totalorder %s16, 0
    %p78 = por %p76, %p77
    %p79 = scmp.ne.s32.totalorder %s71, %s73
    %p80 = scmp.eq.s32.totalorder %s21, 1
    %p81 = por %p79, %p80
    %p82 = scmp.ne.s32.totalorder %s73, %s74
    %p83 = scmp.eq.s32.totalorder %s21, 0
    %p84 = por %p82, %p83
    %p85 = scmp.ne.s32.totalorder %s73, %s74
    %p86 = scmp.eq.s32.totalorder %s22, 1
    %p87 = por %p85, %p86
    %p89 = scmp.ne.s32.totalorder %s74, %s88
    %p90 = scmp.eq.s32.totalorder %s22, 0
    %p91 = por %p89, %p90
    %s93 = sadd.s32 %s92, 1
    %p96 = scmp.eq.s32.totalorder %s16, 1
    %p97 = scmp.ne.s32.totalorder %s92, %s94
    %p98 = scmp.eq.s32.totalorder %s16, 0
    %p99 = por %p97, %p98
    %p100 = scmp.ne.s32.totalorder %s92, %s94
    %p101 = scmp.eq.s32.totalorder %s21, 1
    %p102 = por %p100, %p101
    %p103 = scmp.ne.s32.totalorder %s94, %s95
    %p104 = scmp.eq.s32.totalorder %s21, 0
    %p105 = por %p103, %p104
    %p106 = scmp.ne.s32.totalorder %s94, %s95
    %p107 = scmp.eq.s32.totalorder %s22, 1
    %p108 = por %p106, %p107
    %p110 = scmp.ne.s32.totalorder %s95, %s109
    %p111 = scmp.eq.s32.totalorder %s22, 0
    %p112 = por %p110, %p111
    %s113 = ssub.s32 %s16, %s23
    %p114 = scmp.eq.s32.totalorder %s113, 0
    %s116 = sadd.s32 %s115, 1
    %s117 = scalar_select %p114, %s115, %s116
    %p120 = pneg %p114
    %p121 = scmp.eq.s32.totalorder %s16, 1
    %p122 = por %p120, %p121
    %p123 = scmp.ne.s32.totalorder %s115, %s118
    %p124 = scmp.eq.s32.totalorder %s16, 0
    %p125 = por %p123, %p124
    %p126 = scmp.ne.s32.totalorder %s115, %s118
    %p127 = scmp.eq.s32.totalorder %s21, 1
    %p128 = por %p126, %p127
    %p129 = scmp.ne.s32.totalorder %s118, %s119
    %p130 = scmp.eq.s32.totalorder %s21, 0
    %p131 = por %p129, %p130
    %p132 = scmp.ne.s32.totalorder %s118, %s119
    %p133 = scmp.eq.s32.totalorder %s22, 1
    %p134 = por %p132, %p133
    %p136 = scmp.ne.s32.totalorder %s119, %s135
    %p137 = scmp.eq.s32.totalorder %s22, 0
    %p138 = por %p136, %p137
    %s140 = sadd.s32 %s139, 1
    %p143 = scmp.eq.s32.totalorder %s16, 1
    %p144 = scmp.ne.s32.totalorder %s139, %s141
    %p145 = scmp.eq.s32.totalorder %s16, 0
    %p146 = por %p144, %p145
    %p147 = scmp.ne.s32.totalorder %s139, %s141
    %p148 = scmp.eq.s32.totalorder %s21, 1
    %p149 = por %p147, %p148
    %p150 = scmp.ne.s32.totalorder %s141, %s142
    %p151 = scmp.eq.s32.totalorder %s21, 0
    %p152 = por %p150, %p151
    %p153 = scmp.ne.s32.totalorder %s141, %s142
    %p154 = scmp.eq.s32.totalorder %s22, 1
    %p155 = por %p153, %p154
    %p157 = scmp.ne.s32.totalorder %s142, %s156
    %p158 = scmp.eq.s32.totalorder %s22, 0
    %p159 = por %p157, %p158
    %s160 = ssub.s32 %s16, %s23
    %p161 = scmp.eq.s32.totalorder %s160, 0
    %s163 = sadd.s32 %s162, 1
    %s164 = scalar_select %p161, %s162, %s163
    %p167 = pneg %p161
    %p168 = scmp.eq.s32.totalorder %s16, 1
    %p169 = por %p167, %p168
    %p170 = scmp.ne.s32.totalorder %s162, %s165
    %p171 = scmp.eq.s32.totalorder %s16, 0
    %p172 = por %p170, %p171
    %p173 = scmp.ne.s32.totalorder %s162, %s165
    %p174 = scmp.eq.s32.totalorder %s21, 1
    %p175 = por %p173, %p174
    %p176 = scmp.ne.s32.totalorder %s165, %s166
    %p177 = scmp.eq.s32.totalorder %s21, 0
    %p178 = por %p176, %p177
    %p179 = scmp.ne.s32.totalorder %s165, %s166
    %p180 = scmp.eq.s32.totalorder %s22, 1
    %p181 = por %p179, %p180
    %p183 = scmp.ne.s32.totalorder %s166, %s182
    %p184 = scmp.eq.s32.totalorder %s22, 0
    %p185 = por %p183, %p184
    %s186 = ssub.s32 %s16, %s23
    %p187 = scmp.eq.s32.totalorder %s186, 0
    %s189 = sadd.s32 %s188, 1
    %s190 = scalar_select %p187, %s188, %s189
    %p193 = pneg %p187
    %p194 = scmp.eq.s32.totalorder %s16, 1
    %p195 = por %p193, %p194
    %p196 = scmp.ne.s32.totalorder %s188, %s191
    %p197 = scmp.eq.s32.totalorder %s16, 0
    %p198 = por %p196, %p197
    %p199 = scmp.ne.s32.totalorder %s188, %s191
    %p200 = scmp.eq.s32.totalorder %s21, 1
    %p201 = por %p199, %p200
    %p202 = scmp.ne.s32.totalorder %s191, %s192
    %p203 = scmp.eq.s32.totalorder %s21, 0
    %p204 = por %p202, %p203
    %p205 = scmp.ne.s32.totalorder %s191, %s192
    %p206 = scmp.eq.s32.totalorder %s22, 1
    %p207 = por %p205, %p206
    %p209 = scmp.ne.s32.totalorder %s192, %s208
    %p210 = scmp.eq.s32.totalorder %s22, 0
    %p211 = por %p209, %p210
    %s212 = ssub.s32 %s16, %s23
    %p213 = scmp.eq.s32.totalorder %s212, 0
    %s215 = sadd.s32 %s214, 1
    %s216 = scalar_select %p213, %s214, %s215
    %p219 = pneg %p213
    %p220 = scmp.eq.s32.totalorder %s16, 1
    %p221 = por %p219, %p220
    %p222 = scmp.ne.s32.totalorder %s214, %s217
    %p223 = scmp.eq.s32.totalorder %s16, 0
    %p224 = por %p222, %p223
    %p225 = scmp.ne.s32.totalorder %s214, %s217
    %p226 = scmp.eq.s32.totalorder %s21, 1
    %p227 = por %p225, %p226
    %p228 = scmp.ne.s32.totalorder %s217, %s218
    %p229 = scmp.eq.s32.totalorder %s21, 0
    %p230 = por %p228, %p229
    %p231 = scmp.ne.s32.totalorder %s217, %s218
    %p232 = scmp.eq.s32.totalorder %s22, 1
    %p233 = por %p231, %p232
    %p235 = scmp.ne.s32.totalorder %s218, %s234
    %p236 = scmp.eq.s32.totalorder %s22, 0
    %p237 = por %p235, %p236
    %s238 = ssub.s32 %s16, %s23
    %p239 = scmp.eq.s32.totalorder %s238, 0
    %s241 = sadd.s32 %s240, 1
    %s242 = scalar_select %p239, %s240, %s241
    %p245 = pneg %p239
    %p246 = scmp.eq.s32.totalorder %s16, 1
    %p247 = por %p245, %p246
    %p248 = scmp.ne.s32.totalorder %s240, %s243
    %p249 = scmp.eq.s32.totalorder %s16, 0
    %p250 = por %p248, %p249
    %p251 = scmp.ne.s32.totalorder %s240, %s243
    %p252 = scmp.eq.s32.totalorder %s21, 1
    %p253 = por %p251, %p252
    %p254 = scmp.ne.s32.totalorder %s243, %s244
    %p255 = scmp.eq.s32.totalorder %s21, 0
    %p256 = por %p254, %p255
    %p257 = scmp.ne.s32.totalorder %s243, %s244
    %p258 = scmp.eq.s32.totalorder %s22, 1
    %p259 = por %p257, %p258
    %p261 = scmp.ne.s32.totalorder %s244, %s260
    %p262 = scmp.eq.s32.totalorder %s22, 0
    %p263 = por %p261, %p262
    %p264 = scmp.le.s32.totalorder 1, %s16
    %p265 = scmp.lt.s32.totalorder %s16, 3
    %p266 = pnand %p264, %p265
    %p267 = pneg %p266
    // Predicated region
    $region9: #{basic_block_forward.4} parent=5 // pred_check
      _
    $region10: #{basic_block_forward.4} parent=5 // pred_check_branch
      %269 = sbr.rel (%p266) target = $region12
    $region11: #{basic_block_forward.4} parent=5 // pred_region
      %s270 = ssub.s32 %s16, 1
      // Predicated region
      $region13: #{basic_block_forward.4} parent=11 // pred_check
        %p271 = pneg %p63
      $region14: #{basic_block_forward.4} parent=11 // pred_check_branch
        %273 = sbr.rel (%p271) target = $region16
      $region15: #{basic_block_forward.4} parent=11 // pred_region
        _
      $region16: #{basic_block_forward.4} parent=11 // pred_fallthru
        _
      // Predicated region
      $region17: #{basic_block_forward.4} parent=11 // pred_check
        %p274 = pneg %p84
      $region18: #{basic_block_forward.4} parent=11 // pred_check_branch
        %276 = sbr.rel (%p274) target = $region20
      $region19: #{basic_block_forward.4} parent=11 // pred_region
        _
      $region20: #{basic_block_forward.4} parent=11 // pred_fallthru
        _
      // Predicated region
      $region21: #{basic_block_forward.4} parent=11 // pred_check
        %p277 = pneg %p105
      $region22: #{basic_block_forward.4} parent=11 // pred_check_branch
        %279 = sbr.rel (%p277) target = $region24
      $region23: #{basic_block_forward.4} parent=11 // pred_region
        _
      $region24: #{basic_block_forward.4} parent=11 // pred_fallthru
        _
      // Predicated region
      $region25: #{basic_block_forward.4} parent=11 // pred_check
        %p280 = pneg %p152
      $region26: #{basic_block_forward.4} parent=11 // pred_check_branch
        %282 = sbr.rel (%p280) target = $region28
      $region27: #{basic_block_forward.4} parent=11 // pred_region
        _
      $region28: #{basic_block_forward.4} parent=11 // pred_fallthru
        _
    $region12: #{basic_block_forward.4} parent=5 // pred_fallthru
      _
    %p283 = scmp.lt.s32.totalorder %s16, 2
    // Predicated region
    $region29: #{basic_block_forward.4} parent=5 // pred_check
      %p284 = pneg %p283
    $region30: #{basic_block_forward.4} parent=5 // pred_check_branch
      %286 = sbr.rel (%p284) target = $region32
    $region31: #{basic_block_forward.4} parent=5 // pred_region
      // Predicated region
      $region33: #{basic_block_forward.4} parent=31 // pred_check
        %p287 = pneg %p36
      $region34: #{basic_block_forward.4} parent=31 // pred_check_branch
        %289 = sbr.rel (%p287) target = $region36
      $region35: #{basic_block_forward.4} parent=31 // pred_region
        %p290 = scmp.lt.s32.totalorder %s16, 1
        %s291 = scalar_select %p290, %s16, 1
        %s292 = smul.addr %s291, 8
        %s293 = smul.addr %s292, 4
        %s294 = scalar_lea.vmem %s0, %s293
      $region36: #{basic_block_forward.4} parent=31 // pred_fallthru
        _
      // Predicated region
      $region37: #{basic_block_forward.4} parent=31 // pred_check
        %p295 = pneg %p125
      $region38: #{basic_block_forward.4} parent=31 // pred_check_branch
        %297 = sbr.rel (%p295) target = $region40
      $region39: #{basic_block_forward.4} parent=31 // pred_region
        %p298 = scmp.lt.s32.totalorder %s16, 1
        %s299 = scalar_select %p298, %s16, 1
        %s300 = smul.addr %s299, 8
        %s301 = smul.addr %s300, 4
        %s302 = scalar_lea.vmem %s4, %s301
      $region40: #{basic_block_forward.4} parent=31 // pred_fallthru
        _
    $region32: #{basic_block_forward.4} parent=5 // pred_fallthru
      _
    %p303 = scmp.le.s32.totalorder 1, %s16
    %p304 = scmp.lt.s32.totalorder %s16, 3
    %p305 = pnand %p303, %p304
    %p306 = pneg %p305
    // Predicated region
    $region41: #{basic_block_forward.4} parent=5 // pred_check
      _
    $region42: #{basic_block_forward.4} parent=5 // pred_check_branch
      %308 = sbr.rel (%p305) target = $region44
    $region43: #{basic_block_forward.4} parent=5 // pred_region
      %s309 = ssub.s32 %s16, 1
      %p310 = scmp.lt.s32.totalorder %s21, 1
      %s311 = scalar_select %p310, %s21, 1
      %s312 = smul.addr %s311, 8
      %s313 = smul.addr %s312, 4
      %s314 = scalar_lea.vmem %s0, %s313
      %p315 = pneg %p42
      %p316 = pneg %p39
      %p317 = pneg %p63
      %p318 = pneg %p60
      %p319 = pneg %p84
      %p320 = pneg %p81
      %p321 = pneg %p105
      %p322 = pneg %p102
      %p323 = scmp.lt.s32.totalorder %s21, 1
      %s324 = scalar_select %p323, %s21, 1
      %s325 = smul.addr %s324, 8
      %s326 = smul.addr %s325, 4
      %s327 = scalar_lea.vmem %s4, %s326
      %p328 = pneg %p131
      %p329 = pneg %p128
      %p330 = pneg %p152
      %p331 = pneg %p149
      %p332 = pneg %p178
      %p333 = pneg %p175
      %p334 = scmp.lt.s32.totalorder %s21, 1
      %s335 = scalar_select %p334, %s21, 1
      %s336 = smul.addr %s335, 8
      %s337 = smul.addr %s336, 4
      %s338 = scalar_lea.vmem %s6, %s337
      %p339 = pneg %p204
      %p340 = pneg %p201
      %p341 = scmp.lt.s32.totalorder %s21, 1
      %s342 = scalar_select %p341, %s21, 1
      %s343 = smul.addr %s342, 8
      %s344 = smul.addr %s343, 4
      %s345 = scalar_lea.vmem %s7, %s344
      %p346 = pneg %p230
      %p347 = pneg %p227
      %p348 = scmp.lt.s32.totalorder %s21, 1
      %s349 = scalar_select %p348, %s21, 1
      %s350 = smul.addr %s349, 8
      %s351 = scalar_lea.vmem %s8, %s350
      %p352 = pneg %p256
      %p353 = pneg %p253
      %p354 = scmp.lt.s32.totalorder %s21, 1
      %s355 = scalar_select %p354, %s21, 1
      %s356 = smul.addr %s355, 8
      %s357 = scalar_lea.vmem %s9, %s356
      %p358 = scmp.lt.s32.totalorder %s21, 1
      %s359 = scalar_select %p358, %s21, 1
      %s360 = smul.addr %s359, 8
      %s361 = smul.addr %s360, 4
      %s362 = scalar_lea.vmem %s0, %s361
      %p363 = scmp.lt.s32.totalorder %s21, 1
      %s364 = scalar_select %p363, %s21, 1
      %s365 = smul.addr %s364, 8
      %s366 = smul.addr %s365, 4
      %s367 = scalar_lea.vmem %s4, %s366
      %p368 = scmp.lt.s32.totalorder %s21, 1
      %s369 = scalar_select %p368, %s21, 1
      %s370 = smul.addr %s369, 8
      %s371 = smul.addr %s370, 4
      %s372 = scalar_lea.vmem %s6, %s371
      %p373 = scmp.lt.s32.totalorder %s21, 1
      %s374 = scalar_select %p373, %s21, 1
      %s375 = smul.addr %s374, 8
      %s376 = smul.addr %s375, 4
      %s377 = scalar_lea.vmem %s7, %s376
      %p378 = scmp.lt.s32.totalorder %s21, 1
      %s379 = scalar_select %p378, %s21, 1
      %s380 = smul.addr %s379, 8
      %s381 = scalar_lea.vmem %s8, %s380
      %p382 = scmp.lt.s32.totalorder %s21, 1
      %s383 = scalar_select %p382, %s21, 1
      %s384 = smul.addr %s383, 8
      %s385 = scalar_lea.vmem %s9, %s384
      %v387 = vld [vmem:[%s362] sm:$0xf]
      %v388 = vld [vmem:[%s362 + $0x4] sm:$0xf]
      %v389 = vld [vmem:[%s362 + $0x8] sm:$0xf]
      %v390 = vld [vmem:[%s362 + $0xc] sm:$0xf]
      %v391 = vld [vmem:[%s362 + $0x10] sm:$0xf]
      %v392 = vld [vmem:[%s362 + $0x14] sm:$0xf]
      %v393 = vld [vmem:[%s362 + $0x18] sm:$0xf]
      %v394 = vld [vmem:[%s362 + $0x1c] sm:$0xf]
      %v395 = vunpack.c.l.bf16 %v387
      %v396 = vunpack.c.l.bf16 %v388
      %v397 = vunpack.c.l.bf16 %v389
      %v398 = vunpack.c.l.bf16 %v390
      %v399 = vunpack.c.l.bf16 %v391
      %v400 = vunpack.c.l.bf16 %v392
      %v401 = vunpack.c.l.bf16 %v393
      %v402 = vunpack.c.l.bf16 %v394
      %v403 = vld [vmem:[%s1] sm:$0x1]
      %v405 = vlaneseq
      %v406 = vshrl.u32 %v405, 7
      %v407 = vsub.s32 0, %v406
      %v408 = vrot.slane %v403, %v407
      %v410 = vmul.f32 %v395, %v408
      %v411 = vmul.f32 %v396, %v408
      %v412 = vmul.f32 %v397, %v408
      %v413 = vmul.f32 %v398, %v408
      %v414 = vmul.f32 %v399, %v408
      %v415 = vmul.f32 %v400, %v408
      %v416 = vmul.f32 %v401, %v408
      %v417 = vmul.f32 %v402, %v408
      %v418 = vld [vmem:[%s2] sm:$0x1]
      %v420 = vlaneseq
      %v421 = vshrl.u32 %v420, 7
      %v422 = vsub.s32 0, %v421
      %v423 = vrot.slane %v418, %v422
      %v425 = vadd.f32 %v410, %v423
      %v426 = vadd.f32 %v411, %v423
      %v427 = vadd.f32 %v412, %v423
      %v428 = vadd.f32 %v413, %v423
      %v429 = vadd.f32 %v414, %v423
      %v430 = vadd.f32 %v415, %v423
      %v431 = vadd.f32 %v416, %v423
      %v432 = vadd.f32 %v417, %v423
      %433 = vst [vmem:[#allocation2] sm:$0xf] 0
      %434 = vst [vmem:[#allocation2 + $0x4] sm:$0x1] 0
      %435 = vst [vmem:[#allocation2 + $0x8] sm:$0xf] 0
      %436 = vst [vmem:[#allocation2 + $0xc] sm:$0x1] 0
      %437 = vst [vmem:[#allocation2 + $0x10] sm:$0xf] 0
      %438 = vst [vmem:[#allocation2 + $0x14] sm:$0x1] 0
      %439 = vst [vmem:[#allocation2 + $0x18] sm:$0xf] 0
      %440 = vst [vmem:[#allocation2 + $0x1c] sm:$0x1] 0
      %441 = vst [vmem:[#allocation2 + $0x20] sm:$0xf] 0
      %442 = vst [vmem:[#allocation2 + $0x24] sm:$0x1] 0
      %443 = vst [vmem:[#allocation2 + $0x28] sm:$0xf] 0
      %444 = vst [vmem:[#allocation2 + $0x2c] sm:$0x1] 0
      %445 = vst [vmem:[#allocation2 + $0x30] sm:$0xf] 0
      %446 = vst [vmem:[#allocation2 + $0x34] sm:$0x1] 0
      %447 = vst [vmem:[#allocation2 + $0x38] sm:$0xf] 0
      %448 = vst [vmem:[#allocation2 + $0x3c] sm:$0x1] 0
      %449 = vst [vmem:[#allocation2 + $0x40] sm:$0xf] 0
      %450 = vst [vmem:[#allocation2 + $0x44] sm:$0x1] 0
      %451 = vst [vmem:[#allocation2 + $0x48] sm:$0xf] 0
      %452 = vst [vmem:[#allocation2 + $0x4c] sm:$0x1] 0
      %v453 = vmax.f32 %v425, 0.0
      %v454 = vmax.f32 %v426, 0.0
      %v455 = vmax.f32 %v427, 0.0
      %v456 = vmax.f32 %v428, 0.0
      %v457 = vmax.f32 %v429, 0.0
      %v458 = vmax.f32 %v430, 0.0
      %v459 = vmax.f32 %v431, 0.0
      %v460 = vmax.f32 %v432, 0.0
      %v461 = vpack.c.bf16 %v453, %v453
      %v462 = vpack.c.bf16 %v454, %v454
      %v463 = vpack.c.bf16 %v455, %v455
      %v464 = vpack.c.bf16 %v456, %v456
      %v465 = vpack.c.bf16 %v457, %v457
      %v466 = vpack.c.bf16 %v458, %v458
      %v467 = vpack.c.bf16 %v459, %v459
      %v468 = vpack.c.bf16 %v460, %v460
      %v477 = vunpack.c.l.b16 %v461
      %v478 = vunpack.c.l.b16 %v462
      %v479 = vunpack.c.l.b16 %v463
      %v480 = vunpack.c.l.b16 %v464
      %v481 = vunpack.c.l.b16 %v465
      %v482 = vunpack.c.l.b16 %v466
      %v483 = vunpack.c.l.b16 %v467
      %v484 = vunpack.c.l.b16 %v468
      %v485 = vpack.c.b16 %v477, %v477
      %v486 = vpack.c.b16 %v478, %v478
      %v487 = vpack.c.b16 %v479, %v479
      %v488 = vpack.c.b16 %v480, %v480
      %v489 = vpack.c.b16 %v481, %v481
      %v490 = vpack.c.b16 %v482, %v482
      %v491 = vpack.c.b16 %v483, %v483
      %v492 = vpack.c.b16 %v484, %v484
      %v494 = vshrl.u32 %v485, 16
      %v496 = vrot.slane %v494, 7
      %v497 = vshll.u32 %v485, 16
      %v499 = vor.u32 %v496, %v497
      %v500 = vrot.slane %v496, 4
      %v502 = vshrl.u32 %v486, 16
      %v504 = vrot.slane %v502, 7
      %v505 = vshll.u32 %v486, 16
      %v507 = vor.u32 %v504, %v505
      %v508 = vrot.slane %v504, 4
      %v510 = vshrl.u32 %v487, 16
      %v512 = vrot.slane %v510, 7
      %v513 = vshll.u32 %v487, 16
      %v515 = vor.u32 %v512, %v513
      %v516 = vrot.slane %v512, 4
      %v518 = vshrl.u32 %v488, 16
      %v520 = vrot.slane %v518, 7
      %v521 = vshll.u32 %v488, 16
      %v523 = vor.u32 %v520, %v521
      %v524 = vrot.slane %v520, 4
      %v526 = vshrl.u32 %v489, 16
      %v528 = vrot.slane %v526, 7
      %v529 = vshll.u32 %v489, 16
      %v531 = vor.u32 %v528, %v529
      %v532 = vrot.slane %v528, 4
      %v534 = vshrl.u32 %v490, 16
      %v536 = vrot.slane %v534, 7
      %v537 = vshll.u32 %v490, 16
      %v539 = vor.u32 %v536, %v537
      %v540 = vrot.slane %v536, 4
      %v542 = vshrl.u32 %v491, 16
      %v544 = vrot.slane %v542, 7
      %v545 = vshll.u32 %v491, 16
      %v547 = vor.u32 %v544, %v545
      %v548 = vrot.slane %v544, 4
      %v550 = vshrl.u32 %v492, 16
      %v552 = vrot.slane %v550, 7
      %v553 = vshll.u32 %v492, 16
      %v555 = vor.u32 %v552, %v553
      %v556 = vrot.slane %v552, 4
      %s573 = scalar_lea.vmem [#allocation2], 8
      %vm574 = vcmask 1043456
      %vm575 = vsmask.f32 7938
      %vm576 = vmand %vm574, %vm575
      %v577 = vld [vmem:[%s573] sm:$0xf]
      %v578 = vsel %vm576, %v499, %v577
      %579 = vst [vmem:[%s573] sm:$0xf] %v578
      %vm580 = vcmask 1040384
      %vm581 = vsmask.f32 256
      %vm582 = vmand %vm580, %vm581
      %v583 = vld [vmem:[%s573 + $0x4] sm:$0x1]
      %v584 = vsel %vm582, %v500, %v583
      %585 = vst [vmem:[%s573 + $0x4] sm:$0x1] %v584
      %v586 = vld [vmem:[%s573 + $0x8] sm:$0xf]
      %v587 = vsel %vm576, %v507, %v586
      %588 = vst [vmem:[%s573 + $0x8] sm:$0xf] %v587
      %v589 = vld [vmem:[%s573 + $0xc] sm:$0x1]
      %v590 = vsel %vm582, %v508, %v589
      %591 = vst [vmem:[%s573 + $0xc] sm:$0x1] %v590
      %v592 = vld [vmem:[%s573 + $0x10] sm:$0xf]
      %v593 = vsel %vm576, %v515, %v592
      %594 = vst [vmem:[%s573 + $0x10] sm:$0xf] %v593
      %v595 = vld [vmem:[%s573 + $0x14] sm:$0x1]
      %v596 = vsel %vm582, %v516, %v595
      %597 = vst [vmem:[%s573 + $0x14] sm:$0x1] %v596
      %v598 = vld [vmem:[%s573 + $0x18] sm:$0xf]
      %v599 = vsel %vm576, %v523, %v598
      %600 = vst [vmem:[%s573 + $0x18] sm:$0xf] %v599
      %v601 = vld [vmem:[%s573 + $0x1c] sm:$0x1]
      %v602 = vsel %vm582, %v524, %v601
      %603 = vst [vmem:[%s573 + $0x1c] sm:$0x1] %v602
      %v604 = vld [vmem:[%s573 + $0x20] sm:$0xf]
      %v605 = vsel %vm576, %v531, %v604
      %606 = vst [vmem:[%s573 + $0x20] sm:$0xf] %v605
      %v607 = vld [vmem:[%s573 + $0x24] sm:$0x1]
      %v608 = vsel %vm582, %v532, %v607
      %609 = vst [vmem:[%s573 + $0x24] sm:$0x1] %v608
      %v610 = vld [vmem:[%s573 + $0x28] sm:$0xf]
      %v611 = vsel %vm576, %v539, %v610
      %612 = vst [vmem:[%s573 + $0x28] sm:$0xf] %v611
      %v613 = vld [vmem:[%s573 + $0x2c] sm:$0x1]
      %v614 = vsel %vm582, %v540, %v613
      %615 = vst [vmem:[%s573 + $0x2c] sm:$0x1] %v614
      %v616 = vld [vmem:[%s573 + $0x30] sm:$0xf]
      %v617 = vsel %vm576, %v547, %v616
      %618 = vst [vmem:[%s573 + $0x30] sm:$0xf] %v617
      %v619 = vld [vmem:[%s573 + $0x34] sm:$0x1]
      %v620 = vsel %vm582, %v548, %v619
      %621 = vst [vmem:[%s573 + $0x34] sm:$0x1] %v620
      %v622 = vld [vmem:[%s573 + $0x38] sm:$0xf]
      %v623 = vsel %vm576, %v555, %v622
      %624 = vst [vmem:[%s573 + $0x38] sm:$0xf] %v623
      %v625 = vld [vmem:[%s573 + $0x3c] sm:$0x1]
      %v626 = vsel %vm582, %v556, %v625
      %627 = vst [vmem:[%s573 + $0x3c] sm:$0x1] %v626
      %628 = vst [vmem:[#allocation3] sm:$0xff] 0.0
      %629 = vst [vmem:[#allocation3 + $0x8] sm:$0xff] 0.0
      %630 = vst [vmem:[#allocation3 + $0x10] sm:$0xff] 0.0
      %631 = vst [vmem:[#allocation3 + $0x18] sm:$0xff] 0.0
      %632 = vst [vmem:[#allocation3 + $0x20] sm:$0xff] 0.0
      %633 = vst [vmem:[#allocation3 + $0x28] sm:$0xff] 0.0
      %634 = vst [vmem:[#allocation3 + $0x30] sm:$0xff] 0.0
      %635 = vst [vmem:[#allocation3 + $0x38] sm:$0xff] 0.0
      %v636 = vld [vmem:[#allocation2] sm:$0xf]
      %v637 = vld [vmem:[#allocation2 + $0x8] sm:$0xf]
      %v638 = vld [vmem:[#allocation2 + $0x10] sm:$0xf]
      %v639 = vld [vmem:[#allocation2 + $0x18] sm:$0xf]
      %v640 = vld [vmem:[#allocation2 + $0x20] sm:$0xf]
      %v641 = vld [vmem:[#allocation2 + $0x28] sm:$0xf]
      %v642 = vld [vmem:[#allocation2 + $0x30] sm:$0xf]
      %v643 = vld [vmem:[#allocation2 + $0x38] sm:$0xf]
      %v644 = vld [vmem:[#allocation3] sm:$0xff]
      %v645 = vld [vmem:[#allocation3 + $0x8] sm:$0xff]
      %v646 = vld [vmem:[#allocation3 + $0x10] sm:$0xff]
      %v647 = vld [vmem:[#allocation3 + $0x18] sm:$0xff]
      %v648 = vld [vmem:[#allocation3 + $0x20] sm:$0xff]
      %v649 = vld [vmem:[#allocation3 + $0x28] sm:$0xff]
      %v650 = vld [vmem:[#allocation3 + $0x30] sm:$0xff]
      %v651 = vld [vmem:[#allocation3 + $0x38] sm:$0xff]
      %v652 = vld [vmem:[%s3] sm:$0xf]
      %v653 = vld [vmem:[%s3 + $0x4] sm:$0xf]
      %v654 = vld [vmem:[%s3 + $0x8] sm:$0xf]
      %v655 = vld [vmem:[%s3 + $0xc] sm:$0xf]
      %v656 = vld [vmem:[%s3 + $0x10] sm:$0xf]
      %v657 = vld [vmem:[%s3 + $0x14] sm:$0xf]
      %v658 = vld [vmem:[%s3 + $0x18] sm:$0xf]
      %v659 = vld [vmem:[%s3 + $0x1c] sm:$0xf]
      %v660 = vld [vmem:[%s3 + $0x20] sm:$0xf]
      %v661 = vld [vmem:[%s3 + $0x24] sm:$0xf]
      %v662 = vld [vmem:[%s3 + $0x28] sm:$0xf]
      %v663 = vld [vmem:[%s3 + $0x2c] sm:$0xf]
      %v664 = vld [vmem:[%s3 + $0x30] sm:$0xf]
      %v665 = vld [vmem:[%s3 + $0x34] sm:$0xf]
      %v666 = vld [vmem:[%s3 + $0x38] sm:$0xf]
      %v667 = vld [vmem:[%s3 + $0x3c] sm:$0xf]
      %v676 = vunpack.c.l.b16 %v636
      %v677 = vunpack.c.l.b16 %v637
      %v678 = vunpack.c.l.b16 %v638
      %v679 = vunpack.c.l.b16 %v639
      %v680 = vunpack.c.l.b16 %v640
      %v681 = vunpack.c.l.b16 %v641
      %v682 = vunpack.c.l.b16 %v642
      %v683 = vunpack.c.l.b16 %v643
      %v684 = vpack.c.b16 %v677, %v676
      %v685 = vpack.c.b16 %v679, %v678
      %v686 = vpack.c.b16 %v681, %v680
      %v687 = vpack.c.b16 %v683, %v682
      %v708 = vunpack.c.l.b16 %v652
      %v709 = vunpack.c.l.b16 %v653
      %v710 = vunpack.c.l.b16 %v654
      %v711 = vunpack.c.l.b16 %v655
      %v712 = vunpack.c.l.b16 %v656
      %v713 = vunpack.c.l.b16 %v657
      %v714 = vunpack.c.l.b16 %v658
      %v715 = vunpack.c.l.b16 %v659
      %v716 = vunpack.c.l.b16 %v660
      %v717 = vunpack.c.l.b16 %v661
      %v718 = vunpack.c.l.b16 %v662
      %v719 = vunpack.c.l.b16 %v663
      %v720 = vunpack.c.l.b16 %v664
      %v721 = vunpack.c.l.b16 %v665
      %v722 = vunpack.c.l.b16 %v666
      %v723 = vunpack.c.l.b16 %v667
      %v724 = vpack.c.b16 %v709, %v708
      %v725 = vpack.c.b16 %v711, %v710
      %v726 = vpack.c.b16 %v713, %v712
      %v727 = vpack.c.b16 %v715, %v714
      %v728 = vpack.c.b16 %v717, %v716
      %v729 = vpack.c.b16 %v719, %v718
      %v730 = vpack.c.b16 %v721, %v720
      %v731 = vpack.c.b16 %v723, %v722
      %740 = vmatprep.subr.bf16.mxu0 0
      %741 = vmatpush1.bf16.msra.mxu0 %v724
      %742 = vmatprep.subr.bf16.mxu0 0
      %743 = vmatpush1.bf16.msra.mxu0 %v725
      %744 = vmatprep.subr.bf16.mxu0 0
      %745 = vmatpush1.bf16.msra.mxu0 %v726
      %746 = vmatprep.subr.bf16.mxu0 0
      %747 = vmatpush1.bf16.msra.mxu0 %v727
      %748 = vmatprep.subr.bf16.mxu0 0
      %749 = vmatpush1.bf16.msra.mxu0 %v728
      %750 = vmatprep.subr.bf16.mxu0 0
      %751 = vmatpush1.bf16.msra.mxu0 %v729
      %752 = vmatprep.subr.bf16.mxu0 0
      %753 = vmatpush1.bf16.msra.mxu0 %v730
      %754 = vmatprep.subr.bf16.mxu0 0
      %755 = vmatpush1.bf16.msra.mxu0 %v731
      %756 = vmatprep.subr.bf16.mxu0 0
      %757 = vmatpush1.bf16.msra.mxu0 0
      %758 = vmatprep.subr.bf16.mxu0 0
      %759 = vmatpush1.bf16.msra.mxu0 0
      %760 = vmatprep.subr.bf16.mxu0 0
      %761 = vmatpush1.bf16.msra.mxu0 0
      %762 = vmatprep.subr.bf16.mxu0 0
      %763 = vmatpush1.bf16.msra.mxu0 0
      %764 = vmatprep.subr.bf16.mxu0 0
      %765 = vmatpush1.bf16.msra.mxu0 0
      %766 = vmatprep.subr.bf16.mxu0 0
      %767 = vmatpush1.bf16.msra.mxu0 0
      %768 = vmatprep.subr.bf16.mxu0 0
      %769 = vmatpush1.bf16.msra.mxu0 0
      %770 = vmatprep.subr.bf16.mxu0 0
      %771 = vmatpush1.bf16.msra.mxu0 0
      %772 = vmatprep.mubr.bf16.mxu0 0
      %773 = vmatmul.mubr.bf16.gmra.mrb[0].mxu0 %v684
      %v774 = vpop.f32.mrb[0].mxu0
      %v775 = vadd.f32 0.0, %v774
      %v776 = vpop.f32.mrb[0].mxu0
      %v777 = vpop.f32.mrb[0].mxu0
      %v778 = vadd.f32 0.0, %v777
      %v779 = vpop.f32.mrb[0].mxu0
      %780 = vmatprep.mubr.bf16.mxu0 0
      %781 = vmatmul.mubr.bf16.gmra.mrb[0].mxu0 %v685
      %v782 = vpop.f32.mrb[0].mxu0
      %v783 = vadd.f32 0.0, %v782
      %v784 = vpop.f32.mrb[0].mxu0
      %v785 = vpop.f32.mrb[0].mxu0
      %v786 = vadd.f32 0.0, %v785
      %v787 = vpop.f32.mrb[0].mxu0
      %788 = vmatprep.mubr.bf16.mxu0 0
      %789 = vmatmul.mubr.bf16.gmra.mrb[0].mxu0 %v686
      %v790 = vpop.f32.mrb[0].mxu0
      %v791 = vadd.f32 0.0, %v790
      %v792 = vpop.f32.mrb[0].mxu0
      %v793 = vpop.f32.mrb[0].mxu0
      %v794 = vadd.f32 0.0, %v793
      %v795 = vpop.f32.mrb[0].mxu0
      %796 = vmatprep.mubr.bf16.mxu0 0
      %797 = vmatmul.mubr.bf16.gmra.mrb[0].mxu0 %v687
      %v798 = vpop.f32.mrb[0].mxu0
      %v799 = vadd.f32 0.0, %v798
      %v800 = vpop.f32.mrb[0].mxu0
      %v801 = vpop.f32.mrb[0].mxu0
      %v802 = vadd.f32 0.0, %v801
      %v803 = vpop.f32.mrb[0].mxu0
      %804 = vdwg.mxu0
      %v805 = vadd.f32 %v644, %v775
      %v806 = vadd.f32 %v645, %v778
      %v807 = vadd.f32 %v646, %v783
      %v808 = vadd.f32 %v647, %v786
      %v809 = vadd.f32 %v648, %v791
      %v810 = vadd.f32 %v649, %v794
      %v811 = vadd.f32 %v650, %v799
      %v812 = vadd.f32 %v651, %v802
      %813 = vst [vmem:[#allocation3] sm:$0xff] %v805
      %814 = vst [vmem:[#allocation3 + $0x8] sm:$0xff] %v806
      %815 = vst [vmem:[#allocation3 + $0x10] sm:$0xff] %v807
      %816 = vst [vmem:[#allocation3 + $0x18] sm:$0xff] %v808
      %817 = vst [vmem:[#allocation3 + $0x20] sm:$0xff] %v809
      %818 = vst [vmem:[#allocation3 + $0x28] sm:$0xff] %v810
      %819 = vst [vmem:[#allocation3 + $0x30] sm:$0xff] %v811
      %820 = vst [vmem:[#allocation3 + $0x38] sm:$0xff] %v812
      %v821 = vld [vmem:[#allocation2] sm:$0xf]
      %v822 = vld [vmem:[#allocation2 + $0x4] sm:$0x1]
      %v823 = vld [vmem:[#allocation2 + $0x8] sm:$0xf]
      %v824 = vld [vmem:[#allocation2 + $0xc] sm:$0x1]
      %v825 = vld [vmem:[#allocation2 + $0x10] sm:$0xf]
      %v826 = vld [vmem:[#allocation2 + $0x14] sm:$0x1]
      %v827 = vld [vmem:[#allocation2 + $0x18] sm:$0xf]
      %v828 = vld [vmem:[#allocation2 + $0x1c] sm:$0x1]
      %v829 = vld [vmem:[#allocation2 + $0x20] sm:$0xf]
      %v830 = vld [vmem:[#allocation2 + $0x24] sm:$0x1]
      %v831 = vld [vmem:[#allocation2 + $0x28] sm:$0xf]
      %v832 = vld [vmem:[#allocation2 + $0x2c] sm:$0x1]
      %v833 = vld [vmem:[#allocation2 + $0x30] sm:$0xf]
      %v834 = vld [vmem:[#allocation2 + $0x34] sm:$0x1]
      %v835 = vld [vmem:[#allocation2 + $0x38] sm:$0xf]
      %v836 = vld [vmem:[#allocation2 + $0x3c] sm:$0x1]
      %vm837 = vsmask.f32 3328
      %vm838 = vsmask.f32 7440
      %vm839 = vmor %vm837, %vm838
      %v841 = vshrl.u32 %v821, 16
      %v843 = vrot.slane %v841, 4
      %v844 = vshll.u32 %v821, 16
      %v846 = vrot.slane %v844, 5
      %v847 = vor.u32 %v843, %v846
      %v848 = vrot.slane %v847, 4
      %v850 = vshll.u32 %v822, 16
      %v852 = vrot.slane %v850, 5
      %v853 = vsel %vm839, %v848, %v852
      %v855 = vshrl.u32 %v823, 16
      %v857 = vrot.slane %v855, 4
      %v858 = vshll.u32 %v823, 16
      %v860 = vrot.slane %v858, 5
      %v861 = vor.u32 %v857, %v860
      %v862 = vrot.slane %v861, 4
      %v864 = vshll.u32 %v824, 16
      %v866 = vrot.slane %v864, 5
      %v867 = vsel %vm839, %v862, %v866
      %v869 = vshrl.u32 %v825, 16
      %v871 = vrot.slane %v869, 4
      %v872 = vshll.u32 %v825, 16
      %v874 = vrot.slane %v872, 5
      %v875 = vor.u32 %v871, %v874
      %v876 = vrot.slane %v875, 4
      %v878 = vshll.u32 %v826, 16
      %v880 = vrot.slane %v878, 5
      %v881 = vsel %vm839, %v876, %v880
      %v883 = vshrl.u32 %v827, 16
      %v885 = vrot.slane %v883, 4
      %v886 = vshll.u32 %v827, 16
      %v888 = vrot.slane %v886, 5
      %v889 = vor.u32 %v885, %v888
      %v890 = vrot.slane %v889, 4
      %v892 = vshll.u32 %v828, 16
      %v894 = vrot.slane %v892, 5
      %v895 = vsel %vm839, %v890, %v894
      %v897 = vshrl.u32 %v829, 16
      %v899 = vrot.slane %v897, 4
      %v900 = vshll.u32 %v829, 16
      %v902 = vrot.slane %v900, 5
      %v903 = vor.u32 %v899, %v902
      %v904 = vrot.slane %v903, 4
      %v906 = vshll.u32 %v830, 16
      %v908 = vrot.slane %v906, 5
      %v909 = vsel %vm839, %v904, %v908
      %v911 = vshrl.u32 %v831, 16
      %v913 = vrot.slane %v911, 4
      %v914 = vshll.u32 %v831, 16
      %v916 = vrot.slane %v914, 5
      %v917 = vor.u32 %v913, %v916
      %v918 = vrot.slane %v917, 4
      %v920 = vshll.u32 %v832, 16
      %v922 = vrot.slane %v920, 5
      %v923 = vsel %vm839, %v918, %v922
      %v925 = vshrl.u32 %v833, 16
      %v927 = vrot.slane %v925, 4
      %v928 = vshll.u32 %v833, 16
      %v930 = vrot.slane %v928, 5
      %v931 = vor.u32 %v927, %v930
      %v932 = vrot.slane %v931, 4
      %v934 = vshll.u32 %v834, 16
      %v936 = vrot.slane %v934, 5
      %v937 = vsel %vm839, %v932, %v936
      %v939 = vshrl.u32 %v835, 16
      %v941 = vrot.slane %v939, 4
      %v942 = vshll.u32 %v835, 16
      %v944 = vrot.slane %v942, 5
      %v945 = vor.u32 %v941, %v944
      %v946 = vrot.slane %v945, 4
      %v948 = vshll.u32 %v836, 16
      %v950 = vrot.slane %v948, 5
      %v951 = vsel %vm839, %v946, %v950
      %v952 = vld [vmem:[#allocation3] sm:$0xff]
      %v953 = vld [vmem:[#allocation3 + $0x8] sm:$0xff]
      %v954 = vld [vmem:[#allocation3 + $0x10] sm:$0xff]
      %v955 = vld [vmem:[#allocation3 + $0x18] sm:$0xff]
      %v956 = vld [vmem:[#allocation3 + $0x20] sm:$0xff]
      %v957 = vld [vmem:[#allocation3 + $0x28] sm:$0xff]
      %v958 = vld [vmem:[#allocation3 + $0x30] sm:$0xff]
      %v959 = vld [vmem:[#allocation3 + $0x38] sm:$0xff]
      %s960 = scalar_lea.vmem %s3, 64
      %v961 = vld [vmem:[%s960] sm:$0xf]
      %v962 = vld [vmem:[%s960 + $0x4] sm:$0xf]
      %v963 = vld [vmem:[%s960 + $0x8] sm:$0xf]
      %v964 = vld [vmem:[%s960 + $0xc] sm:$0xf]
      %v965 = vld [vmem:[%s960 + $0x10] sm:$0xf]
      %v966 = vld [vmem:[%s960 + $0x14] sm:$0xf]
      %v967 = vld [vmem:[%s960 + $0x18] sm:$0xf]
      %v968 = vld [vmem:[%s960 + $0x1c] sm:$0xf]
      %v969 = vld [vmem:[%s960 + $0x20] sm:$0xf]
      %v970 = vld [vmem:[%s960 + $0x24] sm:$0xf]
      %v971 = vld [vmem:[%s960 + $0x28] sm:$0xf]
      %v972 = vld [vmem:[%s960 + $0x2c] sm:$0xf]
      %v973 = vld [vmem:[%s960 + $0x30] sm:$0xf]
      %v974 = vld [vmem:[%s960 + $0x34] sm:$0xf]
      %v975 = vld [vmem:[%s960 + $0x38] sm:$0xf]
      %v976 = vld [vmem:[%s960 + $0x3c] sm:$0xf]
      %v977 = vunpack.c.l.b16 %v853
      %v978 = vunpack.c.l.b16 %v867
      %v979 = vunpack.c.l.b16 %v881
      %v980 = vunpack.c.l.b16 %v895
      %v981 = vunpack.c.l.b16 %v909
      %v982 = vunpack.c.l.b16 %v923
      %v983 = vunpack.c.l.b16 %v937
      %v984 = vunpack.c.l.b16 %v951
      %v985 = vpack.c.b16 %v978, %v977
      %v986 = vpack.c.b16 %v980, %v979
      %v987 = vpack.c.b16 %v982, %v981
      %v988 = vpack.c.b16 %v984, %v983
      %v1009 = vunpack.c.l.b16 %v961
      %v1010 = vunpack.c.l.b16 %v962
      %v1011 = vunpack.c.l.b16 %v963
      %v1012 = vunpack.c.l.b16 %v964
      %v1013 = vunpack.c.l.b16 %v965
      %v1014 = vunpack.c.l.b16 %v966
      %v1015 = vunpack.c.l.b16 %v967
      %v1016 = vunpack.c.l.b16 %v968
      %v1017 = vunpack.c.l.b16 %v969
      %v1018 = vunpack.c.l.b16 %v970
      %v1019 = vunpack.c.l.b16 %v971
      %v1020 = vunpack.c.l.b16 %v972
      %v1021 = vunpack.c.l.b16 %v973
      %v1022 = vunpack.c.l.b16 %v974
      %v1023 = vunpack.c.l.b16 %v975
      %v1024 = vunpack.c.l.b16 %v976
      %v1025 = vpack.c.b16 %v1010, %v1009
      %v1026 = vpack.c.b16 %v1012, %v1011
      %v1027 = vpack.c.b16 %v1014, %v1013
      %v1028 = vpack.c.b16 %v1016, %v1015
      %v1029 = vpack.c.b16 %v1018, %v1017
      %v1030 = vpack.c.b16 %v1020, %v1019
      %v1031 = vpack.c.b16 %v1022, %v1021
      %v1032 = vpack.c.b16 %v1024, %v1023
      %1041 = vmatprep.subr.bf16.mxu0 0
      %1042 = vmatpush1.bf16.msra.mxu0 %v1025
      %1043 = vmatprep.subr.bf16.mxu0 0
      %1044 = vmatpush1.bf16.msra.mxu0 %v1026
      %1045 = vmatprep.subr.bf16.mxu0 0
      %1046 = vmatpush1.bf16.msra.mxu0 %v1027
      %1047 = vmatprep.subr.bf16.mxu0 0
      %1048 = vmatpush1.bf16.msra.mxu0 %v1028
      %1049 = vmatprep.subr.bf16.mxu0 0
      %1050 = vmatpush1.bf16.msra.mxu0 %v1029
      %1051 = vmatprep.subr.bf16.mxu0 0
      %1052 = vmatpush1.bf16.msra.mxu0 %v1030
      %1053 = vmatprep.subr.bf16.mxu0 0
      %1054 = vmatpush1.bf16.msra.mxu0 %v1031
      %1055 = vmatprep.subr.bf16.mxu0 0
      %1056 = vmatpush1.bf16.msra.mxu0 %v1032
      %1057 = vmatprep.subr.bf16.mxu0 0
      %1058 = vmatpush1.bf16.msra.mxu0 0
      %1059 = vmatprep.subr.bf16.mxu0 0
      %1060 = vmatpush1.bf16.msra.mxu0 0
      %1061 = vmatprep.subr.bf16.mxu0 0
      %1062 = vmatpush1.bf16.msra.mxu0 0
      %1063 = vmatprep.subr.bf16.mxu0 0
      %1064 = vmatpush1.bf16.msra.mxu0 0
      %1065 = vmatprep.subr.bf16.mxu0 0
      %1066 = vmatpush1.bf16.msra.mxu0 0
      %1067 = vmatprep.subr.bf16.mxu0 0
      %1068 = vmatpush1.bf16.msra.mxu0 0
      %1069 = vmatprep.subr.bf16.mxu0 0
      %1070 = vmatpush1.bf16.msra.mxu0 0
      %1071 = vmatprep.subr.bf16.mxu0 0
      %1072 = vmatpush1.bf16.msra.mxu0 0
      %1073 = vmatprep.mubr.bf16.mxu0 0
      %1074 = vmatmul.mubr.bf16.gmra.mrb[0].mxu0 %v985
      %v1075 = vpop.f32.mrb[0].mxu0
      %v1076 = vadd.f32 0.0, %v1075
      %v1077 = vpop.f32.mrb[0].mxu0
      %v1078 = vpop.f32.mrb[0].mxu0
      %v1079 = vadd.f32 0.0, %v1078
      %v1080 = vpop.f32.mrb[0].mxu0
      %1081 = vmatprep.mubr.bf16.mxu0 0
      %1082 = vmatmul.mubr.bf16.gmra.mrb[0].mxu0 %v986
      %v1083 = vpop.f32.mrb[0].mxu0
      %v1084 = vadd.f32 0.0, %v1083
      %v1085 = vpop.f32.mrb[0].mxu0
      %v1086 = vpop.f32.mrb[0].mxu0
      %v1087 = vadd.f32 0.0, %v1086
      %v1088 = vpop.f32.mrb[0].mxu0
      %1089 = vmatprep.mubr.bf16.mxu0 0
      %1090 = vmatmul.mubr.bf16.gmra.mrb[0].mxu0 %v987
      %v1091 = vpop.f32.mrb[0].mxu0
      %v1092 = vadd.f32 0.0, %v1091
      %v1093 = vpop.f32.mrb[0].mxu0
      %v1094 = vpop.f32.mrb[0].mxu0
      %v1095 = vadd.f32 0.0, %v1094
      %v1096 = vpop.f32.mrb[0].mxu0
      %1097 = vmatprep.mubr.bf16.mxu0 0
      %1098 = vmatmul.mubr.bf16.gmra.mrb[0].mxu0 %v988
      %v1099 = vpop.f32.mrb[0].mxu0
      %v1100 = vadd.f32 0.0, %v1099
      %v1101 = vpop.f32.mrb[0].mxu0
      %v1102 = vpop.f32.mrb[0].mxu0
      %v1103 = vadd.f32 0.0, %v1102
      %v1104 = vpop.f32.mrb[0].mxu0
      %1105 = vdwg.mxu0
      %v1106 = vadd.f32 %v952, %v1076
      %v1107 = vadd.f32 %v953, %v1079
      %v1108 = vadd.f32 %v954, %v1084
      %v1109 = vadd.f32 %v955, %v1087
      %v1110 = vadd.f32 %v956, %v1092
      %v1111 = vadd.f32 %v957, %v1095
      %v1112 = vadd.f32 %v958, %v1100
      %v1113 = vadd.f32 %v959, %v1103
      %1114 = vst [vmem:[#allocation3] sm:$0xff] %v1106
      %1115 = vst [vmem:[#allocation3 + $0x8] sm:$0xff] %v1107
      %1116 = vst [vmem:[#allocation3 + $0x10] sm:$0xff] %v1108
      %1117 = vst [vmem:[#allocation3 + $0x18] sm:$0xff] %v1109
      %1118 = vst [vmem:[#allocation3 + $0x20] sm:$0xff] %v1110
      %1119 = vst [vmem:[#allocation3 + $0x28] sm:$0xff] %v1111
      %1120 = vst [vmem:[#allocation3 + $0x30] sm:$0xff] %v1112
      %1121 = vst [vmem:[#allocation3 + $0x38] sm:$0xff] %v1113
      %v1122 = vld [vmem:[#allocation2] sm:$0xe]
      %v1123 = vld [vmem:[#allocation2 + $0x4] sm:$0x1]
      %v1124 = vld [vmem:[#allocation2 + $0x8] sm:$0xe]
      %v1125 = vld [vmem:[#allocation2 + $0xc] sm:$0x1]
      %v1126 = vld [vmem:[#allocation2 + $0x10] sm:$0xe]
      %v1127 = vld [vmem:[#allocation2 + $0x14] sm:$0x1]
      %v1128 = vld [vmem:[#allocation2 + $0x18] sm:$0xe]
      %v1129 = vld [vmem:[#allocation2 + $0x1c] sm:$0x1]
      %v1130 = vld [vmem:[#allocation2 + $0x20] sm:$0xe]
      %v1131 = vld [vmem:[#allocation2 + $0x24] sm:$0x1]
      %v1132 = vld [vmem:[#allocation2 + $0x28] sm:$0xe]
      %v1133 = vld [vmem:[#allocation2 + $0x2c] sm:$0x1]
      %v1134 = vld [vmem:[#allocation2 + $0x30] sm:$0xe]
      %v1135 = vld [vmem:[#allocation2 + $0x34] sm:$0x1]
      %v1136 = vld [vmem:[#allocation2 + $0x38] sm:$0xe]
      %v1137 = vld [vmem:[#allocation2 + $0x3c] sm:$0x1]
      %vm1154 = vcmask 1042432
      %vm1155 = vcmask 1046532
      %vm1156 = vmor %vm1154, %vm1155
      %v1157 = vrot.slane %v1122, 5
      %v1158 = vrot.slane %v1157, 4
      %v1159 = vrot.slane %v1123, 5
      %v1160 = vsel %vm1156, %v1158, %v1159
      %v1161 = vrot.slane %v1124, 5
      %v1162 = vrot.slane %v1161, 4
      %v1163 = vrot.slane %v1125, 5
      %v1164 = vsel %vm1156, %v1162, %v1163
      %v1165 = vrot.slane %v1126, 5
      %v1166 = vrot.slane %v1165, 4
      %v1167 = vrot.slane %v1127, 5
      %v1168 = vsel %vm1156, %v1166, %v1167
      %v1169 = vrot.slane %v1128, 5
      %v1170 = vrot.slane %v1169, 4
      %v1171 = vrot.slane %v1129, 5
      %v1172 = vsel %vm1156, %v1170, %v1171
      %v1173 = vrot.slane %v1130, 5
      %v1174 = vrot.slane %v1173, 4
      %v1175 = vrot.slane %v1131, 5
      %v1176 = vsel %vm1156, %v1174, %v1175
      %v1177 = vrot.slane %v1132, 5
      %v1178 = vrot.slane %v1177, 4
      %v1179 = vrot.slane %v1133, 5
      %v1180 = vsel %vm1156, %v1178, %v1179
      %v1181 = vrot.slane %v1134, 5
      %v1182 = vrot.slane %v1181, 4
      %v1183 = vrot.slane %v1135, 5
      %v1184 = vsel %vm1156, %v1182, %v1183
      %v1185 = vrot.slane %v1136, 5
      %v1186 = vrot.slane %v1185, 4
      %v1187 = vrot.slane %v1137, 5
      %v1188 = vsel %vm1156, %v1186, %v1187
      %v1189 = vld [vmem:[#allocation3] sm:$0xff]
      %v1190 = vld [vmem:[#allocation3 + $0x8] sm:$0xff]
      %v1191 = vld [vmem:[#allocation3 + $0x10] sm:$0xff]
      %v1192 = vld [vmem:[#allocation3 + $0x18] sm:$0xff]
      %v1193 = vld [vmem:[#allocation3 + $0x20] sm:$0xff]
      %v1194 = vld [vmem:[#allocation3 + $0x28] sm:$0xff]
      %v1195 = vld [vmem:[#allocation3 + $0x30] sm:$0xff]
      %v1196 = vld [vmem:[#allocation3 + $0x38] sm:$0xff]
      %s1197 = scalar_lea.vmem %s3, 128
      %v1198 = vld [vmem:[%s1197] sm:$0xf]
      %v1199 = vld [vmem:[%s1197 + $0x4] sm:$0xf]
      %v1200 = vld [vmem:[%s1197 + $0x8] sm:$0xf]
      %v1201 = vld [vmem:[%s1197 + $0xc] sm:$0xf]
      %v1202 = vld [vmem:[%s1197 + $0x10] sm:$0xf]
      %v1203 = vld [vmem:[%s1197 + $0x14] sm:$0xf]
      %v1204 = vld [vmem:[%s1197 + $0x18] sm:$0xf]
      %v1205 = vld [vmem:[%s1197 + $0x1c] sm:$0xf]
      %v1206 = vld [vmem:[%s1197 + $0x20] sm:$0xf]
      %v1207 = vld [vmem:[%s1197 + $0x24] sm:$0xf]
      %v1208 = vld [vmem:[%s1197 + $0x28] sm:$0xf]
      %v1209 = vld [vmem:[%s1197 + $0x2c] sm:$0xf]
      %v1210 = vld [vmem:[%s1197 + $0x30] sm:$0xf]
      %v1211 = vld [vmem:[%s1197 + $0x34] sm:$0xf]
      %v1212 = vld [vmem:[%s1197 + $0x38] sm:$0xf]
      %v1213 = vld [vmem:[%s1197 + $0x3c] sm:$0xf]
      %v1214 = vunpack.c.l.b16 %v1160
      %v1215 = vunpack.c.l.b16 %v1164
      %v1216 = vunpack.c.l.b16 %v1168
      %v1217 = vunpack.c.l.b16 %v1172
      %v1218 = vunpack.c.l.b16 %v1176
      %v1219 = vunpack.c.l.b16 %v1180
      %v1220 = vunpack.c.l.b16 %v1184
      %v1221 = vunpack.c.l.b16 %v1188
      %v1222 = vpack.c.b16 %v1215, %v1214
      %v1223 = vpack.c.b16 %v1217, %v1216
      %v1224 = vpack.c.b16 %v1219, %v1218
      %v1225 = vpack.c.b16 %v1221, %v1220
      %v1246 = vunpack.c.l.b16 %v1198
      %v1247 = vunpack.c.l.b16 %v1199
      %v1248 = vunpack.c.l.b16 %v1200
      %v1249 = vunpack.c.l.b16 %v1201
      %v1250 = vunpack.c.l.b16 %v1202
      %v1251 = vunpack.c.l.b16 %v1203
      %v1252 = vunpack.c.l.b16 %v1204
      %v1253 = vunpack.c.l.b16 %v1205
      %v1254 = vunpack.c.l.b16 %v1206
      %v1255 = vunpack.c.l.b16 %v1207
      %v1256 = vunpack.c.l.b16 %v1208
      %v1257 = vunpack.c.l.b16 %v1209
      %v1258 = vunpack.c.l.b16 %v1210
      %v1259 = vunpack.c.l.b16 %v1211
      %v1260 = vunpack.c.l.b16 %v1212
      %v1261 = vunpack.c.l.b16 %v1213
      %v1262 = vpack.c.b16 %v1247, %v1246
      %v1263 = vpack.c.b16 %v1249, %v1248
      %v1264 = vpack.c.b16 %v1251, %v1250
      %v1265 = vpack.c.b16 %v1253, %v1252
      %v1266 = vpack.c.b16 %v1255, %v1254
      %v1267 = vpack.c.b16 %v1257, %v1256
      %v1268 = vpack.c.b16 %v1259, %v1258
      %v1269 = vpack.c.b16 %v1261, %v1260
      %1278 = vmatprep.subr.bf16.mxu0 0
      %1279 = vmatpush1.bf16.msra.mxu0 %v1262
      %1280 = vmatprep.subr.bf16.mxu0 0
      %1281 = vmatpush1.bf16.msra.mxu0 %v1263
      %1282 = vmatprep.subr.bf16.mxu0 0
      %1283 = vmatpush1.bf16.msra.mxu0 %v1264
      %1284 = vmatprep.subr.bf16.mxu0 0
      %1285 = vmatpush1.bf16.msra.mxu0 %v1265
      %1286 = vmatprep.subr.bf16.mxu0 0
      %1287 = vmatpush1.bf16.msra.mxu0 %v1266
      %1288 = vmatprep.subr.bf16.mxu0 0
      %1289 = vmatpush1.bf16.msra.mxu0 %v1267
      %1290 = vmatprep.subr.bf16.mxu0 0
      %1291 = vmatpush1.bf16.msra.mxu0 %v1268
      %1292 = vmatprep.subr.bf16.mxu0 0
      %1293 = vmatpush1.bf16.msra.mxu0 %v1269
      %1294 = vmatprep.subr.bf16.mxu0 0
      %1295 = vmatpush1.bf16.msra.mxu0 0
      %1296 = vmatprep.subr.bf16.mxu0 0
      %1297 = vmatpush1.bf16.msra.mxu0 0
      %1298 = vmatprep.subr.bf16.mxu0 0
      %1299 = vmatpush1.bf16.msra.mxu0 0
      %1300 = vmatprep.subr.bf16.mxu0 0
      %1301 = vmatpush1.bf16.msra.mxu0 0
      %1302 = vmatprep.subr.bf16.mxu0 0
      %1303 = vmatpush1.bf16.msra.mxu0 0
      %1304 = vmatprep.subr.bf16.mxu0 0
      %1305 = vmatpush1.bf16.msra.mxu0 0
      %1306 = vmatprep.subr.bf16.mxu0 0
      %1307 = vmatpush1.bf16.msra.mxu0 0
      %1308 = vmatprep.subr.bf16.mxu0 0
      %1309 = vmatpush1.bf16.msra.mxu0 0
      %1310 = vmatprep.mubr.bf16.mxu0 0
      %1311 = vmatmul.mubr.bf16.gmra.mrb[0].mxu0 %v1222
      %v1312 = vpop.f32.mrb[0].mxu0
      %v1313 = vadd.f32 0.0, %v1312
      %v1314 = vpop.f32.mrb[0].mxu0
      %v1315 = vpop.f32.mrb[0].mxu0
      %v1316 = vadd.f32 0.0, %v1315
      %v1317 = vpop.f32.mrb[0].mxu0
      %1318 = vmatprep.mubr.bf16.mxu0 0
      %1319 = vmatmul.mubr.bf16.gmra.mrb[0].mxu0 %v1223
      %v1320 = vpop.f32.mrb[0].mxu0
      %v1321 = vadd.f32 0.0, %v1320
      %v1322 = vpop.f32.mrb[0].mxu0
      %v1323 = vpop.f32.mrb[0].mxu0
      %v1324 = vadd.f32 0.0, %v1323
      %v1325 = vpop.f32.mrb[0].mxu0
      %1326 = vmatprep.mubr.bf16.mxu0 0
      %1327 = vmatmul.mubr.bf16.gmra.mrb[0].mxu0 %v1224
      %v1328 = vpop.f32.mrb[0].mxu0
      %v1329 = vadd.f32 0.0, %v1328
      %v1330 = vpop.f32.mrb[0].mxu0
      %v1331 = vpop.f32.mrb[0].mxu0
      %v1332 = vadd.f32 0.0, %v1331
      %v1333 = vpop.f32.mrb[0].mxu0
      %1334 = vmatprep.mubr.bf16.mxu0 0
      %1335 = vmatmul.mubr.bf16.gmra.mrb[0].mxu0 %v1225
      %v1336 = vpop.f32.mrb[0].mxu0
      %v1337 = vadd.f32 0.0, %v1336
      %v1338 = vpop.f32.mrb[0].mxu0
      %v1339 = vpop.f32.mrb[0].mxu0
      %v1340 = vadd.f32 0.0, %v1339
      %v1341 = vpop.f32.mrb[0].mxu0
      %1342 = vdwg.mxu0
      %v1343 = vadd.f32 %v1189, %v1313
      %v1344 = vadd.f32 %v1190, %v1316
      %v1345 = vadd.f32 %v1191, %v1321
      %v1346 = vadd.f32 %v1192, %v1324
      %v1347 = vadd.f32 %v1193, %v1329
      %v1348 = vadd.f32 %v1194, %v1332
      %v1349 = vadd.f32 %v1195, %v1337
      %v1350 = vadd.f32 %v1196, %v1340
      %1351 = vst [vmem:[#allocation3] sm:$0xff] %v1343
      %1352 = vst [vmem:[#allocation3 + $0x8] sm:$0xff] %v1344
      %1353 = vst [vmem:[#allocation3 + $0x10] sm:$0xff] %v1345
      %1354 = vst [vmem:[#allocation3 + $0x18] sm:$0xff] %v1346
      %1355 = vst [vmem:[#allocation3 + $0x20] sm:$0xff] %v1347
      %1356 = vst [vmem:[#allocation3 + $0x28] sm:$0xff] %v1348
      %1357 = vst [vmem:[#allocation3 + $0x30] sm:$0xff] %v1349
      %1358 = vst [vmem:[#allocation3 + $0x38] sm:$0xff] %v1350
      %v1359 = vld [vmem:[%s573] sm:$0xf]
      %v1360 = vld [vmem:[%s573 + $0x8] sm:$0xf]
      %v1361 = vld [vmem:[%s573 + $0x10] sm:$0xf]
      %v1362 = vld [vmem:[%s573 + $0x18] sm:$0xf]
      %v1363 = vld [vmem:[%s573 + $0x20] sm:$0xf]
      %v1364 = vld [vmem:[%s573 + $0x28] sm:$0xf]
      %v1365 = vld [vmem:[%s573 + $0x30] sm:$0xf]
      %v1366 = vld [vmem:[%s573 + $0x38] sm:$0xf]
      %v1367 = vld [vmem:[#allocation3] sm:$0xff]
      %v1368 = vld [vmem:[#allocation3 + $0x8] sm:$0xff]
      %v1369 = vld [vmem:[#allocation3 + $0x10] sm:$0xff]
      %v1370 = vld [vmem:[#allocation3 + $0x18] sm:$0xff]
      %v1371 = vld [vmem:[#allocation3 + $0x20] sm:$0xff]
      %v1372 = vld [vmem:[#allocation3 + $0x28] sm:$0xff]
      %v1373 = vld [vmem:[#allocation3 + $0x30] sm:$0xff]
      %v1374 = vld [vmem:[#allocation3 + $0x38] sm:$0xff]
      %s1375 = scalar_lea.vmem %s3, 192
      %v1376 = vld [vmem:[%s1375] sm:$0xf]
      %v1377 = vld [vmem:[%s1375 + $0x4] sm:$0xf]
      %v1378 = vld [vmem:[%s1375 + $0x8] sm:$0xf]
      %v1379 = vld [vmem:[%s1375 + $0xc] sm:$0xf]
      %v1380 = vld [vmem:[%s1375 + $0x10] sm:$0xf]
      %v1381 = vld [vmem:[%s1375 + $0x14] sm:$0xf]
      %v1382 = vld [vmem:[%s1375 + $0x18] sm:$0xf]
      %v1383 = vld [vmem:[%s1375 + $0x1c] sm:$0xf]
      %v1384 = vld [vmem:[%s1375 + $0x20] sm:$0xf]
      %v1385 = vld [vmem:[%s1375 + $0x24] sm:$0xf]
      %v1386 = vld [vmem:[%s1375 + $0x28] sm:$0xf]
      %v1387 = vld [vmem:[%s1375 + $0x2c] sm:$0xf]
      %v1388 = vld [vmem:[%s1375 + $0x30] sm:$0xf]
      %v1389 = vld [vmem:[%s1375 + $0x34] sm:$0xf]
      %v1390 = vld [vmem:[%s1375 + $0x38] sm:$0xf]
      %v1391 = vld [vmem:[%s1375 + $0x3c] sm:$0xf]
      %v1400 = vunpack.c.l.b16 %v1359
      %v1401 = vunpack.c.l.b16 %v1360
      %v1402 = vunpack.c.l.b16 %v1361
      %v1403 = vunpack.c.l.b16 %v1362
      %v1404 = vunpack.c.l.b16 %v1363
      %v1405 = vunpack.c.l.b16 %v1364
      %v1406 = vunpack.c.l.b16 %v1365
      %v1407 = vunpack.c.l.b16 %v1366
      %v1408 = vpack.c.b16 %v1401, %v1400
      %v1409 = vpack.c.b16 %v1403, %v1402
      %v1410 = vpack.c.b16 %v1405, %v1404
      %v1411 = vpack.c.b16 %v1407, %v1406
      %v1432 = vunpack.c.l.b16 %v1376
      %v1433 = vunpack.c.l.b16 %v1377
      %v1434 = vunpack.c.l.b16 %v1378
      %v1435 = vunpack.c.l.b16 %v1379
      %v1436 = vunpack.c.l.b16 %v1380
      %v1437 = vunpack.c.l.b16 %v1381
      %v1438 = vunpack.c.l.b16 %v1382
      %v1439 = vunpack.c.l.b16 %v1383
      %v1440 = vunpack.c.l.b16 %v1384
      %v1441 = vunpack.c.l.b16 %v1385
      %v1442 = vunpack.c.l.b16 %v1386
      %v1443 = vunpack.c.l.b16 %v1387
      %v1444 = vunpack.c.l.b16 %v1388
      %v1445 = vunpack.c.l.b16 %v1389
      %v1446 = vunpack.c.l.b16 %v1390
      %v1447 = vunpack.c.l.b16 %v1391
      %v1448 = vpack.c.b16 %v1433, %v1432
      %v1449 = vpack.c.b16 %v1435, %v1434
      %v1450 = vpack.c.b16 %v1437, %v1436
      %v1451 = vpack.c.b16 %v1439, %v1438
      %v1452 = vpack.c.b16 %v1441, %v1440
      %v1453 = vpack.c.b16 %v1443, %v1442
      %v1454 = vpack.c.b16 %v1445, %v1444
      %v1455 = vpack.c.b16 %v1447, %v1446
      %1464 = vmatprep.subr.bf16.mxu0 0
      %1465 = vmatpush1.bf16.msra.mxu0 %v1448
      %1466 = vmatprep.subr.bf16.mxu0 0
      %1467 = vmatpush1.bf16.msra.mxu0 %v1449
      %1468 = vmatprep.subr.bf16.mxu0 0
      %1469 = vmatpush1.bf16.msra.mxu0 %v1450
      %1470 = vmatprep.subr.bf16.mxu0 0
      %1471 = vmatpush1.bf16.msra.mxu0 %v1451
      %1472 = vmatprep.subr.bf16.mxu0 0
      %1473 = vmatpush1.bf16.msra.mxu0 %v1452
      %1474 = vmatprep.subr.bf16.mxu0 0
      %1475 = vmatpush1.bf16.msra.mxu0 %v1453
      %1476 = vmatprep.subr.bf16.mxu0 0
      %1477 = vmatpush1.bf16.msra.mxu0 %v1454
      %1478 = vmatprep.subr.bf16.mxu0 0
      %1479 = vmatpush1.bf16.msra.mxu0 %v1455
      %1480 = vmatprep.subr.bf16.mxu0 0
      %1481 = vmatpush1.bf16.msra.mxu0 0
      %1482 = vmatprep.subr.bf16.mxu0 0
      %1483 = vmatpush1.bf16.msra.mxu0 0
      %1484 = vmatprep.subr.bf16.mxu0 0
      %1485 = vmatpush1.bf16.msra.mxu0 0
      %1486 = vmatprep.subr.bf16.mxu0 0
      %1487 = vmatpush1.bf16.msra.mxu0 0
      %1488 = vmatprep.subr.bf16.mxu0 0
      %1489 = vmatpush1.bf16.msra.mxu0 0
      %1490 = vmatprep.subr.bf16.mxu0 0
      %1491 = vmatpush1.bf16.msra.mxu0 0
      %1492 = vmatprep.subr.bf16.mxu0 0
      %1493 = vmatpush1.bf16.msra.mxu0 0
      %1494 = vmatprep.subr.bf16.mxu0 0
      %1495 = vmatpush1.bf16.msra.mxu0 0
      %1496 = vmatprep.mubr.bf16.mxu0 0
      %1497 = vmatmul.mubr.bf16.gmra.mrb[0].mxu0 %v1408
      %v1498 = vpop.f32.mrb[0].mxu0
      %v1499 = vadd.f32 0.0, %v1498
      %v1500 = vpop.f32.mrb[0].mxu0
      %v1501 = vpop.f32.mrb[0].mxu0
      %v1502 = vadd.f32 0.0, %v1501
      %v1503 = vpop.f32.mrb[0].mxu0
      %1504 = vmatprep.mubr.bf16.mxu0 0
      %1505 = vmatmul.mubr.bf16.gmra.mrb[0].mxu0 %v1409
      %v1506 = vpop.f32.mrb[0].mxu0
      %v1507 = vadd.f32 0.0, %v1506
      %v1508 = vpop.f32.mrb[0].mxu0
      %v1509 = vpop.f32.mrb[0].mxu0
      %v1510 = vadd.f32 0.0, %v1509
      %v1511 = vpop.f32.mrb[0].mxu0
      %1512 = vmatprep.mubr.bf16.mxu0 0
      %1513 = vmatmul.mubr.bf16.gmra.mrb[0].mxu0 %v1410
      %v1514 = vpop.f32.mrb[0].mxu0
      %v1515 = vadd.f32 0.0, %v1514
      %v1516 = vpop.f32.mrb[0].mxu0
      %v1517 = vpop.f32.mrb[0].mxu0
      %v1518 = vadd.f32 0.0, %v1517
      %v1519 = vpop.f32.mrb[0].mxu0
      %1520 = vmatprep.mubr.bf16.mxu0 0
      %1521 = vmatmul.mubr.bf16.gmra.mrb[0].mxu0 %v1411
      %v1522 = vpop.f32.mrb[0].mxu0
      %v1523 = vadd.f32 0.0, %v1522
      %v1524 = vpop.f32.mrb[0].mxu0
      %v1525 = vpop.f32.mrb[0].mxu0
      %v1526 = vadd.f32 0.0, %v1525
      %v1527 = vpop.f32.mrb[0].mxu0
      %1528 = vdwg.mxu0
      %v1529 = vadd.f32 %v1367, %v1499
      %v1530 = vadd.f32 %v1368, %v1502
      %v1531 = vadd.f32 %v1369, %v1507
      %v1532 = vadd.f32 %v1370, %v1510
      %v1533 = vadd.f32 %v1371, %v1515
      %v1534 = vadd.f32 %v1372, %v1518
      %v1535 = vadd.f32 %v1373, %v1523
      %v1536 = vadd.f32 %v1374, %v1526
      %1537 = vst [vmem:[#allocation3] sm:$0xff] %v1529
      %1538 = vst [vmem:[#allocation3 + $0x8] sm:$0xff] %v1530
      %1539 = vst [vmem:[#allocation3 + $0x10] sm:$0xff] %v1531
      %1540 = vst [vmem:[#allocation3 + $0x18] sm:$0xff] %v1532
      %1541 = vst [vmem:[#allocation3 + $0x20] sm:$0xff] %v1533
      %1542 = vst [vmem:[#allocation3 + $0x28] sm:$0xff] %v1534
      %1543 = vst [vmem:[#allocation3 + $0x30] sm:$0xff] %v1535
      %1544 = vst [vmem:[#allocation3 + $0x38] sm:$0xff] %v1536
      %v1545 = vld [vmem:[%s573] sm:$0xf]
      %v1546 = vld [vmem:[%s573 + $0x4] sm:$0x1]
      %v1547 = vld [vmem:[%s573 + $0x8] sm:$0xf]
      %v1548 = vld [vmem:[%s573 + $0xc] sm:$0x1]
      %v1549 = vld [vmem:[%s573 + $0x10] sm:$0xf]
      %v1550 = vld [vmem:[%s573 + $0x14] sm:$0x1]
      %v1551 = vld [vmem:[%s573 + $0x18] sm:$0xf]
      %v1552 = vld [vmem:[%s573 + $0x1c] sm:$0x1]
      %v1553 = vld [vmem:[%s573 + $0x20] sm:$0xf]
      %v1554 = vld [vmem:[%s573 + $0x24] sm:$0x1]
      %v1555 = vld [vmem:[%s573 + $0x28] sm:$0xf]
      %v1556 = vld [vmem:[%s573 + $0x2c] sm:$0x1]
      %v1557 = vld [vmem:[%s573 + $0x30] sm:$0xf]
      %v1558 = vld [vmem:[%s573 + $0x34] sm:$0x1]
      %v1559 = vld [vmem:[%s573 + $0x38] sm:$0xf]
      %v1560 = vld [vmem:[%s573 + $0x3c] sm:$0x1]
      %v1562 = vshrl.u32 %v1545, 16
      %v1564 = vrot.slane %v1562, 4
      %v1565 = vshll.u32 %v1545, 16
      %v1567 = vrot.slane %v1565, 5
      %v1568 = vor.u32 %v1564, %v1567
      %v1569 = vrot.slane %v1568, 4
      %v1571 = vshll.u32 %v1546, 16
      %v1573 = vrot.slane %v1571, 5
      %v1574 = vsel %vm839, %v1569, %v1573
      %v1576 = vshrl.u32 %v1547, 16
      %v1578 = vrot.slane %v1576, 4
      %v1579 = vshll.u32 %v1547, 16
      %v1581 = vrot.slane %v1579, 5
      %v1582 = vor.u32 %v1578, %v1581
      %v1583 = vrot.slane %v1582, 4
      %v1585 = vshll.u32 %v1548, 16
      %v1587 = vrot.slane %v1585, 5
      %v1588 = vsel %vm839, %v1583, %v1587
      %v1590 = vshrl.u32 %v1549, 16
      %v1592 = vrot.slane %v1590, 4
      %v1593 = vshll.u32 %v1549, 16
      %v1595 = vrot.slane %v1593, 5
      %v1596 = vor.u32 %v1592, %v1595
      %v1597 = vrot.slane %v1596, 4
      %v1599 = vshll.u32 %v1550, 16
      %v1601 = vrot.slane %v1599, 5
      %v1602 = vsel %vm839, %v1597, %v1601
      %v1604 = vshrl.u32 %v1551, 16
      %v1606 = vrot.slane %v1604, 4
      %v1607 = vshll.u32 %v1551, 16
      %v1609 = vrot.slane %v1607, 5
      %v1610 = vor.u32 %v1606, %v1609
      %v1611 = vrot.slane %v1610, 4
      %v1613 = vshll.u32 %v1552, 16
      %v1615 = vrot.slane %v1613, 5
      %v1616 = vsel %vm839, %v1611, %v1615
      %v1618 = vshrl.u32 %v1553, 16
      %v1620 = vrot.slane %v1618, 4
      %v1621 = vshll.u32 %v1553, 16
      %v1623 = vrot.slane %v1621, 5
      %v1624 = vor.u32 %v1620, %v1623
      %v1625 = vrot.slane %v1624, 4
      %v1627 = vshll.u32 %v1554, 16
      %v1629 = vrot.slane %v1627, 5
      %v1630 = vsel %vm839, %v1625, %v1629
      %v1632 = vshrl.u32 %v1555, 16
      %v1634 = vrot.slane %v1632, 4
      %v1635 = vshll.u32 %v1555, 16
      %v1637 = vrot.slane %v1635, 5
      %v1638 = vor.u32 %v1634, %v1637
      %v1639 = vrot.slane %v1638, 4
      %v1641 = vshll.u32 %v1556, 16
      %v1643 = vrot.slane %v1641, 5
      %v1644 = vsel %vm839, %v1639, %v1643
      %v1646 = vshrl.u32 %v1557, 16
      %v1648 = vrot.slane %v1646, 4
      %v1649 = vshll.u32 %v1557, 16
      %v1651 = vrot.slane %v1649, 5
      %v1652 = vor.u32 %v1648, %v1651
      %v1653 = vrot.slane %v1652, 4
      %v1655 = vshll.u32 %v1558, 16
      %v1657 = vrot.slane %v1655, 5
      %v1658 = vsel %vm839, %v1653, %v1657
      %v1660 = vshrl.u32 %v1559, 16
      %v1662 = vrot.slane %v1660, 4
      %v1663 = vshll.u32 %v1559, 16
      %v1665 = vrot.slane %v1663, 5
      %v1666 = vor.u32 %v1662, %v1665
      %v1667 = vrot.slane %v1666, 4
      %v1669 = vshll.u32 %v1560, 16
      %v1671 = vrot.slane %v1669, 5
      %v1672 = vsel %vm839, %v1667, %v1671
      %v1673 = vld [vmem:[#allocation3] sm:$0xff]
      %v1674 = vld [vmem:[#allocation3 + $0x8] sm:$0xff]
      %v1675 = vld [vmem:[#allocation3 + $0x10] sm:$0xff]
      %v1676 = vld [vmem:[#allocation3 + $0x18] sm:$0xff]
      %v1677 = vld [vmem:[#allocation3 + $0x20] sm:$0xff]
      %v1678 = vld [vmem:[#allocation3 + $0x28] sm:$0xff]
      %v1679 = vld [vmem:[#allocation3 + $0x30] sm:$0xff]
      %v1680 = vld [vmem:[#allocation3 + $0x38] sm:$0xff]
      %s1681 = scalar_lea.vmem %s3, 256
      %v1682 = vld [vmem:[%s1681] sm:$0xf]
      %v1683 = vld [vmem:[%s1681 + $0x4] sm:$0xf]
      %v1684 = vld [vmem:[%s1681 + $0x8] sm:$0xf]
      %v1685 = vld [vmem:[%s1681 + $0xc] sm:$0xf]
      %v1686 = vld [vmem:[%s1681 + $0x10] sm:$0xf]
      %v1687 = vld [vmem:[%s1681 + $0x14] sm:$0xf]
      %v1688 = vld [vmem:[%s1681 + $0x18] sm:$0xf]
      %v1689 = vld [vmem:[%s1681 + $0x1c] sm:$0xf]
      %v1690 = vld [vmem:[%s1681 + $0x20] sm:$0xf]
      %v1691 = vld [vmem:[%s1681 + $0x24] sm:$0xf]
      %v1692 = vld [vmem:[%s1681 + $0x28] sm:$0xf]
      %v1693 = vld [vmem:[%s1681 + $0x2c] sm:$0xf]
      %v1694 = vld [vmem:[%s1681 + $0x30] sm:$0xf]
      %v1695 = vld [vmem:[%s1681 + $0x34] sm:$0xf]
      %v1696 = vld [vmem:[%s1681 + $0x38] sm:$0xf]
      %v1697 = vld [vmem:[%s1681 + $0x3c] sm:$0xf]
      %v1698 = vunpack.c.l.b16 %v1574
      %v1699 = vunpack.c.l.b16 %v1588
      %v1700 = vunpack.c.l.b16 %v1602
      %v1701 = vunpack.c.l.b16 %v1616
      %v1702 = vunpack.c.l.b16 %v1630
      %v1703 = vunpack.c.l.b16 %v1644
      %v1704 = vunpack.c.l.b16 %v1658
      %v1705 = vunpack.c.l.b16 %v1672
      %v1706 = vpack.c.b16 %v1699, %v1698
      %v1707 = vpack.c.b16 %v1701, %v1700
      %v1708 = vpack.c.b16 %v1703, %v1702
      %v1709 = vpack.c.b16 %v1705, %v1704
      %v1730 = vunpack.c.l.b16 %v1682
      %v1731 = vunpack.c.l.b16 %v1683
      %v1732 = vunpack.c.l.b16 %v1684
      %v1733 = vunpack.c.l.b16 %v1685
      %v1734 = vunpack.c.l.b16 %v1686
      %v1735 = vunpack.c.l.b16 %v1687
      %v1736 = vunpack.c.l.b16 %v1688
      %v1737 = vunpack.c.l.b16 %v1689
      %v1738 = vunpack.c.l.b16 %v1690
      %v1739 = vunpack.c.l.b16 %v1691
      %v1740 = vunpack.c.l.b16 %v1692
      %v1741 = vunpack.c.l.b16 %v1693
      %v1742 = vunpack.c.l.b16 %v1694
      %v1743 = vunpack.c.l.b16 %v1695
      %v1744 = vunpack.c.l.b16 %v1696
      %v1745 = vunpack.c.l.b16 %v1697
      %v1746 = vpack.c.b16 %v1731, %v1730
      %v1747 = vpack.c.b16 %v1733, %v1732
      %v1748 = vpack.c.b16 %v1735, %v1734
      %v1749 = vpack.c.b16 %v1737, %v1736
      %v1750 = vpack.c.b16 %v1739, %v1738
      %v1751 = vpack.c.b16 %v1741, %v1740
      %v1752 = vpack.c.b16 %v1743, %v1742
      %v1753 = vpack.c.b16 %v1745, %v1744
      %1762 = vmatprep.subr.bf16.mxu0 0
      %1763 = vmatpush1.bf16.msra.mxu0 %v1746
      %1764 = vmatprep.subr.bf16.mxu0 0
      %1765 = vmatpush1.bf16.msra.mxu0 %v1747
      %1766 = vmatprep.subr.bf16.mxu0 0
      %1767 = vmatpush1.bf16.msra.mxu0 %v1748
      %1768 = vmatprep.subr.bf16.mxu0 0
      %1769 = vmatpush1.bf16.msra.mxu0 %v1749
      %1770 = vmatprep.subr.bf16.mxu0 0
      %1771 = vmatpush1.bf16.msra.mxu0 %v1750
      %1772 = vmatprep.subr.bf16.mxu0 0
      %1773 = vmatpush1.bf16.msra.mxu0 %v1751
      %1774 = vmatprep.subr.bf16.mxu0 0
      %1775 = vmatpush1.bf16.msra.mxu0 %v1752
      %1776 = vmatprep.subr.bf16.mxu0 0
      %1777 = vmatpush1.bf16.msra.mxu0 %v1753
      %1778 = vmatprep.subr.bf16.mxu0 0
      %1779 = vmatpush1.bf16.msra.mxu0 0
      %1780 = vmatprep.subr.bf16.mxu0 0
      %1781 = vmatpush1.bf16.msra.mxu0 0
      %1782 = vmatprep.subr.bf16.mxu0 0
      %1783 = vmatpush1.bf16.msra.mxu0 0
      %1784 = vmatprep.subr.bf16.mxu0 0
      %1785 = vmatpush1.bf16.msra.mxu0 0
      %1786 = vmatprep.subr.bf16.mxu0 0
      %1787 = vmatpush1.bf16.msra.mxu0 0
      %1788 = vmatprep.subr.bf16.mxu0 0
      %1789 = vmatpush1.bf16.msra.mxu0 0
      %1790 = vmatprep.subr.bf16.mxu0 0
      %1791 = vmatpush1.bf16.msra.mxu0 0
      %1792 = vmatprep.subr.bf16.mxu0 0
      %1793 = vmatpush1.bf16.msra.mxu0 0
      %1794 = vmatprep.mubr.bf16.mxu0 0
      %1795 = vmatmul.mubr.bf16.gmra.mrb[0].mxu0 %v1706
      %v1796 = vpop.f32.mrb[0].mxu0
      %v1797 = vadd.f32 0.0, %v1796
      %v1798 = vpop.f32.mrb[0].mxu0
      %v1799 = vpop.f32.mrb[0].mxu0
      %v1800 = vadd.f32 0.0, %v1799
      %v1801 = vpop.f32.mrb[0].mxu0
      %1802 = vmatprep.mubr.bf16.mxu0 0
      %1803 = vmatmul.mubr.bf16.gmra.mrb[0].mxu0 %v1707
      %v1804 = vpop.f32.mrb[0].mxu0
      %v1805 = vadd.f32 0.0, %v1804
      %v1806 = vpop.f32.mrb[0].mxu0
      %v1807 = vpop.f32.mrb[0].mxu0
      %v1808 = vadd.f32 0.0, %v1807
      %v1809 = vpop.f32.mrb[0].mxu0
      %1810 = vmatprep.mubr.bf16.mxu0 0
      %1811 = vmatmul.mubr.bf16.gmra.mrb[0].mxu0 %v1708
      %v1812 = vpop.f32.mrb[0].mxu0
      %v1813 = vadd.f32 0.0, %v1812
      %v1814 = vpop.f32.mrb[0].mxu0
      %v1815 = vpop.f32.mrb[0].mxu0
      %v1816 = vadd.f32 0.0, %v1815
      %v1817 = vpop.f32.mrb[0].mxu0
      %1818 = vmatprep.mubr.bf16.mxu0 0
      %1819 = vmatmul.mubr.bf16.gmra.mrb[0].mxu0 %v1709
      %v1820 = vpop.f32.mrb[0].mxu0
      %v1821 = vadd.f32 0.0, %v1820
      %v1822 = vpop.f32.mrb[0].mxu0
      %v1823 = vpop.f32.mrb[0].mxu0
      %v1824 = vadd.f32 0.0, %v1823
      %v1825 = vpop.f32.mrb[0].mxu0
      %1826 = vdwg.mxu0
      %v1827 = vadd.f32 %v1673, %v1797
      %v1828 = vadd.f32 %v1674, %v1800
      %v1829 = vadd.f32 %v1675, %v1805
      %v1830 = vadd.f32 %v1676, %v1808
      %v1831 = vadd.f32 %v1677, %v1813
      %v1832 = vadd.f32 %v1678, %v1816
      %v1833 = vadd.f32 %v1679, %v1821
      %v1834 = vadd.f32 %v1680, %v1824
      %1835 = vst [vmem:[#allocation3] sm:$0xff] %v1827
      %1836 = vst [vmem:[#allocation3 + $0x8] sm:$0xff] %v1828
      %1837 = vst [vmem:[#allocation3 + $0x10] sm:$0xff] %v1829
      %1838 = vst [vmem:[#allocation3 + $0x18] sm:$0xff] %v1830
      %1839 = vst [vmem:[#allocation3 + $0x20] sm:$0xff] %v1831
      %1840 = vst [vmem:[#allocation3 + $0x28] sm:$0xff] %v1832
      %1841 = vst [vmem:[#allocation3 + $0x30] sm:$0xff] %v1833
      %1842 = vst [vmem:[#allocation3 + $0x38] sm:$0xff] %v1834
      %v1843 = vld [vmem:[%s573] sm:$0xe]
      %v1844 = vld [vmem:[%s573 + $0x4] sm:$0x1]
      %v1845 = vld [vmem:[%s573 + $0x8] sm:$0xe]
      %v1846 = vld [vmem:[%s573 + $0xc] sm:$0x1]
      %v1847 = vld [vmem:[%s573 + $0x10] sm:$0xe]
      %v1848 = vld [vmem:[%s573 + $0x14] sm:$0x1]
      %v1849 = vld [vmem:[%s573 + $0x18] sm:$0xe]
      %v1850 = vld [vmem:[%s573 + $0x1c] sm:$0x1]
      %v1851 = vld [vmem:[%s573 + $0x20] sm:$0xe]
      %v1852 = vld [vmem:[%s573 + $0x24] sm:$0x1]
      %v1853 = vld [vmem:[%s573 + $0x28] sm:$0xe]
      %v1854 = vld [vmem:[%s573 + $0x2c] sm:$0x1]
      %v1855 = vld [vmem:[%s573 + $0x30] sm:$0xe]
      %v1856 = vld [vmem:[%s573 + $0x34] sm:$0x1]
      %v1857 = vld [vmem:[%s573 + $0x38] sm:$0xe]
      %v1858 = vld [vmem:[%s573 + $0x3c] sm:$0x1]
      %v1875 = vrot.slane %v1843, 5
      %v1876 = vrot.slane %v1875, 4
      %v1877 = vrot.slane %v1844, 5
      %v1878 = vsel %vm1156, %v1876, %v1877
      %v1879 = vrot.slane %v1845, 5
      %v1880 = vrot.slane %v1879, 4
      %v1881 = vrot.slane %v1846, 5
      %v1882 = vsel %vm1156, %v1880, %v1881
      %v1883 = vrot.slane %v1847, 5
      %v1884 = vrot.slane %v1883, 4
      %v1885 = vrot.slane %v1848, 5
      %v1886 = vsel %vm1156, %v1884, %v1885
      %v1887 = vrot.slane %v1849, 5
      %v1888 = vrot.slane %v1887, 4
      %v1889 = vrot.slane %v1850, 5
      %v1890 = vsel %vm1156, %v1888, %v1889
      %v1891 = vrot.slane %v1851, 5
      %v1892 = vrot.slane %v1891, 4
      %v1893 = vrot.slane %v1852, 5
      %v1894 = vsel %vm1156, %v1892, %v1893
      %v1895 = vrot.slane %v1853, 5
      %v1896 = vrot.slane %v1895, 4
      %v1897 = vrot.slane %v1854, 5
      %v1898 = vsel %vm1156, %v1896, %v1897
      %v1899 = vrot.slane %v1855, 5
      %v1900 = vrot.slane %v1899, 4
      %v1901 = vrot.slane %v1856, 5
      %v1902 = vsel %vm1156, %v1900, %v1901
      %v1903 = vrot.slane %v1857, 5
      %v1904 = vrot.slane %v1903, 4
      %v1905 = vrot.slane %v1858, 5
      %v1906 = vsel %vm1156, %v1904, %v1905
      %v1907 = vld [vmem:[#allocation3] sm:$0xff]
      %v1908 = vld [vmem:[#allocation3 + $0x8] sm:$0xff]
      %v1909 = vld [vmem:[#allocation3 + $0x10] sm:$0xff]
      %v1910 = vld [vmem:[#allocation3 + $0x18] sm:$0xff]
      %v1911 = vld [vmem:[#allocation3 + $0x20] sm:$0xff]
      %v1912 = vld [vmem:[#allocation3 + $0x28] sm:$0xff]
      %v1913 = vld [vmem:[#allocation3 + $0x30] sm:$0xff]
      %v1914 = vld [vmem:[#allocation3 + $0x38] sm:$0xff]
      %s1915 = scalar_lea.vmem %s3, 320
      %v1916 = vld [vmem:[%s1915] sm:$0xf]
      %v1917 = vld [vmem:[%s1915 + $0x4] sm:$0xf]
      %v1918 = vld [vmem:[%s1915 + $0x8] sm:$0xf]
      %v1919 = vld [vmem:[%s1915 + $0xc] sm:$0xf]
      %v1920 = vld [vmem:[%s1915 + $0x10] sm:$0xf]
      %v1921 = vld [vmem:[%s1915 + $0x14] sm:$0xf]
      %v1922 = vld [vmem:[%s1915 + $0x18] sm:$0xf]
      %v1923 = vld [vmem:[%s1915 + $0x1c] sm:$0xf]
      %v1924 = vld [vmem:[%s1915 + $0x20] sm:$0xf]
      %v1925 = vld [vmem:[%s1915 + $0x24] sm:$0xf]
      %v1926 = vld [vmem:[%s1915 + $0x28] sm:$0xf]
      %v1927 = vld [vmem:[%s1915 + $0x2c] sm:$0xf]
      %v1928 = vld [vmem:[%s1915 + $0x30] sm:$0xf]
      %v1929 = vld [vmem:[%s1915 + $0x34] sm:$0xf]
      %v1930 = vld [vmem:[%s1915 + $0x38] sm:$0xf]
      %v1931 = vld [vmem:[%s1915 + $0x3c] sm:$0xf]
      %v1932 = vunpack.c.l.b16 %v1878
      %v1933 = vunpack.c.l.b16 %v1882
      %v1934 = vunpack.c.l.b16 %v1886
      %v1935 = vunpack.c.l.b16 %v1890
      %v1936 = vunpack.c.l.b16 %v1894
      %v1937 = vunpack.c.l.b16 %v1898
      %v1938 = vunpack.c.l.b16 %v1902
      %v1939 = vunpack.c.l.b16 %v1906
      %v1940 = vpack.c.b16 %v1933, %v1932
      %v1941 = vpack.c.b16 %v1935, %v1934
      %v1942 = vpack.c.b16 %v1937, %v1936
      %v1943 = vpack.c.b16 %v1939, %v1938
      %v1964 = vunpack.c.l.b16 %v1916
      %v1965 = vunpack.c.l.b16 %v1917
      %v1966 = vunpack.c.l.b16 %v1918
      %v1967 = vunpack.c.l.b16 %v1919
      %v1968 = vunpack.c.l.b16 %v1920
      %v1969 = vunpack.c.l.b16 %v1921
      %v1970 = vunpack.c.l.b16 %v1922
      %v1971 = vunpack.c.l.b16 %v1923
      %v1972 = vunpack.c.l.b16 %v1924
      %v1973 = vunpack.c.l.b16 %v1925
      %v1974 = vunpack.c.l.b16 %v1926
      %v1975 = vunpack.c.l.b16 %v1927
      %v1976 = vunpack.c.l.b16 %v1928
      %v1977 = vunpack.c.l.b16 %v1929
      %v1978 = vunpack.c.l.b16 %v1930
      %v1979 = vunpack.c.l.b16 %v1931
      %v1980 = vpack.c.b16 %v1965, %v1964
      %v1981 = vpack.c.b16 %v1967, %v1966
      %v1982 = vpack.c.b16 %v1969, %v1968
      %v1983 = vpack.c.b16 %v1971, %v1970
      %v1984 = vpack.c.b16 %v1973, %v1972
      %v1985 = vpack.c.b16 %v1975, %v1974
      %v1986 = vpack.c.b16 %v1977, %v1976
      %v1987 = vpack.c.b16 %v1979, %v1978
      %1996 = vmatprep.subr.bf16.mxu0 0
      %1997 = vmatpush1.bf16.msra.mxu0 %v1980
      %1998 = vmatprep.subr.bf16.mxu0 0
      %1999 = vmatpush1.bf16.msra.mxu0 %v1981
      %2000 = vmatprep.subr.bf16.mxu0 0
      %2001 = vmatpush1.bf16.msra.mxu0 %v1982
      %2002 = vmatprep.subr.bf16.mxu0 0
      %2003 = vmatpush1.bf16.msra.mxu0 %v1983
      %2004 = vmatprep.subr.bf16.mxu0 0
      %2005 = vmatpush1.bf16.msra.mxu0 %v1984
      %2006 = vmatprep.subr.bf16.mxu0 0
      %2007 = vmatpush1.bf16.msra.mxu0 %v1985
      %2008 = vmatprep.subr.bf16.mxu0 0
      %2009 = vmatpush1.bf16.msra.mxu0 %v1986
      %2010 = vmatprep.subr.bf16.mxu0 0
      %2011 = vmatpush1.bf16.msra.mxu0 %v1987
      %2012 = vmatprep.subr.bf16.mxu0 0
      %2013 = vmatpush1.bf16.msra.mxu0 0
      %2014 = vmatprep.subr.bf16.mxu0 0
      %2015 = vmatpush1.bf16.msra.mxu0 0
      %2016 = vmatprep.subr.bf16.mxu0 0
      %2017 = vmatpush1.bf16.msra.mxu0 0
      %2018 = vmatprep.subr.bf16.mxu0 0
      %2019 = vmatpush1.bf16.msra.mxu0 0
      %2020 = vmatprep.subr.bf16.mxu0 0
      %2021 = vmatpush1.bf16.msra.mxu0 0
      %2022 = vmatprep.subr.bf16.mxu0 0
      %2023 = vmatpush1.bf16.msra.mxu0 0
      %2024 = vmatprep.subr.bf16.mxu0 0
      %2025 = vmatpush1.bf16.msra.mxu0 0
      %2026 = vmatprep.subr.bf16.mxu0 0
      %2027 = vmatpush1.bf16.msra.mxu0 0
      %2028 = vmatprep.mubr.bf16.mxu0 0
      %2029 = vmatmul.mubr.bf16.gmra.mrb[0].mxu0 %v1940
      %v2030 = vpop.f32.mrb[0].mxu0
      %v2031 = vadd.f32 0.0, %v2030
      %v2032 = vpop.f32.mrb[0].mxu0
      %v2033 = vpop.f32.mrb[0].mxu0
      %v2034 = vadd.f32 0.0, %v2033
      %v2035 = vpop.f32.mrb[0].mxu0
      %2036 = vmatprep.mubr.bf16.mxu0 0
      %2037 = vmatmul.mubr.bf16.gmra.mrb[0].mxu0 %v1941
      %v2038 = vpop.f32.mrb[0].mxu0
      %v2039 = vadd.f32 0.0, %v2038
      %v2040 = vpop.f32.mrb[0].mxu0
      %v2041 = vpop.f32.mrb[0].mxu0
      %v2042 = vadd.f32 0.0, %v2041
      %v2043 = vpop.f32.mrb[0].mxu0
      %2044 = vmatprep.mubr.bf16.mxu0 0
      %2045 = vmatmul.mubr.bf16.gmra.mrb[0].mxu0 %v1942
      %v2046 = vpop.f32.mrb[0].mxu0
      %v2047 = vadd.f32 0.0, %v2046
      %v2048 = vpop.f32.mrb[0].mxu0
      %v2049 = vpop.f32.mrb[0].mxu0
      %v2050 = vadd.f32 0.0, %v2049
      %v2051 = vpop.f32.mrb[0].mxu0
      %2052 = vmatprep.mubr.bf16.mxu0 0
      %2053 = vmatmul.mubr.bf16.gmra.mrb[0].mxu0 %v1943
      %v2054 = vpop.f32.mrb[0].mxu0
      %v2055 = vadd.f32 0.0, %v2054
      %v2056 = vpop.f32.mrb[0].mxu0
      %v2057 = vpop.f32.mrb[0].mxu0
      %v2058 = vadd.f32 0.0, %v2057
      %v2059 = vpop.f32.mrb[0].mxu0
      %2060 = vdwg.mxu0
      %v2061 = vadd.f32 %v1907, %v2031
      %v2062 = vadd.f32 %v1908, %v2034
      %v2063 = vadd.f32 %v1909, %v2039
      %v2064 = vadd.f32 %v1910, %v2042
      %v2065 = vadd.f32 %v1911, %v2047
      %v2066 = vadd.f32 %v1912, %v2050
      %v2067 = vadd.f32 %v1913, %v2055
      %v2068 = vadd.f32 %v1914, %v2058
      %2069 = vst [vmem:[#allocation3] sm:$0xff] %v2061
      %2070 = vst [vmem:[#allocation3 + $0x8] sm:$0xff] %v2062
      %2071 = vst [vmem:[#allocation3 + $0x10] sm:$0xff] %v2063
      %2072 = vst [vmem:[#allocation3 + $0x18] sm:$0xff] %v2064
      %2073 = vst [vmem:[#allocation3 + $0x20] sm:$0xff] %v2065
      %2074 = vst [vmem:[#allocation3 + $0x28] sm:$0xff] %v2066
      %2075 = vst [vmem:[#allocation3 + $0x30] sm:$0xff] %v2067
      %2076 = vst [vmem:[#allocation3 + $0x38] sm:$0xff] %v2068
      %s2077 = scalar_lea.vmem [#allocation2], 16
      %v2078 = vld [vmem:[%s2077] sm:$0xf]
      %v2079 = vld [vmem:[%s2077 + $0x8] sm:$0xf]
      %v2080 = vld [vmem:[%s2077 + $0x10] sm:$0xf]
      %v2081 = vld [vmem:[%s2077 + $0x18] sm:$0xf]
      %v2082 = vld [vmem:[%s2077 + $0x20] sm:$0xf]
      %v2083 = vld [vmem:[%s2077 + $0x28] sm:$0xf]
      %v2084 = vld [vmem:[%s2077 + $0x30] sm:$0xf]
      %v2085 = vld [vmem:[%s2077 + $0x38] sm:$0xf]
      %v2086 = vld [vmem:[#allocation3] sm:$0xff]
      %v2087 = vld [vmem:[#allocation3 + $0x8] sm:$0xff]
      %v2088 = vld [vmem:[#allocation3 + $0x10] sm:$0xff]
      %v2089 = vld [vmem:[#allocation3 + $0x18] sm:$0xff]
      %v2090 = vld [vmem:[#allocation3 + $0x20] sm:$0xff]
      %v2091 = vld [vmem:[#allocation3 + $0x28] sm:$0xff]
      %v2092 = vld [vmem:[#allocation3 + $0x30] sm:$0xff]
      %v2093 = vld [vmem:[#allocation3 + $0x38] sm:$0xff]
      %s2094 = scalar_lea.vmem %s3, 384
      %v2095 = vld [vmem:[%s2094] sm:$0xf]
      %v2096 = vld [vmem:[%s2094 + $0x4] sm:$0xf]
      %v2097 = vld [vmem:[%s2094 + $0x8] sm:$0xf]
      %v2098 = vld [vmem:[%s2094 + $0xc] sm:$0xf]
      %v2099 = vld [vmem:[%s2094 + $0x10] sm:$0xf]
      %v2100 = vld [vmem:[%s2094 + $0x14] sm:$0xf]
      %v2101 = vld [vmem:[%s2094 + $0x18] sm:$0xf]
      %v2102 = vld [vmem:[%s2094 + $0x1c] sm:$0xf]
      %v2103 = vld [vmem:[%s2094 + $0x20] sm:$0xf]
      %v2104 = vld [vmem:[%s2094 + $0x24] sm:$0xf]
      %v2105 = vld [vmem:[%s2094 + $0x28] sm:$0xf]
      %v2106 = vld [vmem:[%s2094 + $0x2c] sm:$0xf]
      %v2107 = vld [vmem:[%s2094 + $0x30] sm:$0xf]
      %v2108 = vld [vmem:[%s2094 + $0x34] sm:$0xf]
      %v2109 = vld [vmem:[%s2094 + $0x38] sm:$0xf]
      %v2110 = vld [vmem:[%s2094 + $0x3c] sm:$0xf]
      %v2119 = vunpack.c.l.b16 %v2078
      %v2120 = vunpack.c.l.b16 %v2079
      %v2121 = vunpack.c.l.b16 %v2080
      %v2122 = vunpack.c.l.b16 %v2081
      %v2123 = vunpack.c.l.b16 %v2082
      %v2124 = vunpack.c.l.b16 %v2083
      %v2125 = vunpack.c.l.b16 %v2084
      %v2126 = vunpack.c.l.b16 %v2085
      %v2127 = vpack.c.b16 %v2120, %v2119
      %v2128 = vpack.c.b16 %v2122, %v2121
      %v2129 = vpack.c.b16 %v2124, %v2123
      %v2130 = vpack.c.b16 %v2126, %v2125
      %v2151 = vunpack.c.l.b16 %v2095
      %v2152 = vunpack.c.l.b16 %v2096
      %v2153 = vunpack.c.l.b16 %v2097
      %v2154 = vunpack.c.l.b16 %v2098
      %v2155 = vunpack.c.l.b16 %v2099
      %v2156 = vunpack.c.l.b16 %v2100
      %v2157 = vunpack.c.l.b16 %v2101
      %v2158 = vunpack.c.l.b16 %v2102
      %v2159 = vunpack.c.l.b16 %v2103
      %v2160 = vunpack.c.l.b16 %v2104
      %v2161 = vunpack.c.l.b16 %v2105
      %v2162 = vunpack.c.l.b16 %v2106
      %v2163 = vunpack.c.l.b16 %v2107
      %v2164 = vunpack.c.l.b16 %v2108
      %v2165 = vunpack.c.l.b16 %v2109
      %v2166 = vunpack.c.l.b16 %v2110
      %v2167 = vpack.c.b16 %v2152, %v2151
      %v2168 = vpack.c.b16 %v2154, %v2153
      %v2169 = vpack.c.b16 %v2156, %v2155
      %v2170 = vpack.c.b16 %v2158, %v2157
      %v2171 = vpack.c.b16 %v2160, %v2159
      %v2172 = vpack.c.b16 %v2162, %v2161
      %v2173 = vpack.c.b16 %v2164, %v2163
      %v2174 = vpack.c.b16 %v2166, %v2165
      %2183 = vmatprep.subr.bf16.mxu0 0
      %2184 = vmatpush1.bf16.msra.mxu0 %v2167
      %2185 = vmatprep.subr.bf16.mxu0 0
      %2186 = vmatpush1.bf16.msra.mxu0 %v2168
      %2187 = vmatprep.subr.bf16.mxu0 0
      %2188 = vmatpush1.bf16.msra.mxu0 %v2169
      %2189 = vmatprep.subr.bf16.mxu0 0
      %2190 = vmatpush1.bf16.msra.mxu0 %v2170
      %2191 = vmatprep.subr.bf16.mxu0 0
      %2192 = vmatpush1.bf16.msra.mxu0 %v2171
      %2193 = vmatprep.subr.bf16.mxu0 0
      %2194 = vmatpush1.bf16.msra.mxu0 %v2172
      %2195 = vmatprep.subr.bf16.mxu0 0
      %2196 = vmatpush1.bf16.msra.mxu0 %v2173
      %2197 = vmatprep.subr.bf16.mxu0 0
      %2198 = vmatpush1.bf16.msra.mxu0 %v2174
      %2199 = vmatprep.subr.bf16.mxu0 0
      %2200 = vmatpush1.bf16.msra.mxu0 0
      %2201 = vmatprep.subr.bf16.mxu0 0
      %2202 = vmatpush1.bf16.msra.mxu0 0
      %2203 = vmatprep.subr.bf16.mxu0 0
      %2204 = vmatpush1.bf16.msra.mxu0 0
      %2205 = vmatprep.subr.bf16.mxu0 0
      %2206 = vmatpush1.bf16.msra.mxu0 0
      %2207 = vmatprep.subr.bf16.mxu0 0
      %2208 = vmatpush1.bf16.msra.mxu0 0
      %2209 = vmatprep.subr.bf16.mxu0 0
      %2210 = vmatpush1.bf16.msra.mxu0 0
      %2211 = vmatprep.subr.bf16.mxu0 0
      %2212 = vmatpush1.bf16.msra.mxu0 0
      %2213 = vmatprep.subr.bf16.mxu0 0
      %2214 = vmatpush1.bf16.msra.mxu0 0
      %2215 = vmatprep.mubr.bf16.mxu0 0
      %2216 = vmatmul.mubr.bf16.gmra.mrb[0].mxu0 %v2127
      %v2217 = vpop.f32.mrb[0].mxu0
      %v2218 = vadd.f32 0.0, %v2217
      %v2219 = vpop.f32.mrb[0].mxu0
      %v2220 = vpop.f32.mrb[0].mxu0
      %v2221 = vadd.f32 0.0, %v2220
      %v2222 = vpop.f32.mrb[0].mxu0
      %2223 = vmatprep.mubr.bf16.mxu0 0
      %2224 = vmatmul.mubr.bf16.gmra.mrb[0].mxu0 %v2128
      %v2225 = vpop.f32.mrb[0].mxu0
      %v2226 = vadd.f32 0.0, %v2225
      %v2227 = vpop.f32.mrb[0].mxu0
      %v2228 = vpop.f32.mrb[0].mxu0
      %v2229 = vadd.f32 0.0, %v2228
      %v2230 = vpop.f32.mrb[0].mxu0
      %2231 = vmatprep.mubr.bf16.mxu0 0
      %2232 = vmatmul.mubr.bf16.gmra.mrb[0].mxu0 %v2129
      %v2233 = vpop.f32.mrb[0].mxu0
      %v2234 = vadd.f32 0.0, %v2233
      %v2235 = vpop.f32.mrb[0].mxu0
      %v2236 = vpop.f32.mrb[0].mxu0
      %v2237 = vadd.f32 0.0, %v2236
      %v2238 = vpop.f32.mrb[0].mxu0
      %2239 = vmatprep.mubr.bf16.mxu0 0
      %2240 = vmatmul.mubr.bf16.gmra.mrb[0].mxu0 %v2130
      %v2241 = vpop.f32.mrb[0].mxu0
      %v2242 = vadd.f32 0.0, %v2241
      %v2243 = vpop.f32.mrb[0].mxu0
      %v2244 = vpop.f32.mrb[0].mxu0
      %v2245 = vadd.f32 0.0, %v2244
      %v2246 = vpop.f32.mrb[0].mxu0
      %2247 = vdwg.mxu0
      %v2248 = vadd.f32 %v2086, %v2218
      %v2249 = vadd.f32 %v2087, %v2221
      %v2250 = vadd.f32 %v2088, %v2226
      %v2251 = vadd.f32 %v2089, %v2229
      %v2252 = vadd.f32 %v2090, %v2234
      %v2253 = vadd.f32 %v2091, %v2237
      %v2254 = vadd.f32 %v2092, %v2242
      %v2255 = vadd.f32 %v2093, %v2245
      %2256 = vst [vmem:[#allocation3] sm:$0xff] %v2248
      %2257 = vst [vmem:[#allocation3 + $0x8] sm:$0xff] %v2249
      %2258 = vst [vmem:[#allocation3 + $0x10] sm:$0xff] %v2250
      %2259 = vst [vmem:[#allocation3 + $0x18] sm:$0xff] %v2251
      %2260 = vst [vmem:[#allocation3 + $0x20] sm:$0xff] %v2252
      %2261 = vst [vmem:[#allocation3 + $0x28] sm:$0xff] %v2253
      %2262 = vst [vmem:[#allocation3 + $0x30] sm:$0xff] %v2254
      %2263 = vst [vmem:[#allocation3 + $0x38] sm:$0xff] %v2255
      %v2264 = vld [vmem:[%s2077] sm:$0xf]
      %v2265 = vld [vmem:[%s2077 + $0x4] sm:$0x1]
      %v2266 = vld [vmem:[%s2077 + $0x8] sm:$0xf]
      %v2267 = vld [vmem:[%s2077 + $0xc] sm:$0x1]
      %v2268 = vld [vmem:[%s2077 + $0x10] sm:$0xf]
      %v2269 = vld [vmem:[%s2077 + $0x14] sm:$0x1]
      %v2270 = vld [vmem:[%s2077 + $0x18] sm:$0xf]
      %v2271 = vld [vmem:[%s2077 + $0x1c] sm:$0x1]
      %v2272 = vld [vmem:[%s2077 + $0x20] sm:$0xf]
      %v2273 = vld [vmem:[%s2077 + $0x24] sm:$0x1]
      %v2274 = vld [vmem:[%s2077 + $0x28] sm:$0xf]
      %v2275 = vld [vmem:[%s2077 + $0x2c] sm:$0x1]
      %v2276 = vld [vmem:[%s2077 + $0x30] sm:$0xf]
      %v2277 = vld [vmem:[%s2077 + $0x34] sm:$0x1]
      %v2278 = vld [vmem:[%s2077 + $0x38] sm:$0xf]
      %v2279 = vld [vmem:[%s2077 + $0x3c] sm:$0x1]
      %v2281 = vshrl.u32 %v2264, 16
      %v2283 = vrot.slane %v2281, 4
      %v2284 = vshll.u32 %v2264, 16
      %v2286 = vrot.slane %v2284, 5
      %v2287 = vor.u32 %v2283, %v2286
      %v2288 = vrot.slane %v2287, 4
      %v2290 = vshll.u32 %v2265, 16
      %v2292 = vrot.slane %v2290, 5
      %v2293 = vsel %vm839, %v2288, %v2292
      %v2295 = vshrl.u32 %v2266, 16
      %v2297 = vrot.slane %v2295, 4
      %v2298 = vshll.u32 %v2266, 16
      %v2300 = vrot.slane %v2298, 5
      %v2301 = vor.u32 %v2297, %v2300
      %v2302 = vrot.slane %v2301, 4
      %v2304 = vshll.u32 %v2267, 16
      %v2306 = vrot.slane %v2304, 5
      %v2307 = vsel %vm839, %v2302, %v2306
      %v2309 = vshrl.u32 %v2268, 16
      %v2311 = vrot.slane %v2309, 4
      %v2312 = vshll.u32 %v2268, 16
      %v2314 = vrot.slane %v2312, 5
      %v2315 = vor.u32 %v2311, %v2314
      %v2316 = vrot.slane %v2315, 4
      %v2318 = vshll.u32 %v2269, 16
      %v2320 = vrot.slane %v2318, 5
      %v2321 = vsel %vm839, %v2316, %v2320
      %v2323 = vshrl.u32 %v2270, 16
      %v2325 = vrot.slane %v2323, 4
      %v2326 = vshll.u32 %v2270, 16
      %v2328 = vrot.slane %v2326, 5
      %v2329 = vor.u32 %v2325, %v2328
      %v2330 = vrot.slane %v2329, 4
      %v2332 = vshll.u32 %v2271, 16
      %v2334 = vrot.slane %v2332, 5
      %v2335 = vsel %vm839, %v2330, %v2334
      %v2337 = vshrl.u32 %v2272, 16
      %v2339 = vrot.slane %v2337, 4
      %v2340 = vshll.u32 %v2272, 16
      %v2342 = vrot.slane %v2340, 5
      %v2343 = vor.u32 %v2339, %v2342
      %v2344 = vrot.slane %v2343, 4
      %v2346 = vshll.u32 %v2273, 16
      %v2348 = vrot.slane %v2346, 5
      %v2349 = vsel %vm839, %v2344, %v2348
      %v2351 = vshrl.u32 %v2274, 16
      %v2353 = vrot.slane %v2351, 4
      %v2354 = vshll.u32 %v2274, 16
      %v2356 = vrot.slane %v2354, 5
      %v2357 = vor.u32 %v2353, %v2356
      %v2358 = vrot.slane %v2357, 4
      %v2360 = vshll.u32 %v2275, 16
      %v2362 = vrot.slane %v2360, 5
      %v2363 = vsel %vm839, %v2358, %v2362
      %v2365 = vshrl.u32 %v2276, 16
      %v2367 = vrot.slane %v2365, 4
      %v2368 = vshll.u32 %v2276, 16
      %v2370 = vrot.slane %v2368, 5
      %v2371 = vor.u32 %v2367, %v2370
      %v2372 = vrot.slane %v2371, 4
      %v2374 = vshll.u32 %v2277, 16
      %v2376 = vrot.slane %v2374, 5
      %v2377 = vsel %vm839, %v2372, %v2376
      %v2379 = vshrl.u32 %v2278, 16
      %v2381 = vrot.slane %v2379, 4
      %v2382 = vshll.u32 %v2278, 16
      %v2384 = vrot.slane %v2382, 5
      %v2385 = vor.u32 %v2381, %v2384
      %v2386 = vrot.slane %v2385, 4
      %v2388 = vshll.u32 %v2279, 16
      %v2390 = vrot.slane %v2388, 5
      %v2391 = vsel %vm839, %v2386, %v2390
      %v2392 = vld [vmem:[#allocation3] sm:$0xff]
      %v2393 = vld [vmem:[#allocation3 + $0x8] sm:$0xff]
      %v2394 = vld [vmem:[#allocation3 + $0x10] sm:$0xff]
      %v2395 = vld [vmem:[#allocation3 + $0x18] sm:$0xff]
      %v2396 = vld [vmem:[#allocation3 + $0x20] sm:$0xff]
      %v2397 = vld [vmem:[#allocation3 + $0x28] sm:$0xff]
      %v2398 = vld [vmem:[#allocation3 + $0x30] sm:$0xff]
      %v2399 = vld [vmem:[#allocation3 + $0x38] sm:$0xff]
      %s2400 = scalar_lea.vmem %s3, 448
      %v2401 = vld [vmem:[%s2400] sm:$0xf]
      %v2402 = vld [vmem:[%s2400 + $0x4] sm:$0xf]
      %v2403 = vld [vmem:[%s2400 + $0x8] sm:$0xf]
      %v2404 = vld [vmem:[%s2400 + $0xc] sm:$0xf]
      %v2405 = vld [vmem:[%s2400 + $0x10] sm:$0xf]
      %v2406 = vld [vmem:[%s2400 + $0x14] sm:$0xf]
      %v2407 = vld [vmem:[%s2400 + $0x18] sm:$0xf]
      %v2408 = vld [vmem:[%s2400 + $0x1c] sm:$0xf]
      %v2409 = vld [vmem:[%s2400 + $0x20] sm:$0xf]
      %v2410 = vld [vmem:[%s2400 + $0x24] sm:$0xf]
      %v2411 = vld [vmem:[%s2400 + $0x28] sm:$0xf]
      %v2412 = vld [vmem:[%s2400 + $0x2c] sm:$0xf]
      %v2413 = vld [vmem:[%s2400 + $0x30] sm:$0xf]
      %v2414 = vld [vmem:[%s2400 + $0x34] sm:$0xf]
      %v2415 = vld [vmem:[%s2400 + $0x38] sm:$0xf]
      %v2416 = vld [vmem:[%s2400 + $0x3c] sm:$0xf]
      %v2417 = vunpack.c.l.b16 %v2293
      %v2418 = vunpack.c.l.b16 %v2307
      %v2419 = vunpack.c.l.b16 %v2321
      %v2420 = vunpack.c.l.b16 %v2335
      %v2421 = vunpack.c.l.b16 %v2349
      %v2422 = vunpack.c.l.b16 %v2363
      %v2423 = vunpack.c.l.b16 %v2377
      %v2424 = vunpack.c.l.b16 %v2391
      %v2425 = vpack.c.b16 %v2418, %v2417
      %v2426 = vpack.c.b16 %v2420, %v2419
      %v2427 = vpack.c.b16 %v2422, %v2421
      %v2428 = vpack.c.b16 %v2424, %v2423
      %v2449 = vunpack.c.l.b16 %v2401
      %v2450 = vunpack.c.l.b16 %v2402
      %v2451 = vunpack.c.l.b16 %v2403
      %v2452 = vunpack.c.l.b16 %v2404
      %v2453 = vunpack.c.l.b16 %v2405
      %v2454 = vunpack.c.l.b16 %v2406
      %v2455 = vunpack.c.l.b16 %v2407
      %v2456 = vunpack.c.l.b16 %v2408
      %v2457 = vunpack.c.l.b16 %v2409
      %v2458 = vunpack.c.l.b16 %v2410
      %v2459 = vunpack.c.l.b16 %v2411
      %v2460 = vunpack.c.l.b16 %v2412
      %v2461 = vunpack.c.l.b16 %v2413
      %v2462 = vunpack.c.l.b16 %v2414
      %v2463 = vunpack.c.l.b16 %v2415
      %v2464 = vunpack.c.l.b16 %v2416
      %v2465 = vpack.c.b16 %v2450, %v2449
      %v2466 = vpack.c.b16 %v2452, %v2451
      %v2467 = vpack.c.b16 %v2454, %v2453
      %v2468 = vpack.c.b16 %v2456, %v2455
      %v2469 = vpack.c.b16 %v2458, %v2457
      %v2470 = vpack.c.b16 %v2460, %v2459
      %v2471 = vpack.c.b16 %v2462, %v2461
      %v2472 = vpack.c.b16 %v2464, %v2463
      %2481 = vmatprep.subr.bf16.mxu0 0
      %2482 = vmatpush1.bf16.msra.mxu0 %v2465
      %2483 = vmatprep.subr.bf16.mxu0 0
      %2484 = vmatpush1.bf16.msra.mxu0 %v2466
      %2485 = vmatprep.subr.bf16.mxu0 0
      %2486 = vmatpush1.bf16.msra.mxu0 %v2467
      %2487 = vmatprep.subr.bf16.mxu0 0
      %2488 = vmatpush1.bf16.msra.mxu0 %v2468
      %2489 = vmatprep.subr.bf16.mxu0 0
      %2490 = vmatpush1.bf16.msra.mxu0 %v2469
      %2491 = vmatprep.subr.bf16.mxu0 0
      %2492 = vmatpush1.bf16.msra.mxu0 %v2470
      %2493 = vmatprep.subr.bf16.mxu0 0
      %2494 = vmatpush1.bf16.msra.mxu0 %v2471
      %2495 = vmatprep.subr.bf16.mxu0 0
      %2496 = vmatpush1.bf16.msra.mxu0 %v2472
      %2497 = vmatprep.subr.bf16.mxu0 0
      %2498 = vmatpush1.bf16.msra.mxu0 0
      %2499 = vmatprep.subr.bf16.mxu0 0
      %2500 = vmatpush1.bf16.msra.mxu0 0
      %2501 = vmatprep.subr.bf16.mxu0 0
      %2502 = vmatpush1.bf16.msra.mxu0 0
      %2503 = vmatprep.subr.bf16.mxu0 0
      %2504 = vmatpush1.bf16.msra.mxu0 0
      %2505 = vmatprep.subr.bf16.mxu0 0
      %2506 = vmatpush1.bf16.msra.mxu0 0
      %2507 = vmatprep.subr.bf16.mxu0 0
      %2508 = vmatpush1.bf16.msra.mxu0 0
      %2509 = vmatprep.subr.bf16.mxu0 0
      %2510 = vmatpush1.bf16.msra.mxu0 0
      %2511 = vmatprep.subr.bf16.mxu0 0
      %2512 = vmatpush1.bf16.msra.mxu0 0
      %2513 = vmatprep.mubr.bf16.mxu0 0
      %2514 = vmatmul.mubr.bf16.gmra.mrb[0].mxu0 %v2425
      %v2515 = vpop.f32.mrb[0].mxu0
      %v2516 = vadd.f32 0.0, %v2515
      %v2517 = vpop.f32.mrb[0].mxu0
      %v2518 = vpop.f32.mrb[0].mxu0
      %v2519 = vadd.f32 0.0, %v2518
      %v2520 = vpop.f32.mrb[0].mxu0
      %2521 = vmatprep.mubr.bf16.mxu0 0
      %2522 = vmatmul.mubr.bf16.gmra.mrb[0].mxu0 %v2426
      %v2523 = vpop.f32.mrb[0].mxu0
      %v2524 = vadd.f32 0.0, %v2523
      %v2525 = vpop.f32.mrb[0].mxu0
      %v2526 = vpop.f32.mrb[0].mxu0
      %v2527 = vadd.f32 0.0, %v2526
      %v2528 = vpop.f32.mrb[0].mxu0
      %2529 = vmatprep.mubr.bf16.mxu0 0
      %2530 = vmatmul.mubr.bf16.gmra.mrb[0].mxu0 %v2427
      %v2531 = vpop.f32.mrb[0].mxu0
      %v2532 = vadd.f32 0.0, %v2531
      %v2533 = vpop.f32.mrb[0].mxu0
      %v2534 = vpop.f32.mrb[0].mxu0
      %v2535 = vadd.f32 0.0, %v2534
      %v2536 = vpop.f32.mrb[0].mxu0
      %2537 = vmatprep.mubr.bf16.mxu0 0
      %2538 = vmatmul.mubr.bf16.gmra.mrb[0].mxu0 %v2428
      %v2539 = vpop.f32.mrb[0].mxu0
      %v2540 = vadd.f32 0.0, %v2539
      %v2541 = vpop.f32.mrb[0].mxu0
      %v2542 = vpop.f32.mrb[0].mxu0
      %v2543 = vadd.f32 0.0, %v2542
      %v2544 = vpop.f32.mrb[0].mxu0
      %2545 = vdwg.mxu0
      %v2546 = vadd.f32 %v2392, %v2516
      %v2547 = vadd.f32 %v2393, %v2519
      %v2548 = vadd.f32 %v2394, %v2524
      %v2549 = vadd.f32 %v2395, %v2527
      %v2550 = vadd.f32 %v2396, %v2532
      %v2551 = vadd.f32 %v2397, %v2535
      %v2552 = vadd.f32 %v2398, %v2540
      %v2553 = vadd.f32 %v2399, %v2543
      %2554 = vst [vmem:[#allocation3] sm:$0xff] %v2546
      %2555 = vst [vmem:[#allocation3 + $0x8] sm:$0xff] %v2547
      %2556 = vst [vmem:[#allocation3 + $0x10] sm:$0xff] %v2548
      %2557 = vst [vmem:[#allocation3 + $0x18] sm:$0xff] %v2549
      %2558 = vst [vmem:[#allocation3 + $0x20] sm:$0xff] %v2550
      %2559 = vst [vmem:[#allocation3 + $0x28] sm:$0xff] %v2551
      %2560 = vst [vmem:[#allocation3 + $0x30] sm:$0xff] %v2552
      %2561 = vst [vmem:[#allocation3 + $0x38] sm:$0xff] %v2553
      %v2562 = vld [vmem:[%s2077] sm:$0xe]
      %v2563 = vld [vmem:[%s2077 + $0x4] sm:$0x1]
      %v2564 = vld [vmem:[%s2077 + $0x8] sm:$0xe]
      %v2565 = vld [vmem:[%s2077 + $0xc] sm:$0x1]
      %v2566 = vld [vmem:[%s2077 + $0x10] sm:$0xe]
      %v2567 = vld [vmem:[%s2077 + $0x14] sm:$0x1]
      %v2568 = vld [vmem:[%s2077 + $0x18] sm:$0xe]
      %v2569 = vld [vmem:[%s2077 + $0x1c] sm:$0x1]
      %v2570 = vld [vmem:[%s2077 + $0x20] sm:$0xe]
      %v2571 = vld [vmem:[%s2077 + $0x24] sm:$0x1]
      %v2572 = vld [vmem:[%s2077 + $0x28] sm:$0xe]
      %v2573 = vld [vmem:[%s2077 + $0x2c] sm:$0x1]
      %v2574 = vld [vmem:[%s2077 + $0x30] sm:$0xe]
      %v2575 = vld [vmem:[%s2077 + $0x34] sm:$0x1]
      %v2576 = vld [vmem:[%s2077 + $0x38] sm:$0xe]
      %v2577 = vld [vmem:[%s2077 + $0x3c] sm:$0x1]
      %v2594 = vrot.slane %v2562, 5
      %v2595 = vrot.slane %v2594, 4
      %v2596 = vrot.slane %v2563, 5
      %v2597 = vsel %vm1156, %v2595, %v2596
      %v2598 = vrot.slane %v2564, 5
      %v2599 = vrot.slane %v2598, 4
      %v2600 = vrot.slane %v2565, 5
      %v2601 = vsel %vm1156, %v2599, %v2600
      %v2602 = vrot.slane %v2566, 5
      %v2603 = vrot.slane %v2602, 4
      %v2604 = vrot.slane %v2567, 5
      %v2605 = vsel %vm1156, %v2603, %v2604
      %v2606 = vrot.slane %v2568, 5
      %v2607 = vrot.slane %v2606, 4
      %v2608 = vrot.slane %v2569, 5
      %v2609 = vsel %vm1156, %v2607, %v2608
      %v2610 = vrot.slane %v2570, 5
      %v2611 = vrot.slane %v2610, 4
      %v2612 = vrot.slane %v2571, 5
      %v2613 = vsel %vm1156, %v2611, %v2612
      %v2614 = vrot.slane %v2572, 5
      %v2615 = vrot.slane %v2614, 4
      %v2616 = vrot.slane %v2573, 5
      %v2617 = vsel %vm1156, %v2615, %v2616
      %v2618 = vrot.slane %v2574, 5
      %v2619 = vrot.slane %v2618, 4
      %v2620 = vrot.slane %v2575, 5
      %v2621 = vsel %vm1156, %v2619, %v2620
      %v2622 = vrot.slane %v2576, 5
      %v2623 = vrot.slane %v2622, 4
      %v2624 = vrot.slane %v2577, 5
      %v2625 = vsel %vm1156, %v2623, %v2624
      %v2626 = vld [vmem:[#allocation3] sm:$0xff]
      %v2627 = vld [vmem:[#allocation3 + $0x8] sm:$0xff]
      %v2628 = vld [vmem:[#allocation3 + $0x10] sm:$0xff]
      %v2629 = vld [vmem:[#allocation3 + $0x18] sm:$0xff]
      %v2630 = vld [vmem:[#allocation3 + $0x20] sm:$0xff]
      %v2631 = vld [vmem:[#allocation3 + $0x28] sm:$0xff]
      %v2632 = vld [vmem:[#allocation3 + $0x30] sm:$0xff]
      %v2633 = vld [vmem:[#allocation3 + $0x38] sm:$0xff]
      %s2634 = scalar_lea.vmem %s3, 512
      %v2635 = vld [vmem:[%s2634] sm:$0xf]
      %v2636 = vld [vmem:[%s2634 + $0x4] sm:$0xf]
      %v2637 = vld [vmem:[%s2634 + $0x8] sm:$0xf]
      %v2638 = vld [vmem:[%s2634 + $0xc] sm:$0xf]
      %v2639 = vld [vmem:[%s2634 + $0x10] sm:$0xf]
      %v2640 = vld [vmem:[%s2634 + $0x14] sm:$0xf]
      %v2641 = vld [vmem:[%s2634 + $0x18] sm:$0xf]
      %v2642 = vld [vmem:[%s2634 + $0x1c] sm:$0xf]
      %v2643 = vld [vmem:[%s2634 + $0x20] sm:$0xf]
      %v2644 = vld [vmem:[%s2634 + $0x24] sm:$0xf]
      %v2645 = vld [vmem:[%s2634 + $0x28] sm:$0xf]
      %v2646 = vld [vmem:[%s2634 + $0x2c] sm:$0xf]
      %v2647 = vld [vmem:[%s2634 + $0x30] sm:$0xf]
      %v2648 = vld [vmem:[%s2634 + $0x34] sm:$0xf]
      %v2649 = vld [vmem:[%s2634 + $0x38] sm:$0xf]
      %v2650 = vld [vmem:[%s2634 + $0x3c] sm:$0xf]
      %v2651 = vunpack.c.l.b16 %v2597
      %v2652 = vunpack.c.l.b16 %v2601
      %v2653 = vunpack.c.l.b16 %v2605
      %v2654 = vunpack.c.l.b16 %v2609
      %v2655 = vunpack.c.l.b16 %v2613
      %v2656 = vunpack.c.l.b16 %v2617
      %v2657 = vunpack.c.l.b16 %v2621
      %v2658 = vunpack.c.l.b16 %v2625
      %v2659 = vpack.c.b16 %v2652, %v2651
      %v2660 = vpack.c.b16 %v2654, %v2653
      %v2661 = vpack.c.b16 %v2656, %v2655
      %v2662 = vpack.c.b16 %v2658, %v2657
      %v2683 = vunpack.c.l.b16 %v2635
      %v2684 = vunpack.c.l.b16 %v2636
      %v2685 = vunpack.c.l.b16 %v2637
      %v2686 = vunpack.c.l.b16 %v2638
      %v2687 = vunpack.c.l.b16 %v2639
      %v2688 = vunpack.c.l.b16 %v2640
      %v2689 = vunpack.c.l.b16 %v2641
      %v2690 = vunpack.c.l.b16 %v2642
      %v2691 = vunpack.c.l.b16 %v2643
      %v2692 = vunpack.c.l.b16 %v2644
      %v2693 = vunpack.c.l.b16 %v2645
      %v2694 = vunpack.c.l.b16 %v2646
      %v2695 = vunpack.c.l.b16 %v2647
      %v2696 = vunpack.c.l.b16 %v2648
      %v2697 = vunpack.c.l.b16 %v2649
      %v2698 = vunpack.c.l.b16 %v2650
      %v2699 = vpack.c.b16 %v2684, %v2683
      %v2700 = vpack.c.b16 %v2686, %v2685
      %v2701 = vpack.c.b16 %v2688, %v2687
      %v2702 = vpack.c.b16 %v2690, %v2689
      %v2703 = vpack.c.b16 %v2692, %v2691
      %v2704 = vpack.c.b16 %v2694, %v2693
      %v2705 = vpack.c.b16 %v2696, %v2695
      %v2706 = vpack.c.b16 %v2698, %v2697
      %2715 = vmatprep.subr.bf16.mxu0 0
      %2716 = vmatpush1.bf16.msra.mxu0 %v2699
      %2717 = vmatprep.subr.bf16.mxu0 0
      %2718 = vmatpush1.bf16.msra.mxu0 %v2700
      %2719 = vmatprep.subr.bf16.mxu0 0
      %2720 = vmatpush1.bf16.msra.mxu0 %v2701
      %2721 = vmatprep.subr.bf16.mxu0 0
      %2722 = vmatpush1.bf16.msra.mxu0 %v2702
      %2723 = vmatprep.subr.bf16.mxu0 0
      %2724 = vmatpush1.bf16.msra.mxu0 %v2703
      %2725 = vmatprep.subr.bf16.mxu0 0
      %2726 = vmatpush1.bf16.msra.mxu0 %v2704
      %2727 = vmatprep.subr.bf16.mxu0 0
      %2728 = vmatpush1.bf16.msra.mxu0 %v2705
      %2729 = vmatprep.subr.bf16.mxu0 0
      %2730 = vmatpush1.bf16.msra.mxu0 %v2706
      %2731 = vmatprep.subr.bf16.mxu0 0
      %2732 = vmatpush1.bf16.msra.mxu0 0
      %2733 = vmatprep.subr.bf16.mxu0 0
      %2734 = vmatpush1.bf16.msra.mxu0 0
      %2735 = vmatprep.subr.bf16.mxu0 0
      %2736 = vmatpush1.bf16.msra.mxu0 0
      %2737 = vmatprep.subr.bf16.mxu0 0
      %2738 = vmatpush1.bf16.msra.mxu0 0
      %2739 = vmatprep.subr.bf16.mxu0 0
      %2740 = vmatpush1.bf16.msra.mxu0 0
      %2741 = vmatprep.subr.bf16.mxu0 0
      %2742 = vmatpush1.bf16.msra.mxu0 0
      %2743 = vmatprep.subr.bf16.mxu0 0
      %2744 = vmatpush1.bf16.msra.mxu0 0
      %2745 = vmatprep.subr.bf16.mxu0 0
      %2746 = vmatpush1.bf16.msra.mxu0 0
      %2747 = vmatprep.mubr.bf16.mxu0 0
      %2748 = vmatmul.mubr.bf16.gmra.mrb[0].mxu0 %v2659
      %v2749 = vpop.f32.mrb[0].mxu0
      %v2750 = vadd.f32 0.0, %v2749
      %v2751 = vpop.f32.mrb[0].mxu0
      %v2752 = vpop.f32.mrb[0].mxu0
      %v2753 = vadd.f32 0.0, %v2752
      %v2754 = vpop.f32.mrb[0].mxu0
      %2755 = vmatprep.mubr.bf16.mxu0 0
      %2756 = vmatmul.mubr.bf16.gmra.mrb[0].mxu0 %v2660
      %v2757 = vpop.f32.mrb[0].mxu0
      %v2758 = vadd.f32 0.0, %v2757
      %v2759 = vpop.f32.mrb[0].mxu0
      %v2760 = vpop.f32.mrb[0].mxu0
      %v2761 = vadd.f32 0.0, %v2760
      %v2762 = vpop.f32.mrb[0].mxu0
      %2763 = vmatprep.mubr.bf16.mxu0 0
      %2764 = vmatmul.mubr.bf16.gmra.mrb[0].mxu0 %v2661
      %v2765 = vpop.f32.mrb[0].mxu0
      %v2766 = vadd.f32 0.0, %v2765
      %v2767 = vpop.f32.mrb[0].mxu0
      %v2768 = vpop.f32.mrb[0].mxu0
      %v2769 = vadd.f32 0.0, %v2768
      %v2770 = vpop.f32.mrb[0].mxu0
      %2771 = vmatprep.mubr.bf16.mxu0 0
      %2772 = vmatmul.mubr.bf16.gmra.mrb[0].mxu0 %v2662
      %v2773 = vpop.f32.mrb[0].mxu0
      %v2774 = vadd.f32 0.0, %v2773
      %v2775 = vpop.f32.mrb[0].mxu0
      %v2776 = vpop.f32.mrb[0].mxu0
      %v2777 = vadd.f32 0.0, %v2776
      %v2778 = vpop.f32.mrb[0].mxu0
      %2779 = vdwg.mxu0
      %v2780 = vadd.f32 %v2626, %v2750
      %v2781 = vadd.f32 %v2627, %v2753
      %v2782 = vadd.f32 %v2628, %v2758
      %v2783 = vadd.f32 %v2629, %v2761
      %v2784 = vadd.f32 %v2630, %v2766
      %v2785 = vadd.f32 %v2631, %v2769
      %v2786 = vadd.f32 %v2632, %v2774
      %v2787 = vadd.f32 %v2633, %v2777
      %2788 = vst [vmem:[#allocation3] sm:$0xff] %v2780
      %2789 = vst [vmem:[#allocation3 + $0x8] sm:$0xff] %v2781
      %2790 = vst [vmem:[#allocation3 + $0x10] sm:$0xff] %v2782
      %2791 = vst [vmem:[#allocation3 + $0x18] sm:$0xff] %v2783
      %2792 = vst [vmem:[#allocation3 + $0x20] sm:$0xff] %v2784
      %2793 = vst [vmem:[#allocation3 + $0x28] sm:$0xff] %v2785
      %2794 = vst [vmem:[#allocation3 + $0x30] sm:$0xff] %v2786
      %2795 = vst [vmem:[#allocation3 + $0x38] sm:$0xff] %v2787
      %v2796 = vld [vmem:[#allocation3] sm:$0xff]
      %v2797 = vld [vmem:[#allocation3 + $0x8] sm:$0xff]
      %v2798 = vld [vmem:[#allocation3 + $0x10] sm:$0xff]
      %v2799 = vld [vmem:[#allocation3 + $0x18] sm:$0xff]
      %v2800 = vld [vmem:[#allocation3 + $0x20] sm:$0xff]
      %v2801 = vld [vmem:[#allocation3 + $0x28] sm:$0xff]
      %v2802 = vld [vmem:[#allocation3 + $0x30] sm:$0xff]
      %v2803 = vld [vmem:[#allocation3 + $0x38] sm:$0xff]
      %v2804 = vld [vmem:[%s367] sm:$0xf]
      %v2805 = vld [vmem:[%s367 + $0x4] sm:$0xf]
      %v2806 = vld [vmem:[%s367 + $0x8] sm:$0xf]
      %v2807 = vld [vmem:[%s367 + $0xc] sm:$0xf]
      %v2808 = vld [vmem:[%s367 + $0x10] sm:$0xf]
      %v2809 = vld [vmem:[%s367 + $0x14] sm:$0xf]
      %v2810 = vld [vmem:[%s367 + $0x18] sm:$0xf]
      %v2811 = vld [vmem:[%s367 + $0x1c] sm:$0xf]
      %v2812 = vld [vmem:[%s5] sm:$0xf]
      %v2813 = vld [vmem:[%s5 + $0x4] sm:$0xf]
      %v2814 = vld [vmem:[%s5 + $0x8] sm:$0xf]
      %v2815 = vld [vmem:[%s5 + $0xc] sm:$0xf]
      %v2816 = vld [vmem:[%s5 + $0x10] sm:$0xf]
      %v2817 = vld [vmem:[%s5 + $0x14] sm:$0xf]
      %v2818 = vld [vmem:[%s5 + $0x18] sm:$0xf]
      %v2819 = vld [vmem:[%s5 + $0x1c] sm:$0xf]
      %v2820 = vld [vmem:[%s5 + $0x20] sm:$0xf]
      %v2821 = vld [vmem:[%s5 + $0x24] sm:$0xf]
      %v2822 = vld [vmem:[%s5 + $0x28] sm:$0xf]
      %v2823 = vld [vmem:[%s5 + $0x2c] sm:$0xf]
      %v2824 = vld [vmem:[%s5 + $0x30] sm:$0xf]
      %v2825 = vld [vmem:[%s5 + $0x34] sm:$0xf]
      %v2826 = vld [vmem:[%s5 + $0x38] sm:$0xf]
      %v2827 = vld [vmem:[%s5 + $0x3c] sm:$0xf]
      %v2836 = vunpack.c.l.b16 %v2804
      %v2837 = vunpack.c.l.b16 %v2805
      %v2838 = vunpack.c.l.b16 %v2806
      %v2839 = vunpack.c.l.b16 %v2807
      %v2840 = vunpack.c.l.b16 %v2808
      %v2841 = vunpack.c.l.b16 %v2809
      %v2842 = vunpack.c.l.b16 %v2810
      %v2843 = vunpack.c.l.b16 %v2811
      %v2844 = vpack.c.b16 %v2837, %v2836
      %v2845 = vpack.c.b16 %v2839, %v2838
      %v2846 = vpack.c.b16 %v2841, %v2840
      %v2847 = vpack.c.b16 %v2843, %v2842
      %v2868 = vunpack.c.l.b16 %v2812
      %v2869 = vunpack.c.l.b16 %v2813
      %v2870 = vunpack.c.l.b16 %v2814
      %v2871 = vunpack.c.l.b16 %v2815
      %v2872 = vunpack.c.l.b16 %v2816
      %v2873 = vunpack.c.l.b16 %v2817
      %v2874 = vunpack.c.l.b16 %v2818
      %v2875 = vunpack.c.l.b16 %v2819
      %v2876 = vunpack.c.l.b16 %v2820
      %v2877 = vunpack.c.l.b16 %v2821
      %v2878 = vunpack.c.l.b16 %v2822
      %v2879 = vunpack.c.l.b16 %v2823
      %v2880 = vunpack.c.l.b16 %v2824
      %v2881 = vunpack.c.l.b16 %v2825
      %v2882 = vunpack.c.l.b16 %v2826
      %v2883 = vunpack.c.l.b16 %v2827
      %v2884 = vpack.c.b16 %v2869, %v2868
      %v2885 = vpack.c.b16 %v2871, %v2870
      %v2886 = vpack.c.b16 %v2873, %v2872
      %v2887 = vpack.c.b16 %v2875, %v2874
      %v2888 = vpack.c.b16 %v2877, %v2876
      %v2889 = vpack.c.b16 %v2879, %v2878
      %v2890 = vpack.c.b16 %v2881, %v2880
      %v2891 = vpack.c.b16 %v2883, %v2882
      %2900 = vmatprep.subr.bf16.mxu0 0
      %2901 = vmatpush1.bf16.msra.mxu0 %v2884
      %2902 = vmatprep.subr.bf16.mxu0 0
      %2903 = vmatpush1.bf16.msra.mxu0 %v2885
      %2904 = vmatprep.subr.bf16.mxu0 0
      %2905 = vmatpush1.bf16.msra.mxu0 %v2886
      %2906 = vmatprep.subr.bf16.mxu0 0
      %2907 = vmatpush1.bf16.msra.mxu0 %v2887
      %2908 = vmatprep.subr.bf16.mxu0 0
      %2909 = vmatpush1.bf16.msra.mxu0 %v2888
      %2910 = vmatprep.subr.bf16.mxu0 0
      %2911 = vmatpush1.bf16.msra.mxu0 %v2889
      %2912 = vmatprep.subr.bf16.mxu0 0
      %2913 = vmatpush1.bf16.msra.mxu0 %v2890
      %2914 = vmatprep.subr.bf16.mxu0 0
      %2915 = vmatpush1.bf16.msra.mxu0 %v2891
      %2916 = vmatprep.subr.bf16.mxu0 0
      %2917 = vmatpush1.bf16.msra.mxu0 0
      %2918 = vmatprep.subr.bf16.mxu0 0
      %2919 = vmatpush1.bf16.msra.mxu0 0
      %2920 = vmatprep.subr.bf16.mxu0 0
      %2921 = vmatpush1.bf16.msra.mxu0 0
      %2922 = vmatprep.subr.bf16.mxu0 0
      %2923 = vmatpush1.bf16.msra.mxu0 0
      %2924 = vmatprep.subr.bf16.mxu0 0
      %2925 = vmatpush1.bf16.msra.mxu0 0
      %2926 = vmatprep.subr.bf16.mxu0 0
      %2927 = vmatpush1.bf16.msra.mxu0 0
      %2928 = vmatprep.subr.bf16.mxu0 0
      %2929 = vmatpush1.bf16.msra.mxu0 0
      %2930 = vmatprep.subr.bf16.mxu0 0
      %2931 = vmatpush1.bf16.msra.mxu0 0
      %2932 = vmatprep.mubr.bf16.mxu0 0
      %2933 = vmatmul.mubr.bf16.gmra.mrb[0].mxu0 %v2844
      %v2934 = vpop.f32.mrb[0].mxu0
      %v2935 = vadd.f32 0.0, %v2934
      %v2936 = vpop.f32.mrb[0].mxu0
      %v2937 = vpop.f32.mrb[0].mxu0
      %v2938 = vadd.f32 0.0, %v2937
      %v2939 = vpop.f32.mrb[0].mxu0
      %2940 = vmatprep.mubr.bf16.mxu0 0
      %2941 = vmatmul.mubr.bf16.gmra.mrb[0].mxu0 %v2845
      %v2942 = vpop.f32.mrb[0].mxu0
      %v2943 = vadd.f32 0.0, %v2942
      %v2944 = vpop.f32.mrb[0].mxu0
      %v2945 = vpop.f32.mrb[0].mxu0
      %v2946 = vadd.f32 0.0, %v2945
      %v2947 = vpop.f32.mrb[0].mxu0
      %2948 = vmatprep.mubr.bf16.mxu0 0
      %2949 = vmatmul.mubr.bf16.gmra.mrb[0].mxu0 %v2846
      %v2950 = vpop.f32.mrb[0].mxu0
      %v2951 = vadd.f32 0.0, %v2950
      %v2952 = vpop.f32.mrb[0].mxu0
      %v2953 = vpop.f32.mrb[0].mxu0
      %v2954 = vadd.f32 0.0, %v2953
      %v2955 = vpop.f32.mrb[0].mxu0
      %2956 = vmatprep.mubr.bf16.mxu0 0
      %2957 = vmatmul.mubr.bf16.gmra.mrb[0].mxu0 %v2847
      %v2958 = vpop.f32.mrb[0].mxu0
      %v2959 = vadd.f32 0.0, %v2958
      %v2960 = vpop.f32.mrb[0].mxu0
      %v2961 = vpop.f32.mrb[0].mxu0
      %v2962 = vadd.f32 0.0, %v2961
      %v2963 = vpop.f32.mrb[0].mxu0
      %2964 = vdwg.mxu0
      %v2965 = vadd.f32 %v2796, %v2797
      %v2966 = vadd.f32 %v2965, %v2798
      %v2967 = vadd.f32 %v2966, %v2799
      %v2968 = vadd.f32 %v2967, %v2800
      %v2969 = vadd.f32 %v2968, %v2801
      %v2970 = vadd.f32 %v2969, %v2802
      %v2971 = vadd.f32 %v2970, %v2803
      %v2972 = vrot.slane %v2971, 4
      %v2973 = vadd.f32 %v2971, %v2972
      %v2974 = vrot.slane %v2973, 2
      %v2975 = vadd.f32 %v2973, %v2974
      %v2976 = vrot.slane %v2975, 1
      %v2977 = vadd.f32 %v2975, %v2976
      %v2978 = vmul.f32 %v2796, %v2796
      %v2979 = vmul.f32 %v2797, %v2797
      %v2980 = vmul.f32 %v2798, %v2798
      %v2981 = vmul.f32 %v2799, %v2799
      %v2982 = vmul.f32 %v2800, %v2800
      %v2983 = vmul.f32 %v2801, %v2801
      %v2984 = vmul.f32 %v2802, %v2802
      %v2985 = vmul.f32 %v2803, %v2803
      %v2986 = vadd.f32 %v2978, %v2979
      %v2987 = vadd.f32 %v2986, %v2980
      %v2988 = vadd.f32 %v2987, %v2981
      %v2989 = vadd.f32 %v2988, %v2982
      %v2990 = vadd.f32 %v2989, %v2983
      %v2991 = vadd.f32 %v2990, %v2984
      %v2992 = vadd.f32 %v2991, %v2985
      %v2993 = vrot.slane %v2992, 4
      %v2994 = vadd.f32 %v2992, %v2993
      %v2995 = vrot.slane %v2994, 2
      %v2996 = vadd.f32 %v2994, %v2995
      %v2997 = vrot.slane %v2996, 1
      %v2998 = vadd.f32 %v2996, %v2997
      %vm2999 = vcmask 1040384
      %v3000 = vsel %vm2999, %v2977, %v2998
      %vm3001 = vcmask 1041408
      %v3002 = vsel %vm3001, %v3000, 0.0
      %3003 = vst [vmem:[%s381] sm:$0xff] %v3002
      %v3004 = vadd.f32 %v2935, %v2938
      %v3005 = vadd.f32 %v3004, %v2943
      %v3006 = vadd.f32 %v3005, %v2946
      %v3007 = vadd.f32 %v3006, %v2951
      %v3008 = vadd.f32 %v3007, %v2954
      %v3009 = vadd.f32 %v3008, %v2959
      %v3010 = vadd.f32 %v3009, %v2962
      %v3011 = vrot.slane %v3010, 4
      %v3012 = vadd.f32 %v3010, %v3011
      %v3013 = vrot.slane %v3012, 2
      %v3014 = vadd.f32 %v3012, %v3013
      %v3015 = vrot.slane %v3014, 1
      %v3016 = vadd.f32 %v3014, %v3015
      %v3017 = vmul.f32 %v2935, %v2935
      %v3018 = vmul.f32 %v2938, %v2938
      %v3019 = vmul.f32 %v2943, %v2943
      %v3020 = vmul.f32 %v2946, %v2946
      %v3021 = vmul.f32 %v2951, %v2951
      %v3022 = vmul.f32 %v2954, %v2954
      %v3023 = vmul.f32 %v2959, %v2959
      %v3024 = vmul.f32 %v2962, %v2962
      %v3025 = vadd.f32 %v3017, %v3018
      %v3026 = vadd.f32 %v3025, %v3019
      %v3027 = vadd.f32 %v3026, %v3020
      %v3028 = vadd.f32 %v3027, %v3021
      %v3029 = vadd.f32 %v3028, %v3022
      %v3030 = vadd.f32 %v3029, %v3023
      %v3031 = vadd.f32 %v3030, %v3024
      %v3032 = vrot.slane %v3031, 4
      %v3033 = vadd.f32 %v3031, %v3032
      %v3034 = vrot.slane %v3033, 2
      %v3035 = vadd.f32 %v3033, %v3034
      %v3036 = vrot.slane %v3035, 1
      %v3037 = vadd.f32 %v3035, %v3036
      %v3038 = vsel %vm2999, %v3016, %v3037
      %v3039 = vsel %vm3001, %v3038, 0.0
      %3040 = vst [vmem:[%s385] sm:$0xff] %v3039
      %v3041 = vpack.c.bf16 %v2796, %v2796
      %v3042 = vpack.c.bf16 %v2797, %v2797
      %v3043 = vpack.c.bf16 %v2798, %v2798
      %v3044 = vpack.c.bf16 %v2799, %v2799
      %v3045 = vpack.c.bf16 %v2800, %v2800
      %v3046 = vpack.c.bf16 %v2801, %v2801
      %v3047 = vpack.c.bf16 %v2802, %v2802
      %v3048 = vpack.c.bf16 %v2803, %v2803
      %3049 = vst [vmem:[%s372] sm:$0xf] %v3041
      %3050 = vst [vmem:[%s372 + $0x4] sm:$0xf] %v3042
      %3051 = vst [vmem:[%s372 + $0x8] sm:$0xf] %v3043
      %3052 = vst [vmem:[%s372 + $0xc] sm:$0xf] %v3044
      %3053 = vst [vmem:[%s372 + $0x10] sm:$0xf] %v3045
      %3054 = vst [vmem:[%s372 + $0x14] sm:$0xf] %v3046
      %3055 = vst [vmem:[%s372 + $0x18] sm:$0xf] %v3047
      %3056 = vst [vmem:[%s372 + $0x1c] sm:$0xf] %v3048
      %v3057 = vpack.c.bf16 %v2935, %v2935
      %v3058 = vpack.c.bf16 %v2938, %v2938
      %v3059 = vpack.c.bf16 %v2943, %v2943
      %v3060 = vpack.c.bf16 %v2946, %v2946
      %v3061 = vpack.c.bf16 %v2951, %v2951
      %v3062 = vpack.c.bf16 %v2954, %v2954
      %v3063 = vpack.c.bf16 %v2959, %v2959
      %v3064 = vpack.c.bf16 %v2962, %v2962
      %3065 = vst [vmem:[%s377] sm:$0xf] %v3057
      %3066 = vst [vmem:[%s377 + $0x4] sm:$0xf] %v3058
      %3067 = vst [vmem:[%s377 + $0x8] sm:$0xf] %v3059
      %3068 = vst [vmem:[%s377 + $0xc] sm:$0xf] %v3060
      %3069 = vst [vmem:[%s377 + $0x10] sm:$0xf] %v3061
      %3070 = vst [vmem:[%s377 + $0x14] sm:$0xf] %v3062
      %3071 = vst [vmem:[%s377 + $0x18] sm:$0xf] %v3063
      %3072 = vst [vmem:[%s377 + $0x1c] sm:$0xf] %v3064
      %p3073 = scmp.lt.s32.totalorder %s21, 1
      %s3074 = scalar_select %p3073, %s21, 1
      %s3075 = smul.addr %s3074, 8
      %s3076 = smul.addr %s3075, 4
      %s3077 = scalar_lea.vmem %s6, %s3076
      %p3078 = scmp.lt.s32.totalorder %s21, 1
      %s3079 = scalar_select %p3078, %s21, 1
      %s3080 = smul.addr %s3079, 8
      %s3081 = smul.addr %s3080, 4
      %s3082 = scalar_lea.vmem %s7, %s3081
      %p3083 = scmp.lt.s32.totalorder %s21, 1
      %s3084 = scalar_select %p3083, %s21, 1
      %s3085 = smul.addr %s3084, 8
      %s3086 = scalar_lea.vmem %s8, %s3085
      %p3087 = scmp.lt.s32.totalorder %s21, 1
      %s3088 = scalar_select %p3087, %s21, 1
      %s3089 = smul.addr %s3088, 8
      %s3090 = scalar_lea.vmem %s9, %s3089
      // Predicated region
      $region45: #{basic_block_forward.4} parent=43 // pred_check
        %p3091 = pneg %p175
      $region46: #{basic_block_forward.4} parent=43 // pred_check_branch
        %3093 = sbr.rel (%p3091) target = $region48
      $region47: #{basic_block_forward.4} parent=43 // pred_region
        _
      $region48: #{basic_block_forward.4} parent=43 // pred_fallthru
        _
      // Predicated region
      $region49: #{basic_block_forward.4} parent=43 // pred_check
        %p3094 = pneg %p201
      $region50: #{basic_block_forward.4} parent=43 // pred_check_branch
        %3096 = sbr.rel (%p3094) target = $region52
      $region51: #{basic_block_forward.4} parent=43 // pred_region
        _
      $region52: #{basic_block_forward.4} parent=43 // pred_fallthru
        _
      // Predicated region
      $region53: #{basic_block_forward.4} parent=43 // pred_check
        %p3097 = pneg %p227
      $region54: #{basic_block_forward.4} parent=43 // pred_check_branch
        %3099 = sbr.rel (%p3097) target = $region56
      $region55: #{basic_block_forward.4} parent=43 // pred_region
        _
      $region56: #{basic_block_forward.4} parent=43 // pred_fallthru
        _
      // Predicated region
      $region57: #{basic_block_forward.4} parent=43 // pred_check
        %p3100 = pneg %p253
      $region58: #{basic_block_forward.4} parent=43 // pred_check_branch
        %3102 = sbr.rel (%p3100) target = $region60
      $region59: #{basic_block_forward.4} parent=43 // pred_region
        _
      $region60: #{basic_block_forward.4} parent=43 // pred_fallthru
        _
    $region44: #{basic_block_forward.4} parent=5 // pred_fallthru
      _
    %p3103 = scmp.le.s32.totalorder 2, %s16
    // Predicated region
    $region61: #{basic_block_forward.4} parent=5 // pred_check
      %p3104 = pneg %p3103
    $region62: #{basic_block_forward.4} parent=5 // pred_check_branch
      %3106 = sbr.rel (%p3104) target = $region64
    $region63: #{basic_block_forward.4} parent=5 // pred_region
      %s3107 = ssub.s32 %s16, 2
      // Predicated region
      $region65: #{basic_block_forward.4} parent=63 // pred_check
        %p3108 = pneg %p181
      $region66: #{basic_block_forward.4} parent=63 // pred_check_branch
        %3110 = sbr.rel (%p3108) target = $region68
      $region67: #{basic_block_forward.4} parent=63 // pred_region
        %p3111 = scmp.lt.s32.totalorder %s22, 1
        %s3112 = scalar_select %p3111, %s22, 1
        %s3113 = smul.addr %s3112, 8
        %s3114 = smul.addr %s3113, 4
        %s3115 = scalar_lea.vmem %s6, %s3114
      $region68: #{basic_block_forward.4} parent=63 // pred_fallthru
        _
      // Predicated region
      $region69: #{basic_block_forward.4} parent=63 // pred_check
        %p3116 = pneg %p207
      $region70: #{basic_block_forward.4} parent=63 // pred_check_branch
        %3118 = sbr.rel (%p3116) target = $region72
      $region71: #{basic_block_forward.4} parent=63 // pred_region
        %p3119 = scmp.lt.s32.totalorder %s22, 1
        %s3120 = scalar_select %p3119, %s22, 1
        %s3121 = smul.addr %s3120, 8
        %s3122 = smul.addr %s3121, 4
        %s3123 = scalar_lea.vmem %s7, %s3122
      $region72: #{basic_block_forward.4} parent=63 // pred_fallthru
        _
      // Predicated region
      $region73: #{basic_block_forward.4} parent=63 // pred_check
        %p3124 = pneg %p233
      $region74: #{basic_block_forward.4} parent=63 // pred_check_branch
        %3126 = sbr.rel (%p3124) target = $region76
      $region75: #{basic_block_forward.4} parent=63 // pred_region
        %p3127 = scmp.lt.s32.totalorder %s22, 1
        %s3128 = scalar_select %p3127, %s22, 1
        %s3129 = smul.addr %s3128, 8
        %s3130 = scalar_lea.vmem %s8, %s3129
      $region76: #{basic_block_forward.4} parent=63 // pred_fallthru
        _
      // Predicated region
      $region77: #{basic_block_forward.4} parent=63 // pred_check
        %p3131 = pneg %p259
      $region78: #{basic_block_forward.4} parent=63 // pred_check_branch
        %3133 = sbr.rel (%p3131) target = $region80
      $region79: #{basic_block_forward.4} parent=63 // pred_region
        %p3134 = scmp.lt.s32.totalorder %s22, 1
        %s3135 = scalar_select %p3134, %s22, 1
        %s3136 = smul.addr %s3135, 8
        %s3137 = scalar_lea.vmem %s9, %s3136
      $region80: #{basic_block_forward.4} parent=63 // pred_fallthru
        _
    $region64: #{basic_block_forward.4} parent=5 // pred_fallthru
      _
  $region6: #{basic_block_forward.4} parent=0 // loop_footer
    %s20 = sadd.s32 1, %s16
  $region7: #{basic_block_forward.4} parent=0 // loop_footer_branch
    %15 = sbr.rel target = $region3
  $region8: #{basic_block_forward.4} parent=0 // loop_exit
    _

</llo_original>
